<compile_context>
chip_gen: v7x
topology: tpu7x:2x2x1
jax: 0.10.0
libtpu: 0.0.40
codegen_flags: <defaults>
</compile_context>

<pallas_src>
import math

import jax
import jax.numpy as jnp
from jax.experimental import pallas as pl
from jax.experimental.pallas import tpu as pltpu


def _double_mha_kernel(x_ref, prm_ref, seg_sum_ref, seg_exp_ref, pos_sum_ref,
                       comp_ref, align_ref):
    """One batch block (Bt elements): both attention stages fused.

    x_ref:       (Bt, T, E)  input features
    prm_ref:     (2, E)      row 0: query flattened (q[h*Hs+d] = query[d,h])
                             row 1: att tiled       (a[h*Hs+d] = att[d,0])
    seg_sum_ref: (E, H)      0/1: sum features within a head
    seg_exp_ref: (H, E)      0/1: broadcast a per-head scalar to its Hs features
    pos_sum_ref: (E, Hs)     0/1: sum over heads per in-head position
    comp_ref:    (Bt, Hs)    compressed representation
    align_ref:   (Bt, H, T)  alignment, lane-dense (T last); wrapper swaps back
    """
    Bt, T, E = x_ref.shape
    H = seg_sum_ref.shape[1]
    hi = jax.lax.Precision.HIGHEST

    x = x_ref[...].astype(jnp.float32)                 # (Bt, T, E)
    prm = prm_ref[...].astype(jnp.float32)             # (2, E)
    qf = prm[0:1, :]                                   # (1, E)
    af = prm[1:2, :]                                   # (1, E)
    seg_sum = seg_sum_ref[...]                         # (E, H)
    seg_exp = seg_exp_ref[...]                         # (H, E)
    pos_sum = pos_sum_ref[...]                         # (E, Hs)

    inv_sqrt_dk = 1.0 / math.sqrt(H)                   # torch: d_k = query.size(-1) = heads

    # --- Stage 1: utterance-level multi-head attention (batch folded into M) ---
    x2d = x.reshape(Bt * T, E)                                          # leading-dim merge: free
    scores = jnp.dot(x2d * qf, seg_sum,
                     preferred_element_type=jnp.float32, precision=hi)  # (Bt*T, H)
    scores = (scores * inv_sqrt_dk).reshape(Bt, T, H)
    m = jnp.max(scores, axis=1, keepdims=True)                          # (Bt, 1, H)
    ex = jnp.exp(scores - m)
    denom = jnp.sum(ex, axis=1, keepdims=True)                          # (Bt, 1, H)
    # exact reciprocal keeps the 1e-5 check; approx=True would use the EUP slot
    p = ex * pl.reciprocal(denom, approx=False)                         # softmax over T, (Bt, T, H)
    # Lane-dense store: T on the lane axis instead of H.
    align_ref[...] = jnp.swapaxes(p, 1, 2).astype(align_ref.dtype)      # (Bt, H, T)

    p_exp = jnp.dot(p.reshape(Bt * T, H), seg_exp,
                    preferred_element_type=jnp.float32, precision=hi).reshape(Bt, T, E)
    utt = jnp.sum(x * p_exp, axis=1)                                    # (Bt, E)

    # --- Stage 2: head-level attention (narrow, eval mode) ---
    s2 = jnp.dot(utt * af, seg_sum,
                 preferred_element_type=jnp.float32, precision=hi)      # (Bt, H)
    m2 = jnp.max(s2, axis=1, keepdims=True)
    e2 = jnp.exp(s2 - m2)
    p2 = e2 * pl.reciprocal(jnp.sum(e2, axis=1, keepdims=True), approx=False)
    p2_exp = jnp.dot(p2, seg_exp,
                     preferred_element_type=jnp.float32, precision=hi)  # (Bt, E)
    comp_ref[...] = jnp.dot(utt * p2_exp, pos_sum,
                            preferred_element_type=jnp.float32, precision=hi
                            ).astype(comp_ref.dtype)                    # (Bt, Hs)


def _pick_block_b(B, T, E, itemsize, *, target=8, max_tile_bytes=4 << 20):
    """Largest batch tile <= target that divides B, fits a small VMEM budget,
    and (for v7x megacore) keeps >= 2 grid steps whenever B >= 2."""
    bt = max(1, min(target, B))
    while bt > 1:
        fits = bt * T * E * itemsize <= max_tile_bytes
        divides = (B % bt == 0)
        two_steps = (B // bt >= 2)
        if fits and divides and two_steps:
            return bt
        bt -= 1
    return 1


def double_mha(x, query, att, *, block_b=8):
    """Pallas implementation of DoubleMHA.forward (eval mode).

    x:     (B, T, E)
    query: (Hs, H)   MultiHeadAttention.query
    att:   (Hs, 1)   HeadAttention.att
    returns (compressed (B, Hs), alignment (B, T, H))
    """
    B, T, E = x.shape
    Hs, H = query.shape
    assert E == Hs * H

    # One-time parameter re-layouts + 0/1 segment matrices (hoisted out of the
    # kernel so they are NOT rebuilt every grid step).
    q_flat = query.T.reshape(1, E)                    # q_flat[0, h*Hs + d] = query[d, h]
    a_flat = jnp.tile(att.reshape(1, Hs), (1, H))     # a_flat[0, h*Hs + d] = att[d, 0]
    params = jnp.concatenate([q_flat, a_flat], axis=0).astype(jnp.float32)       # (2, E)

    e_idx = jnp.arange(E)
    seg_sum = (e_idx[:, None] // Hs == jnp.arange(H)[None, :]).astype(jnp.float32)   # (E, H)
    seg_exp = seg_sum.T                                                              # (H, E)
    pos_sum = (e_idx[:, None] % Hs == jnp.arange(Hs)[None, :]).astype(jnp.float32)   # (E, Hs)

    Bt = _pick_block_b(B, T, E, x.dtype.itemsize, target=block_b)
    grid = (B // Bt,)

    comp, align_ht = pl.pallas_call(
        _double_mha_kernel,
        out_shape=(jax.ShapeDtypeStruct((B, Hs), x.dtype),
                   jax.ShapeDtypeStruct((B, H, T), jnp.float32)),
        grid_spec=pl.GridSpec(
            grid=grid,
            in_specs=[
                pl.BlockSpec((Bt, T, E), lambda b: (b, 0, 0)),
                pl.BlockSpec((2, E), lambda b: (0, 0)),
                pl.BlockSpec((E, H), lambda b: (0, 0)),
                pl.BlockSpec((H, E), lambda b: (0, 0)),
                pl.BlockSpec((E, Hs), lambda b: (0, 0)),
            ],
            out_specs=(
                pl.BlockSpec((Bt, Hs), lambda b: (b, 0)),
                pl.BlockSpec((Bt, H, T), lambda b: (b, 0, 0)),
            ),
        ),
        compiler_params=pltpu.CompilerParams(
            dimension_semantics=("parallel",),
            vmem_limit_bytes=32 * 1024 * 1024,   # explicit budget, safe on v5e/v6e/v7x
        ),
    )(x, params, seg_sum, seg_exp, pos_sum)

    # Kernel emits alignment lane-dense as (B, H, T); module contract is (B, T, H).
    align = jnp.swapaxes(align_ht, 1, 2)
    return comp, align


def _reference_double_mha(x, query, att):
    """Pure-JAX reference matching the PyTorch module exactly (elementwise, no MXU)."""
    B, T, E = x.shape
    Hs, H = query.shape
    key = x.reshape(B * T, H, Hs)
    value = x.reshape(B, T, H, Hs)
    # diagonal(matmul(key, query))[k, h] = sum_d key[k, h, d] * query[d, h]
    scores = jnp.sum(key * query.T[None, :, :], axis=-1) / math.sqrt(H)   # (B*T, H)
    scores = scores.reshape(B, T, H)
    p = jax.nn.softmax(scores, axis=1)                                    # softmax over T
    utt = jnp.sum(value * p[..., None], axis=1)                           # (B, H, Hs)
    s2 = jnp.sum(utt * att.reshape(-1)[None, None, :], axis=-1)           # (B, H)
    p2 = jax.nn.softmax(s2, axis=-1)
    comp = jnp.sum(utt * p2[..., None], axis=1)                           # (B, Hs)
    return comp, p


if __name__ == "__main__":
    B, T, heads, head_size = 16, 16, 8, 8
    E = heads * head_size   # encoder_size = 64

    root = jax.random.PRNGKey(0)
    kx, kq, ka = jax.random.split(root, 3)
    x = jax.random.normal(kx, (B, T, E), dtype=jnp.float32)
    # xavier-normal-like init of the two parameters
    query = jax.random.normal(kq, (head_size, heads), dtype=jnp.float32) * math.sqrt(2.0 / (head_size + heads))
    att = jax.random.normal(ka, (head_size, 1), dtype=jnp.float32) * math.sqrt(2.0 / (head_size + 1))

    comp, align = double_mha(x, query, att)
    comp = jax.block_until_ready(comp)
    align = jax.block_until_ready(align)

    comp_gold, align_gold = _reference_double_mha(x, query, att)
    assert comp.shape == (B, head_size), comp.shape
    assert align.shape == (B, T, heads), align.shape
    assert jnp.allclose(comp, comp_gold, atol=1e-5, rtol=1e-5), float(jnp.max(jnp.abs(comp - comp_gold)))
    assert jnp.allclose(align, align_gold, atol=1e-5, rtol=1e-5), float(jnp.max(jnp.abs(align - align_gold)))

    print("KERNEL_OK")
</pallas_src>

<mosaic_0001>
module attributes {stable_mosaic.version = 11 : i64} {
  func.func @_double_mha_kernel(%arg0: i32, %arg1: memref<8x16x64xf32, #tpu.memory_space<vmem>>, %arg2: memref<2x64xf32, #tpu.memory_space<vmem>>, %arg3: memref<64x8xf32, #tpu.memory_space<vmem>>, %arg4: memref<8x64xf32, #tpu.memory_space<vmem>>, %arg5: memref<64x8xf32, #tpu.memory_space<vmem>>, %arg6: memref<8x8xf32, #tpu.memory_space<vmem>>, %arg7: memref<8x8x16xf32, #tpu.memory_space<vmem>>) attributes {dimension_semantics = [#tpu.dimension_semantics<parallel>], iteration_bounds = array<i64: 2>, scalar_prefetch = 0 : i64, scratch_operands = 0 : i64, tpu.core_type = #tpu.core_type<tc>, window_params = [{transform_indices = @transform_0, window_bounds = array<i64: 8, 16, 64>}, {pipeline_mode = #tpu.pipeline_mode<synchronous>, transform_indices = @transform_1, window_bounds = array<i64: 2, 64>}, {pipeline_mode = #tpu.pipeline_mode<synchronous>, transform_indices = @transform_2, window_bounds = array<i64: 64, 8>}, {pipeline_mode = #tpu.pipeline_mode<synchronous>, transform_indices = @transform_3, window_bounds = array<i64: 8, 64>}, {pipeline_mode = #tpu.pipeline_mode<synchronous>, transform_indices = @transform_4, window_bounds = array<i64: 64, 8>}, {transform_indices = @transform_5, window_bounds = array<i64: 8, 8>}, {transform_indices = @transform_6, window_bounds = array<i64: 8, 8, 16>}]} {
    %c0 = arith.constant 0 : index
    %c0_0 = arith.constant 0 : index
    %c0_1 = arith.constant 0 : index
    %0 = vector.load %arg1[%c0, %c0_0, %c0_1] : memref<8x16x64xf32, #tpu.memory_space<vmem>>, vector<8x16x64xf32>
    %c0_2 = arith.constant 0 : index
    %c0_3 = arith.constant 0 : index
    %1 = vector.load %arg2[%c0_2, %c0_3] : memref<2x64xf32, #tpu.memory_space<vmem>>, vector<2x64xf32>
    %2 = vector.extract_strided_slice %1 {offsets = [0, 0], sizes = [1, 64], strides = [1, 1]} : vector<2x64xf32> to vector<1x64xf32>
    %3 = vector.extract_strided_slice %1 {offsets = [1, 0], sizes = [1, 64], strides = [1, 1]} : vector<2x64xf32> to vector<1x64xf32>
    %c0_4 = arith.constant 0 : index
    %c0_5 = arith.constant 0 : index
    %4 = vector.load %arg3[%c0_4, %c0_5] : memref<64x8xf32, #tpu.memory_space<vmem>>, vector<64x8xf32>
    %c0_6 = arith.constant 0 : index
    %c0_7 = arith.constant 0 : index
    %5 = vector.load %arg4[%c0_6, %c0_7] : memref<8x64xf32, #tpu.memory_space<vmem>>, vector<8x64xf32>
    %c0_8 = arith.constant 0 : index
    %c0_9 = arith.constant 0 : index
    %6 = vector.load %arg5[%c0_8, %c0_9] : memref<64x8xf32, #tpu.memory_space<vmem>>, vector<64x8xf32>
    %7 = vector.shape_cast %0 : vector<8x16x64xf32> to vector<128x64xf32>
    %8 = vector.broadcast %2 : vector<1x64xf32> to vector<128x64xf32>
    %9 = arith.mulf %7, %8 : vector<128x64xf32>
    %cst = arith.constant dense<0.000000e+00> : vector<128x8xf32>
    %10 = tpu.matmul %9, %4, %cst {dimension_numbers = #tpu.dot_dimension_numbers<[1], [0], [0], [1], [0, 0, 1, 1], [], []>, precision = #tpu.contract_precision<fp32>} : vector<128x64xf32>, vector<64x8xf32>, vector<128x8xf32> -> vector<128x8xf32>
    %cst_10 = arith.constant 0.353553385 : f32
    %11 = vector.broadcast %cst_10 : f32 to vector<128x8xf32>
    %12 = arith.mulf %10, %11 : vector<128x8xf32>
    %13 = vector.shape_cast %12 : vector<128x8xf32> to vector<8x16x8xf32>
    %cst_11 = arith.constant dense<0xFF800000> : vector<8x8xf32>
    %14 = vector.multi_reduction <maximumf>, %13, %cst_11 [1] : vector<8x16x8xf32> to vector<8x8xf32>
    %15 = vector.shape_cast %14 : vector<8x8xf32> to vector<8x1x8xf32>
    %16 = vector.broadcast %15 : vector<8x1x8xf32> to vector<8x16x8xf32>
    %17 = arith.subf %13, %16 : vector<8x16x8xf32>
    %18 = math.exp %17 : vector<8x16x8xf32>
    %cst_12 = arith.constant dense<0.000000e+00> : vector<8x8xf32>
    %19 = vector.multi_reduction <add>, %18, %cst_12 [1] : vector<8x16x8xf32> to vector<8x8xf32>
    %20 = vector.shape_cast %19 : vector<8x8xf32> to vector<8x1x8xf32>
    %21 = tpu.reciprocal %20 : vector<8x1x8xf32> -> vector<8x1x8xf32>
    %22 = vector.broadcast %21 : vector<8x1x8xf32> to vector<8x16x8xf32>
    %23 = arith.mulf %18, %22 : vector<8x16x8xf32>
    %24 = tpu.transpose %23, [0, 2, 1] : vector<8x16x8xf32> -> vector<8x8x16xf32>
    %c0_13 = arith.constant 0 : index
    %c0_14 = arith.constant 0 : index
    %c0_15 = arith.constant 0 : index
    %25 = vector.load %arg7[%c0_13, %c0_14, %c0_15] : memref<8x8x16xf32, #tpu.memory_space<vmem>>, vector<8x8x16xf32>
    tpu.vector_store %arg7[%c0_13, %c0_14, %c0_15], %24 {strides = array<i32>} : memref<8x8x16xf32, #tpu.memory_space<vmem>>, vector<8x8x16xf32>,
    %26 = vector.shape_cast %23 : vector<8x16x8xf32> to vector<128x8xf32>
    %cst_16 = arith.constant dense<0.000000e+00> : vector<128x64xf32>
    %27 = tpu.matmul %26, %5, %cst_16 {dimension_numbers = #tpu.dot_dimension_numbers<[1], [0], [0], [1], [0, 0, 1, 1], [], []>, precision = #tpu.contract_precision<fp32>} : vector<128x8xf32>, vector<8x64xf32>, vector<128x64xf32> -> vector<128x64xf32>
    %28 = vector.shape_cast %27 : vector<128x64xf32> to vector<8x16x64xf32>
    %29 = arith.mulf %0, %28 : vector<8x16x64xf32>
    %cst_17 = arith.constant dense<0.000000e+00> : vector<8x64xf32>
    %30 = vector.multi_reduction <add>, %29, %cst_17 [1] : vector<8x16x64xf32> to vector<8x64xf32>
    %31 = vector.broadcast %3 : vector<1x64xf32> to vector<8x64xf32>
    %32 = arith.mulf %30, %31 : vector<8x64xf32>
    %cst_18 = arith.constant dense<0.000000e+00> : vector<8x8xf32>
    %33 = tpu.matmul %32, %4, %cst_18 {dimension_numbers = #tpu.dot_dimension_numbers<[1], [0], [0], [1], [0, 0, 1, 1], [], []>, precision = #tpu.contract_precision<fp32>} : vector<8x64xf32>, vector<64x8xf32>, vector<8x8xf32> -> vector<8x8xf32>
    %cst_19 = arith.constant dense<0xFF800000> : vector<8xf32>
    %34 = vector.multi_reduction <maximumf>, %33, %cst_19 [1] : vector<8x8xf32> to vector<8xf32>
    %35 = vector.shape_cast %34 : vector<8xf32> to vector<8x1xf32>
    %36 = vector.broadcast %35 : vector<8x1xf32> to vector<8x8xf32>
    %37 = arith.subf %33, %36 : vector<8x8xf32>
    %38 = math.exp %37 : vector<8x8xf32>
    %cst_20 = arith.constant dense<0.000000e+00> : vector<8xf32>
    %39 = vector.multi_reduction <add>, %38, %cst_20 [1] : vector<8x8xf32> to vector<8xf32>
    %40 = vector.shape_cast %39 : vector<8xf32> to vector<8x1xf32>
    %41 = tpu.reciprocal %40 : vector<8x1xf32> -> vector<8x1xf32>
    %42 = vector.broadcast %41 : vector<8x1xf32> to vector<8x8xf32>
    %43 = arith.mulf %38, %42 : vector<8x8xf32>
    %cst_21 = arith.constant dense<0.000000e+00> : vector<8x64xf32>
    %44 = tpu.matmul %43, %5, %cst_21 {dimension_numbers = #tpu.dot_dimension_numbers<[1], [0], [0], [1], [0, 0, 1, 1], [], []>, precision = #tpu.contract_precision<fp32>} : vector<8x8xf32>, vector<8x64xf32>, vector<8x64xf32> -> vector<8x64xf32>
    %45 = arith.mulf %30, %44 : vector<8x64xf32>
    %cst_22 = arith.constant dense<0.000000e+00> : vector<8x8xf32>
    %46 = tpu.matmul %45, %6, %cst_22 {dimension_numbers = #tpu.dot_dimension_numbers<[1], [0], [0], [1], [0, 0, 1, 1], [], []>, precision = #tpu.contract_precision<fp32>} : vector<8x64xf32>, vector<64x8xf32>, vector<8x8xf32> -> vector<8x8xf32>
    %c0_23 = arith.constant 0 : index
    %c0_24 = arith.constant 0 : index
    %47 = vector.load %arg6[%c0_23, %c0_24] : memref<8x8xf32, #tpu.memory_space<vmem>>, vector<8x8xf32>
    tpu.vector_store %arg6[%c0_23, %c0_24], %46 {strides = array<i32>} : memref<8x8xf32, #tpu.memory_space<vmem>>, vector<8x8xf32>,
    return
  }
  func.func @transform_0(%arg0: i32) -> (i32, i32, i32) {
    %c0_i32 = arith.constant 0 : i32
    %c0_i32_0 = arith.constant 0 : i32
    %c0_i32_1 = arith.constant 0 : i32
    return %arg0, %c0_i32, %c0_i32_0 : i32, i32, i32
  }
  func.func @transform_1(%arg0: i32) -> (i32, i32) {
    %c0_i32 = arith.constant 0 : i32
    %c0_i32_0 = arith.constant 0 : i32
    %c0_i32_1 = arith.constant 0 : i32
    return %c0_i32, %c0_i32_0 : i32, i32
  }
  func.func @transform_2(%arg0: i32) -> (i32, i32) {
    %c0_i32 = arith.constant 0 : i32
    %c0_i32_0 = arith.constant 0 : i32
    %c0_i32_1 = arith.constant 0 : i32
    return %c0_i32, %c0_i32_0 : i32, i32
  }
  func.func @transform_3(%arg0: i32) -> (i32, i32) {
    %c0_i32 = arith.constant 0 : i32
    %c0_i32_0 = arith.constant 0 : i32
    %c0_i32_1 = arith.constant 0 : i32
    return %c0_i32, %c0_i32_0 : i32, i32
  }
  func.func @transform_4(%arg0: i32) -> (i32, i32) {
    %c0_i32 = arith.constant 0 : i32
    %c0_i32_0 = arith.constant 0 : i32
    %c0_i32_1 = arith.constant 0 : i32
    return %c0_i32, %c0_i32_0 : i32, i32
  }
  func.func @transform_5(%arg0: i32) -> (i32, i32) {
    %c0_i32 = arith.constant 0 : i32
    %c0_i32_0 = arith.constant 0 : i32
    return %arg0, %c0_i32 : i32, i32
  }
  func.func @transform_6(%arg0: i32) -> (i32, i32, i32) {
    %c0_i32 = arith.constant 0 : i32
    %c0_i32_0 = arith.constant 0 : i32
    %c0_i32_1 = arith.constant 0 : i32
    return %arg0, %c0_i32, %c0_i32_0 : i32, i32, i32
  }
}

</mosaic_0001>

<llo_original>
// kernel: tpu_custom_call.1
$region0: #{tpu_custom_call.1}
  #allocation0 [shape = 'u32[]', space=smem, size = 0x4, offset = 0x4, fixed_abs, tag = 'smem constant byte address 0x4 - core index']
  #allocation1 [shape = 'u32[144,128]{1,0:T(1,128)}', space=vmem, size = 0x12000, scoped, tag = 'internal scratch']
  %s0 = inlined_call_operand.hbm [shape: f32[16,16,64], index: 0, kind: input, shape index: {}]
  %s1 = inlined_call_operand.vmem [shape: f32[2,64], index: 1, kind: input, shape index: {}]
  %s2 = inlined_call_operand.vmem [shape: f32[64,8], index: 2, kind: input, shape index: {}]
  %s3 = inlined_call_operand.vmem [shape: f32[8,64], index: 3, kind: input, shape index: {}]
  %s4 = inlined_call_operand.vmem [shape: f32[64,8], index: 4, kind: input, shape index: {}]
  %s5 = inlined_call_operand.vmem [shape: f32[16,8], index: 5, kind: output, shape index: {0}]
  %s6 = inlined_call_operand.hbm [shape: f32[16,8,16], index: 6, kind: output, shape index: {1}]
  %7 = xla_tuple %s5, %s6
  %s8 = sld [smem:[#allocation0]]
  $region65: #{tpu_custom_call.1} parent=0
    _
  %s10 = ssub.s32 1, %s8
  %s11 = scalar_select 0, %s10, %s8
  $region1: #{tpu_custom_call.1} parent=0
    #allocation2 [shape = 'u8[131072]{0}', space=vmem, size = 0x20000, scoped, tag = 'input window, operand 0']
    #allocation3 [shape = 's32[2]{0}', space=sflag, size = 0x8, scoped, tag = 'scoped memory for tpu_custom_call.1']
    #allocation4 [shape = 's32[2]{0}', space=sflag, size = 0x8, scoped, tag = 'scoped memory for tpu_custom_call.1']
    #allocation5 [shape = 'u8[65536]{0}', space=vmem, size = 0x10000, scoped, tag = 'output window, operand 1']
    %12 = vsyncpa [#allocation3], 0
    %s13 = scalar_lea.sflag [#allocation3], 1
    %14 = vsyncpa %s13, 0
    %15 = vsyncpa [#allocation4], 0
    %s16 = scalar_lea.sflag [#allocation4], 1
    %17 = vsyncpa %s16, 0
    loop: start=0, step=1, limit=4
    $region2: #{tpu_custom_call.1} parent=1 // loop_pre_header
      _
    $region3: #{tpu_custom_call.1} parent=1 // loop_header
      %s19 = sphi 0, %s23
      %p20 = scmp.ge.s32.totalorder %s19, 4
      %s29 = sphi 0, %s31
      %s32 = sphi 0, %s29
      %s33 = sphi 0, %s32
      %s49 = sphi 0, %s33
      %s53 = sphi 0, %s53
      %s55 = sphi 0, %s53
      %s56 = sphi 0, %s55
      %s70 = sphi 0, %s56
      %s74 = sphi 0, %s74
      %s76 = sphi 0, %s74
      %s77 = sphi 0, %s76
      %s91 = sphi 0, %s77
      %s95 = sphi 0, %s95
      %s97 = sphi 0, %s95
      %s98 = sphi 0, %s97
      %s112 = sphi 0, %s98
      %s116 = sphi 0, %s116
      %s118 = sphi 0, %s116
      %s119 = sphi 0, %s118
      %s133 = sphi 0, %s119
      %s139 = sphi 0, %s141
      %s142 = sphi 0, %s139
      %s143 = sphi 0, %s142
      %s159 = sphi 0, %s143
      %s165 = sphi 0, %s167
      %s168 = sphi 0, %s165
      %s169 = sphi 0, %s168
      %s185 = sphi 0, %s169
    $region4: #{tpu_custom_call.1} parent=1 // loop_header_branch
      %22 = sbr.rel (%p20) target = $region8
    $region5: #{tpu_custom_call.1} parent=1 // loop_body
      %s24 = ssub.s32 %s19, 1
      %s25 = ssub.s32 %s19, 2
      %s26 = sadd.s32 %s19, 1
      %s27 = ssub.s32 %s19, %s26
      %p28 = scmp.eq.s32.totalorder %s27, 0
      %s30 = sadd.s32 %s29, 1
      %s31 = scalar_select %p28, %s29, %s30
      %p34 = pneg %p28
      %p35 = scmp.eq.s32.totalorder %s19, 1
      %p36 = por %p34, %p35
      %p37 = scmp.ne.s32.totalorder %s29, %s32
      %p38 = scmp.eq.s32.totalorder %s19, 0
      %p39 = por %p37, %p38
      %p40 = scmp.ne.s32.totalorder %s29, %s32
      %p41 = scmp.eq.s32.totalorder %s24, 1
      %p42 = por %p40, %p41
      %p43 = scmp.ne.s32.totalorder %s32, %s33
      %p44 = scmp.eq.s32.totalorder %s24, 0
      %p45 = por %p43, %p44
      %p46 = scmp.ne.s32.totalorder %s32, %s33
      %p47 = scmp.eq.s32.totalorder %s25, 1
      %p48 = por %p46, %p47
      %p50 = scmp.ne.s32.totalorder %s33, %s49
      %p51 = scmp.eq.s32.totalorder %s25, 0
      %p52 = por %p50, %p51
      %s54 = sadd.s32 %s53, 1
      %p57 = scmp.eq.s32.totalorder %s19, 1
      %p58 = scmp.ne.s32.totalorder %s53, %s55
      %p59 = scmp.eq.s32.totalorder %s19, 0
      %p60 = por %p58, %p59
      %p61 = scmp.ne.s32.totalorder %s53, %s55
      %p62 = scmp.eq.s32.totalorder %s24, 1
      %p63 = por %p61, %p62
      %p64 = scmp.ne.s32.totalorder %s55, %s56
      %p65 = scmp.eq.s32.totalorder %s24, 0
      %p66 = por %p64, %p65
      %p67 = scmp.ne.s32.totalorder %s55, %s56
      %p68 = scmp.eq.s32.totalorder %s25, 1
      %p69 = por %p67, %p68
      %p71 = scmp.ne.s32.totalorder %s56, %s70
      %p72 = scmp.eq.s32.totalorder %s25, 0
      %p73 = por %p71, %p72
      %s75 = sadd.s32 %s74, 1
      %p78 = scmp.eq.s32.totalorder %s19, 1
      %p79 = scmp.ne.s32.totalorder %s74, %s76
      %p80 = scmp.eq.s32.totalorder %s19, 0
      %p81 = por %p79, %p80
      %p82 = scmp.ne.s32.totalorder %s74, %s76
      %p83 = scmp.eq.s32.totalorder %s24, 1
      %p84 = por %p82, %p83
      %p85 = scmp.ne.s32.totalorder %s76, %s77
      %p86 = scmp.eq.s32.totalorder %s24, 0
      %p87 = por %p85, %p86
      %p88 = scmp.ne.s32.totalorder %s76, %s77
      %p89 = scmp.eq.s32.totalorder %s25, 1
      %p90 = por %p88, %p89
      %p92 = scmp.ne.s32.totalorder %s77, %s91
      %p93 = scmp.eq.s32.totalorder %s25, 0
      %p94 = por %p92, %p93
      %s96 = sadd.s32 %s95, 1
      %p99 = scmp.eq.s32.totalorder %s19, 1
      %p100 = scmp.ne.s32.totalorder %s95, %s97
      %p101 = scmp.eq.s32.totalorder %s19, 0
      %p102 = por %p100, %p101
      %p103 = scmp.ne.s32.totalorder %s95, %s97
      %p104 = scmp.eq.s32.totalorder %s24, 1
      %p105 = por %p103, %p104
      %p106 = scmp.ne.s32.totalorder %s97, %s98
      %p107 = scmp.eq.s32.totalorder %s24, 0
      %p108 = por %p106, %p107
      %p109 = scmp.ne.s32.totalorder %s97, %s98
      %p110 = scmp.eq.s32.totalorder %s25, 1
      %p111 = por %p109, %p110
      %p113 = scmp.ne.s32.totalorder %s98, %s112
      %p114 = scmp.eq.s32.totalorder %s25, 0
      %p115 = por %p113, %p114
      %s117 = sadd.s32 %s116, 1
      %p120 = scmp.eq.s32.totalorder %s19, 1
      %p121 = scmp.ne.s32.totalorder %s116, %s118
      %p122 = scmp.eq.s32.totalorder %s19, 0
      %p123 = por %p121, %p122
      %p124 = scmp.ne.s32.totalorder %s116, %s118
      %p125 = scmp.eq.s32.totalorder %s24, 1
      %p126 = por %p124, %p125
      %p127 = scmp.ne.s32.totalorder %s118, %s119
      %p128 = scmp.eq.s32.totalorder %s24, 0
      %p129 = por %p127, %p128
      %p130 = scmp.ne.s32.totalorder %s118, %s119
      %p131 = scmp.eq.s32.totalorder %s25, 1
      %p132 = por %p130, %p131
      %p134 = scmp.ne.s32.totalorder %s119, %s133
      %p135 = scmp.eq.s32.totalorder %s25, 0
      %p136 = por %p134, %p135
      %s137 = ssub.s32 %s19, %s26
      %p138 = scmp.eq.s32.totalorder %s137, 0
      %s140 = sadd.s32 %s139, 1
      %s141 = scalar_select %p138, %s139, %s140
      %p144 = pneg %p138
      %p145 = scmp.eq.s32.totalorder %s19, 1
      %p146 = por %p144, %p145
      %p147 = scmp.ne.s32.totalorder %s139, %s142
      %p148 = scmp.eq.s32.totalorder %s19, 0
      %p149 = por %p147, %p148
      %p150 = scmp.ne.s32.totalorder %s139, %s142
      %p151 = scmp.eq.s32.totalorder %s24, 1
      %p152 = por %p150, %p151
      %p153 = scmp.ne.s32.totalorder %s142, %s143
      %p154 = scmp.eq.s32.totalorder %s24, 0
      %p155 = por %p153, %p154
      %p156 = scmp.ne.s32.totalorder %s142, %s143
      %p157 = scmp.eq.s32.totalorder %s25, 1
      %p158 = por %p156, %p157
      %p160 = scmp.ne.s32.totalorder %s143, %s159
      %p161 = scmp.eq.s32.totalorder %s25, 0
      %p162 = por %p160, %p161
      %s163 = ssub.s32 %s19, %s26
      %p164 = scmp.eq.s32.totalorder %s163, 0
      %s166 = sadd.s32 %s165, 1
      %s167 = scalar_select %p164, %s165, %s166
      %p170 = pneg %p164
      %p171 = scmp.eq.s32.totalorder %s19, 1
      %p172 = por %p170, %p171
      %p173 = scmp.ne.s32.totalorder %s165, %s168
      %p174 = scmp.eq.s32.totalorder %s19, 0
      %p175 = por %p173, %p174
      %p176 = scmp.ne.s32.totalorder %s165, %s168
      %p177 = scmp.eq.s32.totalorder %s24, 1
      %p178 = por %p176, %p177
      %p179 = scmp.ne.s32.totalorder %s168, %s169
      %p180 = scmp.eq.s32.totalorder %s24, 0
      %p181 = por %p179, %p180
      %p182 = scmp.ne.s32.totalorder %s168, %s169
      %p183 = scmp.eq.s32.totalorder %s25, 1
      %p184 = por %p182, %p183
      %p186 = scmp.ne.s32.totalorder %s169, %s185
      %p187 = scmp.eq.s32.totalorder %s25, 0
      %p188 = por %p186, %p187
      %p189 = scmp.le.s32.totalorder 1, %s19
      %p190 = scmp.lt.s32.totalorder %s19, 3
      %p191 = pnand %p189, %p190
      %p192 = pneg %p191
      // Predicated region
      $region9: #{tpu_custom_call.1} parent=5 // pred_check
        _
      $region10: #{tpu_custom_call.1} parent=5 // pred_check_branch
        %194 = sbr.rel (%p191) target = $region12
      $region11: #{tpu_custom_call.1} parent=5 // pred_region
        %s195 = ssub.s32 %s19, 1
        // Predicated region
        $region13: #{tpu_custom_call.1} parent=11 // pred_check
          %p196 = pneg %p66
        $region14: #{tpu_custom_call.1} parent=11 // pred_check_branch
          %198 = sbr.rel (%p196) target = $region16
        $region15: #{tpu_custom_call.1} parent=11 // pred_region
          _
        $region16: #{tpu_custom_call.1} parent=11 // pred_fallthru
          _
        // Predicated region
        $region17: #{tpu_custom_call.1} parent=11 // pred_check
          %p199 = pneg %p87
        $region18: #{tpu_custom_call.1} parent=11 // pred_check_branch
          %201 = sbr.rel (%p199) target = $region20
        $region19: #{tpu_custom_call.1} parent=11 // pred_region
          _
        $region20: #{tpu_custom_call.1} parent=11 // pred_fallthru
          _
        // Predicated region
        $region21: #{tpu_custom_call.1} parent=11 // pred_check
          %p202 = pneg %p108
        $region22: #{tpu_custom_call.1} parent=11 // pred_check_branch
          %204 = sbr.rel (%p202) target = $region24
        $region23: #{tpu_custom_call.1} parent=11 // pred_region
          _
        $region24: #{tpu_custom_call.1} parent=11 // pred_fallthru
          _
        // Predicated region
        $region25: #{tpu_custom_call.1} parent=11 // pred_check
          %p205 = pneg %p129
        $region26: #{tpu_custom_call.1} parent=11 // pred_check_branch
          %207 = sbr.rel (%p205) target = $region28
        $region27: #{tpu_custom_call.1} parent=11 // pred_region
          _
        $region28: #{tpu_custom_call.1} parent=11 // pred_fallthru
          _
      $region12: #{tpu_custom_call.1} parent=5 // pred_fallthru
        _
      %p208 = scmp.lt.s32.totalorder %s19, 2
      // Predicated region
      $region29: #{tpu_custom_call.1} parent=5 // pred_check
        %p209 = pneg %p208
      $region30: #{tpu_custom_call.1} parent=5 // pred_check_branch
        %211 = sbr.rel (%p209) target = $region32
      $region31: #{tpu_custom_call.1} parent=5 // pred_region
        // Predicated region
        $region33: #{tpu_custom_call.1} parent=31 // pred_check
          %p212 = pneg %p39
        $region34: #{tpu_custom_call.1} parent=31 // pred_check_branch
          %214 = sbr.rel (%p212) target = $region36
        $region35: #{tpu_custom_call.1} parent=31 // pred_region
          %s215 = sand.u32 %s29, 1
          %s216 = scalar_lea.sflag [#allocation3], %s215
          %s217 = sand.u32 %s29, 1
          %s218 = smul.addr %s217, 128
          %s219 = scalar_lea.vmem [#allocation2], %s218
          %s220 = smul.u32 8, %s19
          %s222 = ssub.s32 2048, 2048
          %223 = vsyncadd %s216, %s222
          %s224 = smul.addr %s220, 2
          %s225 = smul.addr %s224, 128
          %s226 = scalar_lea.hbm %s0, %s225
          %s227 = sshll.u32 %s219, 4
          %s228 = int_to_ptr.vmem [resolvable:$true] %s227
          %233 = dma.hbm_to_vmem [thread:$0]  %s226, 2048, %s228, %s216, 128, 128, 8
        $region36: #{tpu_custom_call.1} parent=31 // pred_fallthru
          _
      $region32: #{tpu_custom_call.1} parent=5 // pred_fallthru
        _
      %p234 = scmp.le.s32.totalorder 1, %s19
      %p235 = scmp.lt.s32.totalorder %s19, 3
      %p236 = pnand %p234, %p235
      %p237 = pneg %p236
      // Predicated region
      $region37: #{tpu_custom_call.1} parent=5 // pred_check
        _
      $region38: #{tpu_custom_call.1} parent=5 // pred_check_branch
        %239 = sbr.rel (%p236) target = $region40
      $region39: #{tpu_custom_call.1} parent=5 // pred_region
        %s240 = ssub.s32 %s19, 1
        %s241 = sand.u32 %s32, 1
        %s242 = scalar_lea.sflag [#allocation3], %s241
        %s243 = sand.u32 %s32, 1
        %s244 = smul.addr %s243, 128
        %s245 = scalar_lea.vmem [#allocation2], %s244
        // Predicated region
        $region41: #{tpu_custom_call.1} parent=39 // pred_check
          %p246 = pneg %p45
        $region42: #{tpu_custom_call.1} parent=39 // pred_check_branch
          %248 = sbr.rel (%p246) target = $region44
        $region43: #{tpu_custom_call.1} parent=39 // pred_region
          %249 = dma.done %s242, 2048
        $region44: #{tpu_custom_call.1} parent=39 // pred_fallthru
          _
        %s250 = sand.u32 %s32, 1
        %s251 = scalar_lea.sflag [#allocation3], %s250
        %s252 = sand.u32 %s32, 1
        %s253 = smul.addr %s252, 128
        %s254 = scalar_lea.vmem [#allocation2], %s253
        %p255 = pneg %p45
        %p256 = pneg %p42
        %p257 = pneg %p66
        %p258 = pneg %p63
        %p259 = pneg %p87
        %p260 = pneg %p84
        %p261 = pneg %p108
        %p262 = pneg %p105
        %p263 = pneg %p129
        %p264 = pneg %p126
        %p265 = pneg %p155
        %p266 = pneg %p152
        %p267 = scmp.lt.s32.totalorder %s24, 1
        %s268 = scalar_select %p267, %s24, 1
        %s269 = smul.addr %s268, 8
        %s270 = scalar_lea.vmem %s5, %s269
        %p271 = pneg %p181
        %p272 = pneg %p178
        %s273 = sand.u32 %s168, 1
        %s274 = scalar_lea.sflag [#allocation4], %s273
        %s275 = sand.u32 %s168, 1
        %s276 = smul.addr %s275, 64
        %s277 = scalar_lea.vmem [#allocation5], %s276
        %s278 = smul.u32 8, %s24
        %p279 = scmp.lt.s32.totalorder %s24, 1
        %s280 = scalar_select %p279, %s24, 1
        %s281 = smul.addr %s280, 8
        %s282 = scalar_lea.vmem %s5, %s281
        %s283 = smul.u32 8, %s24
        %v284 = vld [vmem:[%s245] sm:$0xff]
        %v285 = vld [vmem:[%s245 + $0x8] sm:$0xff]
        %v286 = vld [vmem:[%s245 + $0x10] sm:$0xff]
        %v287 = vld [vmem:[%s245 + $0x18] sm:$0xff]
        %v288 = vld [vmem:[%s245 + $0x20] sm:$0xff]
        %v289 = vld [vmem:[%s245 + $0x28] sm:$0xff]
        %v290 = vld [vmem:[%s245 + $0x30] sm:$0xff]
        %v291 = vld [vmem:[%s245 + $0x38] sm:$0xff]
        %v292 = vld [vmem:[%s245 + $0x40] sm:$0xff]
        %v293 = vld [vmem:[%s245 + $0x48] sm:$0xff]
        %v294 = vld [vmem:[%s245 + $0x50] sm:$0xff]
        %v295 = vld [vmem:[%s245 + $0x58] sm:$0xff]
        %v296 = vld [vmem:[%s245 + $0x60] sm:$0xff]
        %v297 = vld [vmem:[%s245 + $0x68] sm:$0xff]
        %v298 = vld [vmem:[%s245 + $0x70] sm:$0xff]
        %v299 = vld [vmem:[%s245 + $0x78] sm:$0xff]
        %v300 = vld [vmem:[%s1] sm:$0x3]
        %v301 = vld [vmem:[%s2] sm:$0xff]
        %v302 = vld [vmem:[%s2 + $0x8] sm:$0xff]
        %v303 = vld [vmem:[%s2 + $0x10] sm:$0xff]
        %v304 = vld [vmem:[%s2 + $0x18] sm:$0xff]
        %v305 = vld [vmem:[%s2 + $0x20] sm:$0xff]
        %v306 = vld [vmem:[%s2 + $0x28] sm:$0xff]
        %v307 = vld [vmem:[%s2 + $0x30] sm:$0xff]
        %v308 = vld [vmem:[%s2 + $0x38] sm:$0xff]
        %v309 = vld [vmem:[%s3] sm:$0xff]
        %v310 = vld [vmem:[%s4] sm:$0xff]
        %v311 = vld [vmem:[%s4 + $0x8] sm:$0xff]
        %v312 = vld [vmem:[%s4 + $0x10] sm:$0xff]
        %v313 = vld [vmem:[%s4 + $0x18] sm:$0xff]
        %v314 = vld [vmem:[%s4 + $0x20] sm:$0xff]
        %v315 = vld [vmem:[%s4 + $0x28] sm:$0xff]
        %v316 = vld [vmem:[%s4 + $0x30] sm:$0xff]
        %v317 = vld [vmem:[%s4 + $0x38] sm:$0xff]
        %v318 = vlaneseq
        %v319 = vshrl.u32 %v318, 7
        %v320 = vsub.s32 0, %v319
        %v321 = vrot.slane %v300, %v320
        %v322 = vmul.f32 %v284, %v321
        %v323 = vmul.f32 %v285, %v321
        %v324 = vmul.f32 %v286, %v321
        %v325 = vmul.f32 %v287, %v321
        %v326 = vmul.f32 %v288, %v321
        %v327 = vmul.f32 %v289, %v321
        %v328 = vmul.f32 %v290, %v321
        %v329 = vmul.f32 %v291, %v321
        %v330 = vmul.f32 %v292, %v321
        %v331 = vmul.f32 %v293, %v321
        %v332 = vmul.f32 %v294, %v321
        %v333 = vmul.f32 %v295, %v321
        %v334 = vmul.f32 %v296, %v321
        %v335 = vmul.f32 %v297, %v321
        %v336 = vmul.f32 %v298, %v321
        %v337 = vmul.f32 %v299, %v321
        %vm338 = vcmask 523264
        %v340 = vsel %vm338, %v322, 0
        %v343 = vsel %vm338, %v323, 0
        %v346 = vsel %vm338, %v324, 0
        %v349 = vsel %vm338, %v325, 0
        %v352 = vsel %vm338, %v326, 0
        %v355 = vsel %vm338, %v327, 0
        %v358 = vsel %vm338, %v328, 0
        %v361 = vsel %vm338, %v329, 0
        %v364 = vsel %vm338, %v330, 0
        %v367 = vsel %vm338, %v331, 0
        %v370 = vsel %vm338, %v332, 0
        %v373 = vsel %vm338, %v333, 0
        %v376 = vsel %vm338, %v334, 0
        %v379 = vsel %vm338, %v335, 0
        %v382 = vsel %vm338, %v336, 0
        %v385 = vsel %vm338, %v337, 0
        %387 = vmatprep.subr.mxu0 0.0
        %v388 = vand.u32 %v301, 4294901760
        %389 = vmatpush1.msra.mxu0 %v388
        %390 = vmatprep.subr.mxu0 0.0
        %v391 = vand.u32 %v302, 4294901760
        %392 = vmatpush1.msra.mxu0 %v391
        %393 = vmatprep.subr.mxu0 0.0
        %v394 = vand.u32 %v303, 4294901760
        %395 = vmatpush1.msra.mxu0 %v394
        %396 = vmatprep.subr.mxu0 0.0
        %v397 = vand.u32 %v304, 4294901760
        %398 = vmatpush1.msra.mxu0 %v397
        %399 = vmatprep.subr.mxu0 0.0
        %v400 = vand.u32 %v305, 4294901760
        %401 = vmatpush1.msra.mxu0 %v400
        %402 = vmatprep.subr.mxu0 0.0
        %v403 = vand.u32 %v306, 4294901760
        %404 = vmatpush1.msra.mxu0 %v403
        %405 = vmatprep.subr.mxu0 0.0
        %v406 = vand.u32 %v307, 4294901760
        %407 = vmatpush1.msra.mxu0 %v406
        %408 = vmatprep.subr.mxu0 0.0
        %v409 = vand.u32 %v308, 4294901760
        %410 = vmatpush1.msra.mxu0 %v409
        %411 = vmatprep.subr.mxu0 0.0
        %412 = vmatpush1.msra.mxu0 0.0
        %413 = vmatprep.subr.mxu0 0.0
        %414 = vmatpush1.msra.mxu0 0.0
        %415 = vmatprep.subr.mxu0 0.0
        %416 = vmatpush1.msra.mxu0 0.0
        %417 = vmatprep.subr.mxu0 0.0
        %418 = vmatpush1.msra.mxu0 0.0
        %419 = vmatprep.subr.mxu0 0.0
        %420 = vmatpush1.msra.mxu0 0.0
        %421 = vmatprep.subr.mxu0 0.0
        %422 = vmatpush1.msra.mxu0 0.0
        %423 = vmatprep.subr.mxu0 0.0
        %424 = vmatpush1.msra.mxu0 0.0
        %425 = vmatprep.subr.mxu0 0.0
        %426 = vmatpush1.msra.mxu0 0.0
        %427 = vmatprep.subr.mxu0 0.0
        %428 = vmatpush1.msra.mxu0 0.0
        %429 = vmatprep.subr.mxu0 0.0
        %430 = vmatpush1.msra.mxu0 0.0
        %431 = vmatprep.subr.mxu0 0.0
        %432 = vmatpush1.msra.mxu0 0.0
        %433 = vmatprep.subr.mxu0 0.0
        %434 = vmatpush1.msra.mxu0 0.0
        %435 = vmatprep.subr.mxu0 0.0
        %436 = vmatpush1.msra.mxu0 0.0
        %437 = vmatprep.subr.mxu0 0.0
        %438 = vmatpush1.msra.mxu0 0.0
        %439 = vmatprep.subr.mxu0 0.0
        %440 = vmatpush1.msra.mxu0 0.0
        %441 = vmatprep.subr.mxu0 0.0
        %442 = vmatpush1.msra.mxu0 0.0
        %443 = vmatprep.subr.mxu0 0.0
        %444 = vmatpush1.msra.mxu0 0.0
        %445 = vmatprep.subr.mxu0 0.0
        %446 = vmatpush1.msra.mxu0 0.0
        %447 = vmatprep.subr.mxu0 0.0
        %448 = vmatpush1.msra.mxu0 0.0
        %449 = vmatprep.subr.mxu0 0.0
        %450 = vmatpush1.msra.mxu0 0.0
        %451 = vmatprep.subr.mxu0 0.0
        %452 = vmatpush1.msra.mxu0 0.0
        %453 = vmatprep.subr.mxu0 0.0
        %454 = vmatpush1.msra.mxu0 0.0
        %455 = vmatprep.subr.mxu0 0.0
        %456 = vmatpush1.msra.mxu0 0.0
        %457 = vmatprep.subr.mxu0 0.0
        %458 = vmatpush1.msra.mxu0 0.0
        %459 = vmatprep.mubr.f32.mxu0 0.0
        %v460 = vand.u32 %v340, 4294901760
        %v461 = vsub.f32 %v340, %v460
        %v462 = vand.u32 %v461, 4294901760
        %v463 = vsub.f32 %v461, %v462
        %v464 = vand.u32 %v463, 4294901760
        %465 = vmatmul.mubr.f32.gmra.mrb[0].mxu0 %v464
        %v466 = vpop.f32.mrb[0].mxu0
        %v467 = vadd.f32 0.0, %v466
        %v468 = vpop.f32.mrb[0].mxu0
        %469 = vmatprep.mubr.f32.mxu0 0.0
        %v470 = vand.u32 %v343, 4294901760
        %v471 = vsub.f32 %v343, %v470
        %v472 = vand.u32 %v471, 4294901760
        %v473 = vsub.f32 %v471, %v472
        %v474 = vand.u32 %v473, 4294901760
        %475 = vmatmul.mubr.f32.gmra.mrb[0].mxu0 %v474
        %v476 = vpop.f32.mrb[0].mxu0
        %v477 = vadd.f32 0.0, %v476
        %v478 = vpop.f32.mrb[0].mxu0
        %479 = vmatprep.mubr.f32.mxu0 0.0
        %v480 = vand.u32 %v346, 4294901760
        %v481 = vsub.f32 %v346, %v480
        %v482 = vand.u32 %v481, 4294901760
        %v483 = vsub.f32 %v481, %v482
        %v484 = vand.u32 %v483, 4294901760
        %485 = vmatmul.mubr.f32.gmra.mrb[0].mxu0 %v484
        %v486 = vpop.f32.mrb[0].mxu0
        %v487 = vadd.f32 0.0, %v486
        %v488 = vpop.f32.mrb[0].mxu0
        %489 = vmatprep.mubr.f32.mxu0 0.0
        %v490 = vand.u32 %v349, 4294901760
        %v491 = vsub.f32 %v349, %v490
        %v492 = vand.u32 %v491, 4294901760
        %v493 = vsub.f32 %v491, %v492
        %v494 = vand.u32 %v493, 4294901760
        %495 = vmatmul.mubr.f32.gmra.mrb[0].mxu0 %v494
        %v496 = vpop.f32.mrb[0].mxu0
        %v497 = vadd.f32 0.0, %v496
        %v498 = vpop.f32.mrb[0].mxu0
        %499 = vmatprep.mubr.f32.mxu0 0.0
        %v500 = vand.u32 %v352, 4294901760
        %v501 = vsub.f32 %v352, %v500
        %v502 = vand.u32 %v501, 4294901760
        %v503 = vsub.f32 %v501, %v502
        %v504 = vand.u32 %v503, 4294901760
        %505 = vmatmul.mubr.f32.gmra.mrb[0].mxu0 %v504
        %v506 = vpop.f32.mrb[0].mxu0
        %v507 = vadd.f32 0.0, %v506
        %v508 = vpop.f32.mrb[0].mxu0
        %509 = vmatprep.mubr.f32.mxu0 0.0
        %v510 = vand.u32 %v355, 4294901760
        %v511 = vsub.f32 %v355, %v510
        %v512 = vand.u32 %v511, 4294901760
        %v513 = vsub.f32 %v511, %v512
        %v514 = vand.u32 %v513, 4294901760
        %515 = vmatmul.mubr.f32.gmra.mrb[0].mxu0 %v514
        %v516 = vpop.f32.mrb[0].mxu0
        %v517 = vadd.f32 0.0, %v516
        %v518 = vpop.f32.mrb[0].mxu0
        %519 = vmatprep.mubr.f32.mxu0 0.0
        %v520 = vand.u32 %v358, 4294901760
        %v521 = vsub.f32 %v358, %v520
        %v522 = vand.u32 %v521, 4294901760
        %v523 = vsub.f32 %v521, %v522
        %v524 = vand.u32 %v523, 4294901760
        %525 = vmatmul.mubr.f32.gmra.mrb[0].mxu0 %v524
        %v526 = vpop.f32.mrb[0].mxu0
        %v527 = vadd.f32 0.0, %v526
        %v528 = vpop.f32.mrb[0].mxu0
        %529 = vmatprep.mubr.f32.mxu0 0.0
        %v530 = vand.u32 %v361, 4294901760
        %v531 = vsub.f32 %v361, %v530
        %v532 = vand.u32 %v531, 4294901760
        %v533 = vsub.f32 %v531, %v532
        %v534 = vand.u32 %v533, 4294901760
        %535 = vmatmul.mubr.f32.gmra.mrb[0].mxu0 %v534
        %v536 = vpop.f32.mrb[0].mxu0
        %v537 = vadd.f32 0.0, %v536
        %v538 = vpop.f32.mrb[0].mxu0
        %539 = vmatprep.mubr.f32.mxu0 0.0
        %v540 = vand.u32 %v364, 4294901760
        %v541 = vsub.f32 %v364, %v540
        %v542 = vand.u32 %v541, 4294901760
        %v543 = vsub.f32 %v541, %v542
        %v544 = vand.u32 %v543, 4294901760
        %545 = vmatmul.mubr.f32.gmra.mrb[0].mxu0 %v544
        %v546 = vpop.f32.mrb[0].mxu0
        %v547 = vadd.f32 0.0, %v546
        %v548 = vpop.f32.mrb[0].mxu0
        %549 = vmatprep.mubr.f32.mxu0 0.0
        %v550 = vand.u32 %v367, 4294901760
        %v551 = vsub.f32 %v367, %v550
        %v552 = vand.u32 %v551, 4294901760
        %v553 = vsub.f32 %v551, %v552
        %v554 = vand.u32 %v553, 4294901760
        %555 = vmatmul.mubr.f32.gmra.mrb[0].mxu0 %v554
        %v556 = vpop.f32.mrb[0].mxu0
        %v557 = vadd.f32 0.0, %v556
        %v558 = vpop.f32.mrb[0].mxu0
        %559 = vmatprep.mubr.f32.mxu0 0.0
        %v560 = vand.u32 %v370, 4294901760
        %v561 = vsub.f32 %v370, %v560
        %v562 = vand.u32 %v561, 4294901760
        %v563 = vsub.f32 %v561, %v562
        %v564 = vand.u32 %v563, 4294901760
        %565 = vmatmul.mubr.f32.gmra.mrb[0].mxu0 %v564
        %v566 = vpop.f32.mrb[0].mxu0
        %v567 = vadd.f32 0.0, %v566
        %v568 = vpop.f32.mrb[0].mxu0
        %569 = vmatprep.mubr.f32.mxu0 0.0
        %v570 = vand.u32 %v373, 4294901760
        %v571 = vsub.f32 %v373, %v570
        %v572 = vand.u32 %v571, 4294901760
        %v573 = vsub.f32 %v571, %v572
        %v574 = vand.u32 %v573, 4294901760
        %575 = vmatmul.mubr.f32.gmra.mrb[0].mxu0 %v574
        %v576 = vpop.f32.mrb[0].mxu0
        %v577 = vadd.f32 0.0, %v576
        %v578 = vpop.f32.mrb[0].mxu0
        %579 = vmatprep.mubr.f32.mxu0 0.0
        %v580 = vand.u32 %v376, 4294901760
        %v581 = vsub.f32 %v376, %v580
        %v582 = vand.u32 %v581, 4294901760
        %v583 = vsub.f32 %v581, %v582
        %v584 = vand.u32 %v583, 4294901760
        %585 = vmatmul.mubr.f32.gmra.mrb[0].mxu0 %v584
        %v586 = vpop.f32.mrb[0].mxu0
        %v587 = vadd.f32 0.0, %v586
        %v588 = vpop.f32.mrb[0].mxu0
        %589 = vmatprep.mubr.f32.mxu0 0.0
        %v590 = vand.u32 %v379, 4294901760
        %v591 = vsub.f32 %v379, %v590
        %v592 = vand.u32 %v591, 4294901760
        %v593 = vsub.f32 %v591, %v592
        %v594 = vand.u32 %v593, 4294901760
        %595 = vmatmul.mubr.f32.gmra.mrb[0].mxu0 %v594
        %v596 = vpop.f32.mrb[0].mxu0
        %v597 = vadd.f32 0.0, %v596
        %v598 = vpop.f32.mrb[0].mxu0
        %599 = vmatprep.mubr.f32.mxu0 0.0
        %v600 = vand.u32 %v382, 4294901760
        %v601 = vsub.f32 %v382, %v600
        %v602 = vand.u32 %v601, 4294901760
        %v603 = vsub.f32 %v601, %v602
        %v604 = vand.u32 %v603, 4294901760
        %605 = vmatmul.mubr.f32.gmra.mrb[0].mxu0 %v604
        %v606 = vpop.f32.mrb[0].mxu0
        %v607 = vadd.f32 0.0, %v606
        %v608 = vpop.f32.mrb[0].mxu0
        %609 = vmatprep.mubr.f32.mxu0 0.0
        %v610 = vand.u32 %v385, 4294901760
        %v611 = vsub.f32 %v385, %v610
        %v612 = vand.u32 %v611, 4294901760
        %v613 = vsub.f32 %v611, %v612
        %v614 = vand.u32 %v613, 4294901760
        %615 = vmatmul.mubr.f32.gmra.mrb[0].mxu0 %v614
        %v616 = vpop.f32.mrb[0].mxu0
        %v617 = vadd.f32 0.0, %v616
        %v618 = vpop.f32.mrb[0].mxu0
        %619 = vdwg.mxu0
        %620 = vmatprep.subr.mxu0 0.0
        %v621 = vand.u32 %v301, 4294901760
        %v622 = vsub.f32 %v301, %v621
        %v623 = vand.u32 %v622, 4294901760
        %v624 = vsub.f32 %v622, %v623
        %v625 = vand.u32 %v624, 4294901760
        %626 = vmatpush1.msra.mxu0 %v625
        %627 = vmatprep.subr.mxu0 0.0
        %v628 = vand.u32 %v302, 4294901760
        %v629 = vsub.f32 %v302, %v628
        %v630 = vand.u32 %v629, 4294901760
        %v631 = vsub.f32 %v629, %v630
        %v632 = vand.u32 %v631, 4294901760
        %633 = vmatpush1.msra.mxu0 %v632
        %634 = vmatprep.subr.mxu0 0.0
        %v635 = vand.u32 %v303, 4294901760
        %v636 = vsub.f32 %v303, %v635
        %v637 = vand.u32 %v636, 4294901760
        %v638 = vsub.f32 %v636, %v637
        %v639 = vand.u32 %v638, 4294901760
        %640 = vmatpush1.msra.mxu0 %v639
        %641 = vmatprep.subr.mxu0 0.0
        %v642 = vand.u32 %v304, 4294901760
        %v643 = vsub.f32 %v304, %v642
        %v644 = vand.u32 %v643, 4294901760
        %v645 = vsub.f32 %v643, %v644
        %v646 = vand.u32 %v645, 4294901760
        %647 = vmatpush1.msra.mxu0 %v646
        %648 = vmatprep.subr.mxu0 0.0
        %v649 = vand.u32 %v305, 4294901760
        %v650 = vsub.f32 %v305, %v649
        %v651 = vand.u32 %v650, 4294901760
        %v652 = vsub.f32 %v650, %v651
        %v653 = vand.u32 %v652, 4294901760
        %654 = vmatpush1.msra.mxu0 %v653
        %655 = vmatprep.subr.mxu0 0.0
        %v656 = vand.u32 %v306, 4294901760
        %v657 = vsub.f32 %v306, %v656
        %v658 = vand.u32 %v657, 4294901760
        %v659 = vsub.f32 %v657, %v658
        %v660 = vand.u32 %v659, 4294901760
        %661 = vmatpush1.msra.mxu0 %v660
        %662 = vmatprep.subr.mxu0 0.0
        %v663 = vand.u32 %v307, 4294901760
        %v664 = vsub.f32 %v307, %v663
        %v665 = vand.u32 %v664, 4294901760
        %v666 = vsub.f32 %v664, %v665
        %v667 = vand.u32 %v666, 4294901760
        %668 = vmatpush1.msra.mxu0 %v667
        %669 = vmatprep.subr.mxu0 0.0
        %v670 = vand.u32 %v308, 4294901760
        %v671 = vsub.f32 %v308, %v670
        %v672 = vand.u32 %v671, 4294901760
        %v673 = vsub.f32 %v671, %v672
        %v674 = vand.u32 %v673, 4294901760
        %675 = vmatpush1.msra.mxu0 %v674
        %676 = vmatprep.subr.mxu0 0.0
        %677 = vmatpush1.msra.mxu0 0.0
        %678 = vmatprep.subr.mxu0 0.0
        %679 = vmatpush1.msra.mxu0 0.0
        %680 = vmatprep.subr.mxu0 0.0
        %681 = vmatpush1.msra.mxu0 0.0
        %682 = vmatprep.subr.mxu0 0.0
        %683 = vmatpush1.msra.mxu0 0.0
        %684 = vmatprep.subr.mxu0 0.0
        %685 = vmatpush1.msra.mxu0 0.0
        %686 = vmatprep.subr.mxu0 0.0
        %687 = vmatpush1.msra.mxu0 0.0
        %688 = vmatprep.subr.mxu0 0.0
        %689 = vmatpush1.msra.mxu0 0.0
        %690 = vmatprep.subr.mxu0 0.0
        %691 = vmatpush1.msra.mxu0 0.0
        %692 = vmatprep.subr.mxu0 0.0
        %693 = vmatpush1.msra.mxu0 0.0
        %694 = vmatprep.subr.mxu0 0.0
        %695 = vmatpush1.msra.mxu0 0.0
        %696 = vmatprep.subr.mxu0 0.0
        %697 = vmatpush1.msra.mxu0 0.0
        %698 = vmatprep.subr.mxu0 0.0
        %699 = vmatpush1.msra.mxu0 0.0
        %700 = vmatprep.subr.mxu0 0.0
        %701 = vmatpush1.msra.mxu0 0.0
        %702 = vmatprep.subr.mxu0 0.0
        %703 = vmatpush1.msra.mxu0 0.0
        %704 = vmatprep.subr.mxu0 0.0
        %705 = vmatpush1.msra.mxu0 0.0
        %706 = vmatprep.subr.mxu0 0.0
        %707 = vmatpush1.msra.mxu0 0.0
        %708 = vmatprep.subr.mxu0 0.0
        %709 = vmatpush1.msra.mxu0 0.0
        %710 = vmatprep.subr.mxu0 0.0
        %711 = vmatpush1.msra.mxu0 0.0
        %712 = vmatprep.subr.mxu0 0.0
        %713 = vmatpush1.msra.mxu0 0.0
        %714 = vmatprep.subr.mxu0 0.0
        %715 = vmatpush1.msra.mxu0 0.0
        %716 = vmatprep.subr.mxu0 0.0
        %717 = vmatpush1.msra.mxu0 0.0
        %718 = vmatprep.subr.mxu0 0.0
        %719 = vmatpush1.msra.mxu0 0.0
        %720 = vmatprep.subr.mxu0 0.0
        %721 = vmatpush1.msra.mxu0 0.0
        %722 = vmatprep.subr.mxu0 0.0
        %723 = vmatpush1.msra.mxu0 0.0
        %724 = vmatprep.mubr.f32.mxu0 0.0
        %v725 = vand.u32 %v340, 4294901760
        %726 = vmatmul.mubr.f32.gmra.mrb[0].mxu0 %v725
        %v727 = vpop.f32.mrb[0].mxu0
        %v728 = vadd.f32 %v467, %v727
        %v729 = vpop.f32.mrb[0].mxu0
        %730 = vmatprep.mubr.f32.mxu0 0.0
        %v731 = vand.u32 %v343, 4294901760
        %732 = vmatmul.mubr.f32.gmra.mrb[0].mxu0 %v731
        %v733 = vpop.f32.mrb[0].mxu0
        %v734 = vadd.f32 %v477, %v733
        %v735 = vpop.f32.mrb[0].mxu0
        %736 = vmatprep.mubr.f32.mxu0 0.0
        %v737 = vand.u32 %v346, 4294901760
        %738 = vmatmul.mubr.f32.gmra.mrb[0].mxu0 %v737
        %v739 = vpop.f32.mrb[0].mxu0
        %v740 = vadd.f32 %v487, %v739
        %v741 = vpop.f32.mrb[0].mxu0
        %742 = vmatprep.mubr.f32.mxu0 0.0
        %v743 = vand.u32 %v349, 4294901760
        %744 = vmatmul.mubr.f32.gmra.mrb[0].mxu0 %v743
        %v745 = vpop.f32.mrb[0].mxu0
        %v746 = vadd.f32 %v497, %v745
        %v747 = vpop.f32.mrb[0].mxu0
        %748 = vmatprep.mubr.f32.mxu0 0.0
        %v749 = vand.u32 %v352, 4294901760
        %750 = vmatmul.mubr.f32.gmra.mrb[0].mxu0 %v749
        %v751 = vpop.f32.mrb[0].mxu0
        %v752 = vadd.f32 %v507, %v751
        %v753 = vpop.f32.mrb[0].mxu0
        %754 = vmatprep.mubr.f32.mxu0 0.0
        %v755 = vand.u32 %v355, 4294901760
        %756 = vmatmul.mubr.f32.gmra.mrb[0].mxu0 %v755
        %v757 = vpop.f32.mrb[0].mxu0
        %v758 = vadd.f32 %v517, %v757
        %v759 = vpop.f32.mrb[0].mxu0
        %760 = vmatprep.mubr.f32.mxu0 0.0
        %v761 = vand.u32 %v358, 4294901760
        %762 = vmatmul.mubr.f32.gmra.mrb[0].mxu0 %v761
        %v763 = vpop.f32.mrb[0].mxu0
        %v764 = vadd.f32 %v527, %v763
        %v765 = vpop.f32.mrb[0].mxu0
        %766 = vmatprep.mubr.f32.mxu0 0.0
        %v767 = vand.u32 %v361, 4294901760
        %768 = vmatmul.mubr.f32.gmra.mrb[0].mxu0 %v767
        %v769 = vpop.f32.mrb[0].mxu0
        %v770 = vadd.f32 %v537, %v769
        %v771 = vpop.f32.mrb[0].mxu0
        %772 = vmatprep.mubr.f32.mxu0 0.0
        %v773 = vand.u32 %v364, 4294901760
        %774 = vmatmul.mubr.f32.gmra.mrb[0].mxu0 %v773
        %v775 = vpop.f32.mrb[0].mxu0
        %v776 = vadd.f32 %v547, %v775
        %v777 = vpop.f32.mrb[0].mxu0
        %778 = vmatprep.mubr.f32.mxu0 0.0
        %v779 = vand.u32 %v367, 4294901760
        %780 = vmatmul.mubr.f32.gmra.mrb[0].mxu0 %v779
        %v781 = vpop.f32.mrb[0].mxu0
        %v782 = vadd.f32 %v557, %v781
        %v783 = vpop.f32.mrb[0].mxu0
        %784 = vmatprep.mubr.f32.mxu0 0.0
        %v785 = vand.u32 %v370, 4294901760
        %786 = vmatmul.mubr.f32.gmra.mrb[0].mxu0 %v785
        %v787 = vpop.f32.mrb[0].mxu0
        %v788 = vadd.f32 %v567, %v787
        %v789 = vpop.f32.mrb[0].mxu0
        %790 = vmatprep.mubr.f32.mxu0 0.0
        %v791 = vand.u32 %v373, 4294901760
        %792 = vmatmul.mubr.f32.gmra.mrb[0].mxu0 %v791
        %v793 = vpop.f32.mrb[0].mxu0
        %v794 = vadd.f32 %v577, %v793
        %v795 = vpop.f32.mrb[0].mxu0
        %796 = vmatprep.mubr.f32.mxu0 0.0
        %v797 = vand.u32 %v376, 4294901760
        %798 = vmatmul.mubr.f32.gmra.mrb[0].mxu0 %v797
        %v799 = vpop.f32.mrb[0].mxu0
        %v800 = vadd.f32 %v587, %v799
        %v801 = vpop.f32.mrb[0].mxu0
        %802 = vmatprep.mubr.f32.mxu0 0.0
        %v803 = vand.u32 %v379, 4294901760
        %804 = vmatmul.mubr.f32.gmra.mrb[0].mxu0 %v803
        %v805 = vpop.f32.mrb[0].mxu0
        %v806 = vadd.f32 %v597, %v805
        %v807 = vpop.f32.mrb[0].mxu0
        %808 = vmatprep.mubr.f32.mxu0 0.0
        %v809 = vand.u32 %v382, 4294901760
        %810 = vmatmul.mubr.f32.gmra.mrb[0].mxu0 %v809
        %v811 = vpop.f32.mrb[0].mxu0
        %v812 = vadd.f32 %v607, %v811
        %v813 = vpop.f32.mrb[0].mxu0
        %814 = vmatprep.mubr.f32.mxu0 0.0
        %v815 = vand.u32 %v385, 4294901760
        %816 = vmatmul.mubr.f32.gmra.mrb[0].mxu0 %v815
        %v817 = vpop.f32.mrb[0].mxu0
        %v818 = vadd.f32 %v617, %v817
        %v819 = vpop.f32.mrb[0].mxu0
        %820 = vdwg.mxu0
        %821 = vmatprep.subr.mxu0 0.0
        %v822 = vand.u32 %v301, 4294901760
        %v823 = vsub.f32 %v301, %v822
        %824 = vmatpush1.msra.mxu0 %v823
        %825 = vmatprep.subr.mxu0 0.0
        %v826 = vand.u32 %v302, 4294901760
        %v827 = vsub.f32 %v302, %v826
        %828 = vmatpush1.msra.mxu0 %v827
        %829 = vmatprep.subr.mxu0 0.0
        %v830 = vand.u32 %v303, 4294901760
        %v831 = vsub.f32 %v303, %v830
        %832 = vmatpush1.msra.mxu0 %v831
        %833 = vmatprep.subr.mxu0 0.0
        %v834 = vand.u32 %v304, 4294901760
        %v835 = vsub.f32 %v304, %v834
        %836 = vmatpush1.msra.mxu0 %v835
        %837 = vmatprep.subr.mxu0 0.0
        %v838 = vand.u32 %v305, 4294901760
        %v839 = vsub.f32 %v305, %v838
        %840 = vmatpush1.msra.mxu0 %v839
        %841 = vmatprep.subr.mxu0 0.0
        %v842 = vand.u32 %v306, 4294901760
        %v843 = vsub.f32 %v306, %v842
        %844 = vmatpush1.msra.mxu0 %v843
        %845 = vmatprep.subr.mxu0 0.0
        %v846 = vand.u32 %v307, 4294901760
        %v847 = vsub.f32 %v307, %v846
        %848 = vmatpush1.msra.mxu0 %v847
        %849 = vmatprep.subr.mxu0 0.0
        %v850 = vand.u32 %v308, 4294901760
        %v851 = vsub.f32 %v308, %v850
        %852 = vmatpush1.msra.mxu0 %v851
        %853 = vmatprep.subr.mxu0 0.0
        %854 = vmatpush1.msra.mxu0 0.0
        %855 = vmatprep.subr.mxu0 0.0
        %856 = vmatpush1.msra.mxu0 0.0
        %857 = vmatprep.subr.mxu0 0.0
        %858 = vmatpush1.msra.mxu0 0.0
        %859 = vmatprep.subr.mxu0 0.0
        %860 = vmatpush1.msra.mxu0 0.0
        %861 = vmatprep.subr.mxu0 0.0
        %862 = vmatpush1.msra.mxu0 0.0
        %863 = vmatprep.subr.mxu0 0.0
        %864 = vmatpush1.msra.mxu0 0.0
        %865 = vmatprep.subr.mxu0 0.0
        %866 = vmatpush1.msra.mxu0 0.0
        %867 = vmatprep.subr.mxu0 0.0
        %868 = vmatpush1.msra.mxu0 0.0
        %869 = vmatprep.subr.mxu0 0.0
        %870 = vmatpush1.msra.mxu0 0.0
        %871 = vmatprep.subr.mxu0 0.0
        %872 = vmatpush1.msra.mxu0 0.0
        %873 = vmatprep.subr.mxu0 0.0
        %874 = vmatpush1.msra.mxu0 0.0
        %875 = vmatprep.subr.mxu0 0.0
        %876 = vmatpush1.msra.mxu0 0.0
        %877 = vmatprep.subr.mxu0 0.0
        %878 = vmatpush1.msra.mxu0 0.0
        %879 = vmatprep.subr.mxu0 0.0
        %880 = vmatpush1.msra.mxu0 0.0
        %881 = vmatprep.subr.mxu0 0.0
        %882 = vmatpush1.msra.mxu0 0.0
        %883 = vmatprep.subr.mxu0 0.0
        %884 = vmatpush1.msra.mxu0 0.0
        %885 = vmatprep.subr.mxu0 0.0
        %886 = vmatpush1.msra.mxu0 0.0
        %887 = vmatprep.subr.mxu0 0.0
        %888 = vmatpush1.msra.mxu0 0.0
        %889 = vmatprep.subr.mxu0 0.0
        %890 = vmatpush1.msra.mxu0 0.0
        %891 = vmatprep.subr.mxu0 0.0
        %892 = vmatpush1.msra.mxu0 0.0
        %893 = vmatprep.subr.mxu0 0.0
        %894 = vmatpush1.msra.mxu0 0.0
        %895 = vmatprep.subr.mxu0 0.0
        %896 = vmatpush1.msra.mxu0 0.0
        %897 = vmatprep.subr.mxu0 0.0
        %898 = vmatpush1.msra.mxu0 0.0
        %899 = vmatprep.subr.mxu0 0.0
        %900 = vmatpush1.msra.mxu0 0.0
        %901 = vmatprep.mubr.f32.mxu0 0.0
        %v902 = vand.u32 %v340, 4294901760
        %v903 = vsub.f32 %v340, %v902
        %904 = vmatmul.mubr.f32.gmra.mrb[0].mxu0 %v903
        %v905 = vpop.f32.mrb[0].mxu0
        %v906 = vadd.f32 %v728, %v905
        %v907 = vpop.f32.mrb[0].mxu0
        %908 = vmatprep.mubr.f32.mxu0 0.0
        %v909 = vand.u32 %v343, 4294901760
        %v910 = vsub.f32 %v343, %v909
        %911 = vmatmul.mubr.f32.gmra.mrb[0].mxu0 %v910
        %v912 = vpop.f32.mrb[0].mxu0
        %v913 = vadd.f32 %v734, %v912
        %v914 = vpop.f32.mrb[0].mxu0
        %915 = vmatprep.mubr.f32.mxu0 0.0
        %v916 = vand.u32 %v346, 4294901760
        %v917 = vsub.f32 %v346, %v916
        %918 = vmatmul.mubr.f32.gmra.mrb[0].mxu0 %v917
        %v919 = vpop.f32.mrb[0].mxu0
        %v920 = vadd.f32 %v740, %v919
        %v921 = vpop.f32.mrb[0].mxu0
        %922 = vmatprep.mubr.f32.mxu0 0.0
        %v923 = vand.u32 %v349, 4294901760
        %v924 = vsub.f32 %v349, %v923
        %925 = vmatmul.mubr.f32.gmra.mrb[0].mxu0 %v924
        %v926 = vpop.f32.mrb[0].mxu0
        %v927 = vadd.f32 %v746, %v926
        %v928 = vpop.f32.mrb[0].mxu0
        %929 = vmatprep.mubr.f32.mxu0 0.0
        %v930 = vand.u32 %v352, 4294901760
        %v931 = vsub.f32 %v352, %v930
        %932 = vmatmul.mubr.f32.gmra.mrb[0].mxu0 %v931
        %v933 = vpop.f32.mrb[0].mxu0
        %v934 = vadd.f32 %v752, %v933
        %v935 = vpop.f32.mrb[0].mxu0
        %936 = vmatprep.mubr.f32.mxu0 0.0
        %v937 = vand.u32 %v355, 4294901760
        %v938 = vsub.f32 %v355, %v937
        %939 = vmatmul.mubr.f32.gmra.mrb[0].mxu0 %v938
        %v940 = vpop.f32.mrb[0].mxu0
        %v941 = vadd.f32 %v758, %v940
        %v942 = vpop.f32.mrb[0].mxu0
        %943 = vmatprep.mubr.f32.mxu0 0.0
        %v944 = vand.u32 %v358, 4294901760
        %v945 = vsub.f32 %v358, %v944
        %946 = vmatmul.mubr.f32.gmra.mrb[0].mxu0 %v945
        %v947 = vpop.f32.mrb[0].mxu0
        %v948 = vadd.f32 %v764, %v947
        %v949 = vpop.f32.mrb[0].mxu0
        %950 = vmatprep.mubr.f32.mxu0 0.0
        %v951 = vand.u32 %v361, 4294901760
        %v952 = vsub.f32 %v361, %v951
        %953 = vmatmul.mubr.f32.gmra.mrb[0].mxu0 %v952
        %v954 = vpop.f32.mrb[0].mxu0
        %v955 = vadd.f32 %v770, %v954
        %v956 = vpop.f32.mrb[0].mxu0
        %957 = vmatprep.mubr.f32.mxu0 0.0
        %v958 = vand.u32 %v364, 4294901760
        %v959 = vsub.f32 %v364, %v958
        %960 = vmatmul.mubr.f32.gmra.mrb[0].mxu0 %v959
        %v961 = vpop.f32.mrb[0].mxu0
        %v962 = vadd.f32 %v776, %v961
        %v963 = vpop.f32.mrb[0].mxu0
        %964 = vmatprep.mubr.f32.mxu0 0.0
        %v965 = vand.u32 %v367, 4294901760
        %v966 = vsub.f32 %v367, %v965
        %967 = vmatmul.mubr.f32.gmra.mrb[0].mxu0 %v966
        %v968 = vpop.f32.mrb[0].mxu0
        %v969 = vadd.f32 %v782, %v968
        %v970 = vpop.f32.mrb[0].mxu0
        %971 = vmatprep.mubr.f32.mxu0 0.0
        %v972 = vand.u32 %v370, 4294901760
        %v973 = vsub.f32 %v370, %v972
        %974 = vmatmul.mubr.f32.gmra.mrb[0].mxu0 %v973
        %v975 = vpop.f32.mrb[0].mxu0
        %v976 = vadd.f32 %v788, %v975
        %v977 = vpop.f32.mrb[0].mxu0
        %978 = vmatprep.mubr.f32.mxu0 0.0
        %v979 = vand.u32 %v373, 4294901760
        %v980 = vsub.f32 %v373, %v979
        %981 = vmatmul.mubr.f32.gmra.mrb[0].mxu0 %v980
        %v982 = vpop.f32.mrb[0].mxu0
        %v983 = vadd.f32 %v794, %v982
        %v984 = vpop.f32.mrb[0].mxu0
        %985 = vmatprep.mubr.f32.mxu0 0.0
        %v986 = vand.u32 %v376, 4294901760
        %v987 = vsub.f32 %v376, %v986
        %988 = vmatmul.mubr.f32.gmra.mrb[0].mxu0 %v987
        %v989 = vpop.f32.mrb[0].mxu0
        %v990 = vadd.f32 %v800, %v989
        %v991 = vpop.f32.mrb[0].mxu0
        %992 = vmatprep.mubr.f32.mxu0 0.0
        %v993 = vand.u32 %v379, 4294901760
        %v994 = vsub.f32 %v379, %v993
        %995 = vmatmul.mubr.f32.gmra.mrb[0].mxu0 %v994
        %v996 = vpop.f32.mrb[0].mxu0
        %v997 = vadd.f32 %v806, %v996
        %v998 = vpop.f32.mrb[0].mxu0
        %999 = vmatprep.mubr.f32.mxu0 0.0
        %v1000 = vand.u32 %v382, 4294901760
        %v1001 = vsub.f32 %v382, %v1000
        %1002 = vmatmul.mubr.f32.gmra.mrb[0].mxu0 %v1001
        %v1003 = vpop.f32.mrb[0].mxu0
        %v1004 = vadd.f32 %v812, %v1003
        %v1005 = vpop.f32.mrb[0].mxu0
        %1006 = vmatprep.mubr.f32.mxu0 0.0
        %v1007 = vand.u32 %v385, 4294901760
        %v1008 = vsub.f32 %v385, %v1007
        %1009 = vmatmul.mubr.f32.gmra.mrb[0].mxu0 %v1008
        %v1010 = vpop.f32.mrb[0].mxu0
        %v1011 = vadd.f32 %v818, %v1010
        %v1012 = vpop.f32.mrb[0].mxu0
        %1013 = vdwg.mxu0
        %1014 = vmatprep.subr.mxu0 0.0
        %v1015 = vand.u32 %v301, 4294901760
        %1016 = vmatpush1.msra.mxu0 %v1015
        %1017 = vmatprep.subr.mxu0 0.0
        %v1018 = vand.u32 %v302, 4294901760
        %1019 = vmatpush1.msra.mxu0 %v1018
        %1020 = vmatprep.subr.mxu0 0.0
        %v1021 = vand.u32 %v303, 4294901760
        %1022 = vmatpush1.msra.mxu0 %v1021
        %1023 = vmatprep.subr.mxu0 0.0
        %v1024 = vand.u32 %v304, 4294901760
        %1025 = vmatpush1.msra.mxu0 %v1024
        %1026 = vmatprep.subr.mxu0 0.0
        %v1027 = vand.u32 %v305, 4294901760
        %1028 = vmatpush1.msra.mxu0 %v1027
        %1029 = vmatprep.subr.mxu0 0.0
        %v1030 = vand.u32 %v306, 4294901760
        %1031 = vmatpush1.msra.mxu0 %v1030
        %1032 = vmatprep.subr.mxu0 0.0
        %v1033 = vand.u32 %v307, 4294901760
        %1034 = vmatpush1.msra.mxu0 %v1033
        %1035 = vmatprep.subr.mxu0 0.0
        %v1036 = vand.u32 %v308, 4294901760
        %1037 = vmatpush1.msra.mxu0 %v1036
        %1038 = vmatprep.subr.mxu0 0.0
        %1039 = vmatpush1.msra.mxu0 0.0
        %1040 = vmatprep.subr.mxu0 0.0
        %1041 = vmatpush1.msra.mxu0 0.0
        %1042 = vmatprep.subr.mxu0 0.0
        %1043 = vmatpush1.msra.mxu0 0.0
        %1044 = vmatprep.subr.mxu0 0.0
        %1045 = vmatpush1.msra.mxu0 0.0
        %1046 = vmatprep.subr.mxu0 0.0
        %1047 = vmatpush1.msra.mxu0 0.0
        %1048 = vmatprep.subr.mxu0 0.0
        %1049 = vmatpush1.msra.mxu0 0.0
        %1050 = vmatprep.subr.mxu0 0.0
        %1051 = vmatpush1.msra.mxu0 0.0
        %1052 = vmatprep.subr.mxu0 0.0
        %1053 = vmatpush1.msra.mxu0 0.0
        %1054 = vmatprep.subr.mxu0 0.0
        %1055 = vmatpush1.msra.mxu0 0.0
        %1056 = vmatprep.subr.mxu0 0.0
        %1057 = vmatpush1.msra.mxu0 0.0
        %1058 = vmatprep.subr.mxu0 0.0
        %1059 = vmatpush1.msra.mxu0 0.0
        %1060 = vmatprep.subr.mxu0 0.0
        %1061 = vmatpush1.msra.mxu0 0.0
        %1062 = vmatprep.subr.mxu0 0.0
        %1063 = vmatpush1.msra.mxu0 0.0
        %1064 = vmatprep.subr.mxu0 0.0
        %1065 = vmatpush1.msra.mxu0 0.0
        %1066 = vmatprep.subr.mxu0 0.0
        %1067 = vmatpush1.msra.mxu0 0.0
        %1068 = vmatprep.subr.mxu0 0.0
        %1069 = vmatpush1.msra.mxu0 0.0
        %1070 = vmatprep.subr.mxu0 0.0
        %1071 = vmatpush1.msra.mxu0 0.0
        %1072 = vmatprep.subr.mxu0 0.0
        %1073 = vmatpush1.msra.mxu0 0.0
        %1074 = vmatprep.subr.mxu0 0.0
        %1075 = vmatpush1.msra.mxu0 0.0
        %1076 = vmatprep.subr.mxu0 0.0
        %1077 = vmatpush1.msra.mxu0 0.0
        %1078 = vmatprep.subr.mxu0 0.0
        %1079 = vmatpush1.msra.mxu0 0.0
        %1080 = vmatprep.subr.mxu0 0.0
        %1081 = vmatpush1.msra.mxu0 0.0
        %1082 = vmatprep.subr.mxu0 0.0
        %1083 = vmatpush1.msra.mxu0 0.0
        %1084 = vmatprep.subr.mxu0 0.0
        %1085 = vmatpush1.msra.mxu0 0.0
        %1086 = vmatprep.mubr.f32.mxu0 0.0
        %v1087 = vand.u32 %v340, 4294901760
        %v1088 = vsub.f32 %v340, %v1087
        %v1089 = vand.u32 %v1088, 4294901760
        %1090 = vmatmul.mubr.f32.gmra.mrb[0].mxu0 %v1089
        %v1091 = vpop.f32.mrb[0].mxu0
        %v1092 = vadd.f32 %v906, %v1091
        %v1093 = vpop.f32.mrb[0].mxu0
        %1094 = vmatprep.mubr.f32.mxu0 0.0
        %v1095 = vand.u32 %v343, 4294901760
        %v1096 = vsub.f32 %v343, %v1095
        %v1097 = vand.u32 %v1096, 4294901760
        %1098 = vmatmul.mubr.f32.gmra.mrb[0].mxu0 %v1097
        %v1099 = vpop.f32.mrb[0].mxu0
        %v1100 = vadd.f32 %v913, %v1099
        %v1101 = vpop.f32.mrb[0].mxu0
        %1102 = vmatprep.mubr.f32.mxu0 0.0
        %v1103 = vand.u32 %v346, 4294901760
        %v1104 = vsub.f32 %v346, %v1103
        %v1105 = vand.u32 %v1104, 4294901760
        %1106 = vmatmul.mubr.f32.gmra.mrb[0].mxu0 %v1105
        %v1107 = vpop.f32.mrb[0].mxu0
        %v1108 = vadd.f32 %v920, %v1107
        %v1109 = vpop.f32.mrb[0].mxu0
        %1110 = vmatprep.mubr.f32.mxu0 0.0
        %v1111 = vand.u32 %v349, 4294901760
        %v1112 = vsub.f32 %v349, %v1111
        %v1113 = vand.u32 %v1112, 4294901760
        %1114 = vmatmul.mubr.f32.gmra.mrb[0].mxu0 %v1113
        %v1115 = vpop.f32.mrb[0].mxu0
        %v1116 = vadd.f32 %v927, %v1115
        %v1117 = vpop.f32.mrb[0].mxu0
        %1118 = vmatprep.mubr.f32.mxu0 0.0
        %v1119 = vand.u32 %v352, 4294901760
        %v1120 = vsub.f32 %v352, %v1119
        %v1121 = vand.u32 %v1120, 4294901760
        %1122 = vmatmul.mubr.f32.gmra.mrb[0].mxu0 %v1121
        %v1123 = vpop.f32.mrb[0].mxu0
        %v1124 = vadd.f32 %v934, %v1123
        %v1125 = vpop.f32.mrb[0].mxu0
        %1126 = vmatprep.mubr.f32.mxu0 0.0
        %v1127 = vand.u32 %v355, 4294901760
        %v1128 = vsub.f32 %v355, %v1127
        %v1129 = vand.u32 %v1128, 4294901760
        %1130 = vmatmul.mubr.f32.gmra.mrb[0].mxu0 %v1129
        %v1131 = vpop.f32.mrb[0].mxu0
        %v1132 = vadd.f32 %v941, %v1131
        %v1133 = vpop.f32.mrb[0].mxu0
        %1134 = vmatprep.mubr.f32.mxu0 0.0
        %v1135 = vand.u32 %v358, 4294901760
        %v1136 = vsub.f32 %v358, %v1135
        %v1137 = vand.u32 %v1136, 4294901760
        %1138 = vmatmul.mubr.f32.gmra.mrb[0].mxu0 %v1137
        %v1139 = vpop.f32.mrb[0].mxu0
        %v1140 = vadd.f32 %v948, %v1139
        %v1141 = vpop.f32.mrb[0].mxu0
        %1142 = vmatprep.mubr.f32.mxu0 0.0
        %v1143 = vand.u32 %v361, 4294901760
        %v1144 = vsub.f32 %v361, %v1143
        %v1145 = vand.u32 %v1144, 4294901760
        %1146 = vmatmul.mubr.f32.gmra.mrb[0].mxu0 %v1145
        %v1147 = vpop.f32.mrb[0].mxu0
        %v1148 = vadd.f32 %v955, %v1147
        %v1149 = vpop.f32.mrb[0].mxu0
        %1150 = vmatprep.mubr.f32.mxu0 0.0
        %v1151 = vand.u32 %v364, 4294901760
        %v1152 = vsub.f32 %v364, %v1151
        %v1153 = vand.u32 %v1152, 4294901760
        %1154 = vmatmul.mubr.f32.gmra.mrb[0].mxu0 %v1153
        %v1155 = vpop.f32.mrb[0].mxu0
        %v1156 = vadd.f32 %v962, %v1155
        %v1157 = vpop.f32.mrb[0].mxu0
        %1158 = vmatprep.mubr.f32.mxu0 0.0
        %v1159 = vand.u32 %v367, 4294901760
        %v1160 = vsub.f32 %v367, %v1159
        %v1161 = vand.u32 %v1160, 4294901760
        %1162 = vmatmul.mubr.f32.gmra.mrb[0].mxu0 %v1161
        %v1163 = vpop.f32.mrb[0].mxu0
        %v1164 = vadd.f32 %v969, %v1163
        %v1165 = vpop.f32.mrb[0].mxu0
        %1166 = vmatprep.mubr.f32.mxu0 0.0
        %v1167 = vand.u32 %v370, 4294901760
        %v1168 = vsub.f32 %v370, %v1167
        %v1169 = vand.u32 %v1168, 4294901760
        %1170 = vmatmul.mubr.f32.gmra.mrb[0].mxu0 %v1169
        %v1171 = vpop.f32.mrb[0].mxu0
        %v1172 = vadd.f32 %v976, %v1171
        %v1173 = vpop.f32.mrb[0].mxu0
        %1174 = vmatprep.mubr.f32.mxu0 0.0
        %v1175 = vand.u32 %v373, 4294901760
        %v1176 = vsub.f32 %v373, %v1175
        %v1177 = vand.u32 %v1176, 4294901760
        %1178 = vmatmul.mubr.f32.gmra.mrb[0].mxu0 %v1177
        %v1179 = vpop.f32.mrb[0].mxu0
        %v1180 = vadd.f32 %v983, %v1179
        %v1181 = vpop.f32.mrb[0].mxu0
        %1182 = vmatprep.mubr.f32.mxu0 0.0
        %v1183 = vand.u32 %v376, 4294901760
        %v1184 = vsub.f32 %v376, %v1183
        %v1185 = vand.u32 %v1184, 4294901760
        %1186 = vmatmul.mubr.f32.gmra.mrb[0].mxu0 %v1185
        %v1187 = vpop.f32.mrb[0].mxu0
        %v1188 = vadd.f32 %v990, %v1187
        %v1189 = vpop.f32.mrb[0].mxu0
        %1190 = vmatprep.mubr.f32.mxu0 0.0
        %v1191 = vand.u32 %v379, 4294901760
        %v1192 = vsub.f32 %v379, %v1191
        %v1193 = vand.u32 %v1192, 4294901760
        %1194 = vmatmul.mubr.f32.gmra.mrb[0].mxu0 %v1193
        %v1195 = vpop.f32.mrb[0].mxu0
        %v1196 = vadd.f32 %v997, %v1195
        %v1197 = vpop.f32.mrb[0].mxu0
        %1198 = vmatprep.mubr.f32.mxu0 0.0
        %v1199 = vand.u32 %v382, 4294901760
        %v1200 = vsub.f32 %v382, %v1199
        %v1201 = vand.u32 %v1200, 4294901760
        %1202 = vmatmul.mubr.f32.gmra.mrb[0].mxu0 %v1201
        %v1203 = vpop.f32.mrb[0].mxu0
        %v1204 = vadd.f32 %v1004, %v1203
        %v1205 = vpop.f32.mrb[0].mxu0
        %1206 = vmatprep.mubr.f32.mxu0 0.0
        %v1207 = vand.u32 %v385, 4294901760
        %v1208 = vsub.f32 %v385, %v1207
        %v1209 = vand.u32 %v1208, 4294901760
        %1210 = vmatmul.mubr.f32.gmra.mrb[0].mxu0 %v1209
        %v1211 = vpop.f32.mrb[0].mxu0
        %v1212 = vadd.f32 %v1011, %v1211
        %v1213 = vpop.f32.mrb[0].mxu0
        %1214 = vdwg.mxu0
        %1215 = vmatprep.subr.mxu0 0.0
        %v1216 = vand.u32 %v301, 4294901760
        %v1217 = vsub.f32 %v301, %v1216
        %v1218 = vand.u32 %v1217, 4294901760
        %1219 = vmatpush1.msra.mxu0 %v1218
        %1220 = vmatprep.subr.mxu0 0.0
        %v1221 = vand.u32 %v302, 4294901760
        %v1222 = vsub.f32 %v302, %v1221
        %v1223 = vand.u32 %v1222, 4294901760
        %1224 = vmatpush1.msra.mxu0 %v1223
        %1225 = vmatprep.subr.mxu0 0.0
        %v1226 = vand.u32 %v303, 4294901760
        %v1227 = vsub.f32 %v303, %v1226
        %v1228 = vand.u32 %v1227, 4294901760
        %1229 = vmatpush1.msra.mxu0 %v1228
        %1230 = vmatprep.subr.mxu0 0.0
        %v1231 = vand.u32 %v304, 4294901760
        %v1232 = vsub.f32 %v304, %v1231
        %v1233 = vand.u32 %v1232, 4294901760
        %1234 = vmatpush1.msra.mxu0 %v1233
        %1235 = vmatprep.subr.mxu0 0.0
        %v1236 = vand.u32 %v305, 4294901760
        %v1237 = vsub.f32 %v305, %v1236
        %v1238 = vand.u32 %v1237, 4294901760
        %1239 = vmatpush1.msra.mxu0 %v1238
        %1240 = vmatprep.subr.mxu0 0.0
        %v1241 = vand.u32 %v306, 4294901760
        %v1242 = vsub.f32 %v306, %v1241
        %v1243 = vand.u32 %v1242, 4294901760
        %1244 = vmatpush1.msra.mxu0 %v1243
        %1245 = vmatprep.subr.mxu0 0.0
        %v1246 = vand.u32 %v307, 4294901760
        %v1247 = vsub.f32 %v307, %v1246
        %v1248 = vand.u32 %v1247, 4294901760
        %1249 = vmatpush1.msra.mxu0 %v1248
        %1250 = vmatprep.subr.mxu0 0.0
        %v1251 = vand.u32 %v308, 4294901760
        %v1252 = vsub.f32 %v308, %v1251
        %v1253 = vand.u32 %v1252, 4294901760
        %1254 = vmatpush1.msra.mxu0 %v1253
        %1255 = vmatprep.subr.mxu0 0.0
        %1256 = vmatpush1.msra.mxu0 0.0
        %1257 = vmatprep.subr.mxu0 0.0
        %1258 = vmatpush1.msra.mxu0 0.0
        %1259 = vmatprep.subr.mxu0 0.0
        %1260 = vmatpush1.msra.mxu0 0.0
        %1261 = vmatprep.subr.mxu0 0.0
        %1262 = vmatpush1.msra.mxu0 0.0
        %1263 = vmatprep.subr.mxu0 0.0
        %1264 = vmatpush1.msra.mxu0 0.0
        %1265 = vmatprep.subr.mxu0 0.0
        %1266 = vmatpush1.msra.mxu0 0.0
        %1267 = vmatprep.subr.mxu0 0.0
        %1268 = vmatpush1.msra.mxu0 0.0
        %1269 = vmatprep.subr.mxu0 0.0
        %1270 = vmatpush1.msra.mxu0 0.0
        %1271 = vmatprep.subr.mxu0 0.0
        %1272 = vmatpush1.msra.mxu0 0.0
        %1273 = vmatprep.subr.mxu0 0.0
        %1274 = vmatpush1.msra.mxu0 0.0
        %1275 = vmatprep.subr.mxu0 0.0
        %1276 = vmatpush1.msra.mxu0 0.0
        %1277 = vmatprep.subr.mxu0 0.0
        %1278 = vmatpush1.msra.mxu0 0.0
        %1279 = vmatprep.subr.mxu0 0.0
        %1280 = vmatpush1.msra.mxu0 0.0
        %1281 = vmatprep.subr.mxu0 0.0
        %1282 = vmatpush1.msra.mxu0 0.0
        %1283 = vmatprep.subr.mxu0 0.0
        %1284 = vmatpush1.msra.mxu0 0.0
        %1285 = vmatprep.subr.mxu0 0.0
        %1286 = vmatpush1.msra.mxu0 0.0
        %1287 = vmatprep.subr.mxu0 0.0
        %1288 = vmatpush1.msra.mxu0 0.0
        %1289 = vmatprep.subr.mxu0 0.0
        %1290 = vmatpush1.msra.mxu0 0.0
        %1291 = vmatprep.subr.mxu0 0.0
        %1292 = vmatpush1.msra.mxu0 0.0
        %1293 = vmatprep.subr.mxu0 0.0
        %1294 = vmatpush1.msra.mxu0 0.0
        %1295 = vmatprep.subr.mxu0 0.0
        %1296 = vmatpush1.msra.mxu0 0.0
        %1297 = vmatprep.subr.mxu0 0.0
        %1298 = vmatpush1.msra.mxu0 0.0
        %1299 = vmatprep.subr.mxu0 0.0
        %1300 = vmatpush1.msra.mxu0 0.0
        %1301 = vmatprep.subr.mxu0 0.0
        %1302 = vmatpush1.msra.mxu0 0.0
        %1303 = vmatprep.mubr.f32.mxu0 0.0
        %v1304 = vand.u32 %v340, 4294901760
        %1305 = vmatmul.mubr.f32.gmra.mrb[0].mxu0 %v1304
        %v1306 = vpop.f32.mrb[0].mxu0
        %v1307 = vadd.f32 %v1092, %v1306
        %v1308 = vpop.f32.mrb[0].mxu0
        %1309 = vmatprep.mubr.f32.mxu0 0.0
        %v1310 = vand.u32 %v343, 4294901760
        %1311 = vmatmul.mubr.f32.gmra.mrb[0].mxu0 %v1310
        %v1312 = vpop.f32.mrb[0].mxu0
        %v1313 = vadd.f32 %v1100, %v1312
        %v1314 = vpop.f32.mrb[0].mxu0
        %1315 = vmatprep.mubr.f32.mxu0 0.0
        %v1316 = vand.u32 %v346, 4294901760
        %1317 = vmatmul.mubr.f32.gmra.mrb[0].mxu0 %v1316
        %v1318 = vpop.f32.mrb[0].mxu0
        %v1319 = vadd.f32 %v1108, %v1318
        %v1320 = vpop.f32.mrb[0].mxu0
        %1321 = vmatprep.mubr.f32.mxu0 0.0
        %v1322 = vand.u32 %v349, 4294901760
        %1323 = vmatmul.mubr.f32.gmra.mrb[0].mxu0 %v1322
        %v1324 = vpop.f32.mrb[0].mxu0
        %v1325 = vadd.f32 %v1116, %v1324
        %v1326 = vpop.f32.mrb[0].mxu0
        %1327 = vmatprep.mubr.f32.mxu0 0.0
        %v1328 = vand.u32 %v352, 4294901760
        %1329 = vmatmul.mubr.f32.gmra.mrb[0].mxu0 %v1328
        %v1330 = vpop.f32.mrb[0].mxu0
        %v1331 = vadd.f32 %v1124, %v1330
        %v1332 = vpop.f32.mrb[0].mxu0
        %1333 = vmatprep.mubr.f32.mxu0 0.0
        %v1334 = vand.u32 %v355, 4294901760
        %1335 = vmatmul.mubr.f32.gmra.mrb[0].mxu0 %v1334
        %v1336 = vpop.f32.mrb[0].mxu0
        %v1337 = vadd.f32 %v1132, %v1336
        %v1338 = vpop.f32.mrb[0].mxu0
        %1339 = vmatprep.mubr.f32.mxu0 0.0
        %v1340 = vand.u32 %v358, 4294901760
        %1341 = vmatmul.mubr.f32.gmra.mrb[0].mxu0 %v1340
        %v1342 = vpop.f32.mrb[0].mxu0
        %v1343 = vadd.f32 %v1140, %v1342
        %v1344 = vpop.f32.mrb[0].mxu0
        %1345 = vmatprep.mubr.f32.mxu0 0.0
        %v1346 = vand.u32 %v361, 4294901760
        %1347 = vmatmul.mubr.f32.gmra.mrb[0].mxu0 %v1346
        %v1348 = vpop.f32.mrb[0].mxu0
        %v1349 = vadd.f32 %v1148, %v1348
        %v1350 = vpop.f32.mrb[0].mxu0
        %1351 = vmatprep.mubr.f32.mxu0 0.0
        %v1352 = vand.u32 %v364, 4294901760
        %1353 = vmatmul.mubr.f32.gmra.mrb[0].mxu0 %v1352
        %v1354 = vpop.f32.mrb[0].mxu0
        %v1355 = vadd.f32 %v1156, %v1354
        %v1356 = vpop.f32.mrb[0].mxu0
        %1357 = vmatprep.mubr.f32.mxu0 0.0
        %v1358 = vand.u32 %v367, 4294901760
        %1359 = vmatmul.mubr.f32.gmra.mrb[0].mxu0 %v1358
        %v1360 = vpop.f32.mrb[0].mxu0
        %v1361 = vadd.f32 %v1164, %v1360
        %v1362 = vpop.f32.mrb[0].mxu0
        %1363 = vmatprep.mubr.f32.mxu0 0.0
        %v1364 = vand.u32 %v370, 4294901760
        %1365 = vmatmul.mubr.f32.gmra.mrb[0].mxu0 %v1364
        %v1366 = vpop.f32.mrb[0].mxu0
        %v1367 = vadd.f32 %v1172, %v1366
        %v1368 = vpop.f32.mrb[0].mxu0
        %1369 = vmatprep.mubr.f32.mxu0 0.0
        %v1370 = vand.u32 %v373, 4294901760
        %1371 = vmatmul.mubr.f32.gmra.mrb[0].mxu0 %v1370
        %v1372 = vpop.f32.mrb[0].mxu0
        %v1373 = vadd.f32 %v1180, %v1372
        %v1374 = vpop.f32.mrb[0].mxu0
        %1375 = vmatprep.mubr.f32.mxu0 0.0
        %v1376 = vand.u32 %v376, 4294901760
        %1377 = vmatmul.mubr.f32.gmra.mrb[0].mxu0 %v1376
        %v1378 = vpop.f32.mrb[0].mxu0
        %v1379 = vadd.f32 %v1188, %v1378
        %v1380 = vpop.f32.mrb[0].mxu0
        %1381 = vmatprep.mubr.f32.mxu0 0.0
        %v1382 = vand.u32 %v379, 4294901760
        %1383 = vmatmul.mubr.f32.gmra.mrb[0].mxu0 %v1382
        %v1384 = vpop.f32.mrb[0].mxu0
        %v1385 = vadd.f32 %v1196, %v1384
        %v1386 = vpop.f32.mrb[0].mxu0
        %1387 = vmatprep.mubr.f32.mxu0 0.0
        %v1388 = vand.u32 %v382, 4294901760
        %1389 = vmatmul.mubr.f32.gmra.mrb[0].mxu0 %v1388
        %v1390 = vpop.f32.mrb[0].mxu0
        %v1391 = vadd.f32 %v1204, %v1390
        %v1392 = vpop.f32.mrb[0].mxu0
        %1393 = vmatprep.mubr.f32.mxu0 0.0
        %v1394 = vand.u32 %v385, 4294901760
        %1395 = vmatmul.mubr.f32.gmra.mrb[0].mxu0 %v1394
        %v1396 = vpop.f32.mrb[0].mxu0
        %v1397 = vadd.f32 %v1212, %v1396
        %v1398 = vpop.f32.mrb[0].mxu0
        %1399 = vdwg.mxu0
        %1400 = vmatprep.subr.mxu0 0.0
        %v1401 = vand.u32 %v301, 4294901760
        %1402 = vmatpush1.msra.mxu0 %v1401
        %1403 = vmatprep.subr.mxu0 0.0
        %v1404 = vand.u32 %v302, 4294901760
        %1405 = vmatpush1.msra.mxu0 %v1404
        %1406 = vmatprep.subr.mxu0 0.0
        %v1407 = vand.u32 %v303, 4294901760
        %1408 = vmatpush1.msra.mxu0 %v1407
        %1409 = vmatprep.subr.mxu0 0.0
        %v1410 = vand.u32 %v304, 4294901760
        %1411 = vmatpush1.msra.mxu0 %v1410
        %1412 = vmatprep.subr.mxu0 0.0
        %v1413 = vand.u32 %v305, 4294901760
        %1414 = vmatpush1.msra.mxu0 %v1413
        %1415 = vmatprep.subr.mxu0 0.0
        %v1416 = vand.u32 %v306, 4294901760
        %1417 = vmatpush1.msra.mxu0 %v1416
        %1418 = vmatprep.subr.mxu0 0.0
        %v1419 = vand.u32 %v307, 4294901760
        %1420 = vmatpush1.msra.mxu0 %v1419
        %1421 = vmatprep.subr.mxu0 0.0
        %v1422 = vand.u32 %v308, 4294901760
        %1423 = vmatpush1.msra.mxu0 %v1422
        %1424 = vmatprep.subr.mxu0 0.0
        %1425 = vmatpush1.msra.mxu0 0.0
        %1426 = vmatprep.subr.mxu0 0.0
        %1427 = vmatpush1.msra.mxu0 0.0
        %1428 = vmatprep.subr.mxu0 0.0
        %1429 = vmatpush1.msra.mxu0 0.0
        %1430 = vmatprep.subr.mxu0 0.0
        %1431 = vmatpush1.msra.mxu0 0.0
        %1432 = vmatprep.subr.mxu0 0.0
        %1433 = vmatpush1.msra.mxu0 0.0
        %1434 = vmatprep.subr.mxu0 0.0
        %1435 = vmatpush1.msra.mxu0 0.0
        %1436 = vmatprep.subr.mxu0 0.0
        %1437 = vmatpush1.msra.mxu0 0.0
        %1438 = vmatprep.subr.mxu0 0.0
        %1439 = vmatpush1.msra.mxu0 0.0
        %1440 = vmatprep.subr.mxu0 0.0
        %1441 = vmatpush1.msra.mxu0 0.0
        %1442 = vmatprep.subr.mxu0 0.0
        %1443 = vmatpush1.msra.mxu0 0.0
        %1444 = vmatprep.subr.mxu0 0.0
        %1445 = vmatpush1.msra.mxu0 0.0
        %1446 = vmatprep.subr.mxu0 0.0
        %1447 = vmatpush1.msra.mxu0 0.0
        %1448 = vmatprep.subr.mxu0 0.0
        %1449 = vmatpush1.msra.mxu0 0.0
        %1450 = vmatprep.subr.mxu0 0.0
        %1451 = vmatpush1.msra.mxu0 0.0
        %1452 = vmatprep.subr.mxu0 0.0
        %1453 = vmatpush1.msra.mxu0 0.0
        %1454 = vmatprep.subr.mxu0 0.0
        %1455 = vmatpush1.msra.mxu0 0.0
        %1456 = vmatprep.subr.mxu0 0.0
        %1457 = vmatpush1.msra.mxu0 0.0
        %1458 = vmatprep.subr.mxu0 0.0
        %1459 = vmatpush1.msra.mxu0 0.0
        %1460 = vmatprep.subr.mxu0 0.0
        %1461 = vmatpush1.msra.mxu0 0.0
        %1462 = vmatprep.subr.mxu0 0.0
        %1463 = vmatpush1.msra.mxu0 0.0
        %1464 = vmatprep.subr.mxu0 0.0
        %1465 = vmatpush1.msra.mxu0 0.0
        %1466 = vmatprep.subr.mxu0 0.0
        %1467 = vmatpush1.msra.mxu0 0.0
        %1468 = vmatprep.subr.mxu0 0.0
        %1469 = vmatpush1.msra.mxu0 0.0
        %1470 = vmatprep.subr.mxu0 0.0
        %1471 = vmatpush1.msra.mxu0 0.0
        %1472 = vmatprep.mubr.f32.mxu0 0.0
        %v1473 = vand.u32 %v340, 4294901760
        %1474 = vmatmul.mubr.f32.gmra.mrb[0].mxu0 %v1473
        %v1475 = vpop.f32.mrb[0].mxu0
        %v1476 = vadd.f32 %v1307, %v1475
        %v1477 = vpop.f32.mrb[0].mxu0
        %1478 = vmatprep.mubr.f32.mxu0 0.0
        %v1479 = vand.u32 %v343, 4294901760
        %1480 = vmatmul.mubr.f32.gmra.mrb[0].mxu0 %v1479
        %v1481 = vpop.f32.mrb[0].mxu0
        %v1482 = vadd.f32 %v1313, %v1481
        %v1483 = vpop.f32.mrb[0].mxu0
        %1484 = vmatprep.mubr.f32.mxu0 0.0
        %v1485 = vand.u32 %v346, 4294901760
        %1486 = vmatmul.mubr.f32.gmra.mrb[0].mxu0 %v1485
        %v1487 = vpop.f32.mrb[0].mxu0
        %v1488 = vadd.f32 %v1319, %v1487
        %v1489 = vpop.f32.mrb[0].mxu0
        %1490 = vmatprep.mubr.f32.mxu0 0.0
        %v1491 = vand.u32 %v349, 4294901760
        %1492 = vmatmul.mubr.f32.gmra.mrb[0].mxu0 %v1491
        %v1493 = vpop.f32.mrb[0].mxu0
        %v1494 = vadd.f32 %v1325, %v1493
        %v1495 = vpop.f32.mrb[0].mxu0
        %1496 = vmatprep.mubr.f32.mxu0 0.0
        %v1497 = vand.u32 %v352, 4294901760
        %1498 = vmatmul.mubr.f32.gmra.mrb[0].mxu0 %v1497
        %v1499 = vpop.f32.mrb[0].mxu0
        %v1500 = vadd.f32 %v1331, %v1499
        %v1501 = vpop.f32.mrb[0].mxu0
        %1502 = vmatprep.mubr.f32.mxu0 0.0
        %v1503 = vand.u32 %v355, 4294901760
        %1504 = vmatmul.mubr.f32.gmra.mrb[0].mxu0 %v1503
        %v1505 = vpop.f32.mrb[0].mxu0
        %v1506 = vadd.f32 %v1337, %v1505
        %v1507 = vpop.f32.mrb[0].mxu0
        %1508 = vmatprep.mubr.f32.mxu0 0.0
        %v1509 = vand.u32 %v358, 4294901760
        %1510 = vmatmul.mubr.f32.gmra.mrb[0].mxu0 %v1509
        %v1511 = vpop.f32.mrb[0].mxu0
        %v1512 = vadd.f32 %v1343, %v1511
        %v1513 = vpop.f32.mrb[0].mxu0
        %1514 = vmatprep.mubr.f32.mxu0 0.0
        %v1515 = vand.u32 %v361, 4294901760
        %1516 = vmatmul.mubr.f32.gmra.mrb[0].mxu0 %v1515
        %v1517 = vpop.f32.mrb[0].mxu0
        %v1518 = vadd.f32 %v1349, %v1517
        %v1519 = vpop.f32.mrb[0].mxu0
        %1520 = vmatprep.mubr.f32.mxu0 0.0
        %v1521 = vand.u32 %v364, 4294901760
        %1522 = vmatmul.mubr.f32.gmra.mrb[0].mxu0 %v1521
        %v1523 = vpop.f32.mrb[0].mxu0
        %v1524 = vadd.f32 %v1355, %v1523
        %v1525 = vpop.f32.mrb[0].mxu0
        %1526 = vmatprep.mubr.f32.mxu0 0.0
        %v1527 = vand.u32 %v367, 4294901760
        %1528 = vmatmul.mubr.f32.gmra.mrb[0].mxu0 %v1527
        %v1529 = vpop.f32.mrb[0].mxu0
        %v1530 = vadd.f32 %v1361, %v1529
        %v1531 = vpop.f32.mrb[0].mxu0
        %1532 = vmatprep.mubr.f32.mxu0 0.0
        %v1533 = vand.u32 %v370, 4294901760
        %1534 = vmatmul.mubr.f32.gmra.mrb[0].mxu0 %v1533
        %v1535 = vpop.f32.mrb[0].mxu0
        %v1536 = vadd.f32 %v1367, %v1535
        %v1537 = vpop.f32.mrb[0].mxu0
        %1538 = vmatprep.mubr.f32.mxu0 0.0
        %v1539 = vand.u32 %v373, 4294901760
        %1540 = vmatmul.mubr.f32.gmra.mrb[0].mxu0 %v1539
        %v1541 = vpop.f32.mrb[0].mxu0
        %v1542 = vadd.f32 %v1373, %v1541
        %v1543 = vpop.f32.mrb[0].mxu0
        %1544 = vmatprep.mubr.f32.mxu0 0.0
        %v1545 = vand.u32 %v376, 4294901760
        %1546 = vmatmul.mubr.f32.gmra.mrb[0].mxu0 %v1545
        %v1547 = vpop.f32.mrb[0].mxu0
        %v1548 = vadd.f32 %v1379, %v1547
        %v1549 = vpop.f32.mrb[0].mxu0
        %1550 = vmatprep.mubr.f32.mxu0 0.0
        %v1551 = vand.u32 %v379, 4294901760
        %1552 = vmatmul.mubr.f32.gmra.mrb[0].mxu0 %v1551
        %v1553 = vpop.f32.mrb[0].mxu0
        %v1554 = vadd.f32 %v1385, %v1553
        %v1555 = vpop.f32.mrb[0].mxu0
        %1556 = vmatprep.mubr.f32.mxu0 0.0
        %v1557 = vand.u32 %v382, 4294901760
        %1558 = vmatmul.mubr.f32.gmra.mrb[0].mxu0 %v1557
        %v1559 = vpop.f32.mrb[0].mxu0
        %v1560 = vadd.f32 %v1391, %v1559
        %v1561 = vpop.f32.mrb[0].mxu0
        %1562 = vmatprep.mubr.f32.mxu0 0.0
        %v1563 = vand.u32 %v385, 4294901760
        %1564 = vmatmul.mubr.f32.gmra.mrb[0].mxu0 %v1563
        %v1565 = vpop.f32.mrb[0].mxu0
        %v1566 = vadd.f32 %v1397, %v1565
        %v1567 = vpop.f32.mrb[0].mxu0
        %1568 = vdwg.mxu0
        %v1569 = vmul.f32 %v1476, 0.35355338
        %v1570 = vmul.f32 %v1482, 0.35355338
        %v1571 = vmul.f32 %v1488, 0.35355338
        %v1572 = vmul.f32 %v1494, 0.35355338
        %v1573 = vmul.f32 %v1500, 0.35355338
        %v1574 = vmul.f32 %v1506, 0.35355338
        %v1575 = vmul.f32 %v1512, 0.35355338
        %v1576 = vmul.f32 %v1518, 0.35355338
        %v1577 = vmul.f32 %v1524, 0.35355338
        %v1578 = vmul.f32 %v1530, 0.35355338
        %v1579 = vmul.f32 %v1536, 0.35355338
        %v1580 = vmul.f32 %v1542, 0.35355338
        %v1581 = vmul.f32 %v1548, 0.35355338
        %v1582 = vmul.f32 %v1554, 0.35355338
        %v1583 = vmul.f32 %v1560, 0.35355338
        %v1584 = vmul.f32 %v1566, 0.35355338
        %vm1585 = vcmask 64512
        %v1586 = vsel %vm1585, %v1569, -inf
        %v1587 = vsel %vm1585, %v1570, -inf
        %v1588 = vmax.f32 %v1586, %v1587
        %v1589 = vrot.slane %v1588, 4
        %v1590 = vmax.f32 %v1588, %v1589
        %v1591 = vrot.slane %v1590, 2
        %v1592 = vmax.f32 %v1590, %v1591
        %v1593 = vrot.slane %v1592, 1
        %v1594 = vmax.f32 %v1592, %v1593
        %v1595 = vsel %vm1585, %v1571, -inf
        %v1596 = vsel %vm1585, %v1572, -inf
        %v1597 = vmax.f32 %v1595, %v1596
        %v1598 = vrot.slane %v1597, 4
        %v1599 = vmax.f32 %v1597, %v1598
        %v1600 = vrot.slane %v1599, 2
        %v1601 = vmax.f32 %v1599, %v1600
        %v1602 = vrot.slane %v1601, 1
        %v1603 = vmax.f32 %v1601, %v1602
        %v1604 = vsel %vm1585, %v1573, -inf
        %v1605 = vsel %vm1585, %v1574, -inf
        %v1606 = vmax.f32 %v1604, %v1605
        %v1607 = vrot.slane %v1606, 4
        %v1608 = vmax.f32 %v1606, %v1607
        %v1609 = vrot.slane %v1608, 2
        %v1610 = vmax.f32 %v1608, %v1609
        %v1611 = vrot.slane %v1610, 1
        %v1612 = vmax.f32 %v1610, %v1611
        %v1613 = vsel %vm1585, %v1575, -inf
        %v1614 = vsel %vm1585, %v1576, -inf
        %v1615 = vmax.f32 %v1613, %v1614
        %v1616 = vrot.slane %v1615, 4
        %v1617 = vmax.f32 %v1615, %v1616
        %v1618 = vrot.slane %v1617, 2
        %v1619 = vmax.f32 %v1617, %v1618
        %v1620 = vrot.slane %v1619, 1
        %v1621 = vmax.f32 %v1619, %v1620
        %v1622 = vsel %vm1585, %v1577, -inf
        %v1623 = vsel %vm1585, %v1578, -inf
        %v1624 = vmax.f32 %v1622, %v1623
        %v1625 = vrot.slane %v1624, 4
        %v1626 = vmax.f32 %v1624, %v1625
        %v1627 = vrot.slane %v1626, 2
        %v1628 = vmax.f32 %v1626, %v1627
        %v1629 = vrot.slane %v1628, 1
        %v1630 = vmax.f32 %v1628, %v1629
        %v1631 = vsel %vm1585, %v1579, -inf
        %v1632 = vsel %vm1585, %v1580, -inf
        %v1633 = vmax.f32 %v1631, %v1632
        %v1634 = vrot.slane %v1633, 4
        %v1635 = vmax.f32 %v1633, %v1634
        %v1636 = vrot.slane %v1635, 2
        %v1637 = vmax.f32 %v1635, %v1636
        %v1638 = vrot.slane %v1637, 1
        %v1639 = vmax.f32 %v1637, %v1638
        %v1640 = vsel %vm1585, %v1581, -inf
        %v1641 = vsel %vm1585, %v1582, -inf
        %v1642 = vmax.f32 %v1640, %v1641
        %v1643 = vrot.slane %v1642, 4
        %v1644 = vmax.f32 %v1642, %v1643
        %v1645 = vrot.slane %v1644, 2
        %v1646 = vmax.f32 %v1644, %v1645
        %v1647 = vrot.slane %v1646, 1
        %v1648 = vmax.f32 %v1646, %v1647
        %v1649 = vsel %vm1585, %v1583, -inf
        %v1650 = vsel %vm1585, %v1584, -inf
        %v1651 = vmax.f32 %v1649, %v1650
        %v1652 = vrot.slane %v1651, 4
        %v1653 = vmax.f32 %v1651, %v1652
        %v1654 = vrot.slane %v1653, 2
        %v1655 = vmax.f32 %v1653, %v1654
        %v1656 = vrot.slane %v1655, 1
        %v1657 = vmax.f32 %v1655, %v1656
        %v1658 = vsub.f32 %v1569, %v1594
        %v1659 = vsub.f32 %v1570, %v1594
        %v1660 = vsub.f32 %v1571, %v1603
        %v1661 = vsub.f32 %v1572, %v1603
        %v1662 = vsub.f32 %v1573, %v1612
        %v1663 = vsub.f32 %v1574, %v1612
        %v1664 = vsub.f32 %v1575, %v1621
        %v1665 = vsub.f32 %v1576, %v1621
        %v1666 = vsub.f32 %v1577, %v1630
        %v1667 = vsub.f32 %v1578, %v1630
        %v1668 = vsub.f32 %v1579, %v1639
        %v1669 = vsub.f32 %v1580, %v1639
        %v1670 = vsub.f32 %v1581, %v1648
        %v1671 = vsub.f32 %v1582, %v1648
        %v1672 = vsub.f32 %v1583, %v1657
        %v1673 = vsub.f32 %v1584, %v1657
        %v1674 = vmul.f32 %v1658, 1.442695
        %v1675 = vpow.pop %v1674
        %v1676 = vmul.f32 %v1659, 1.442695
        %v1677 = vpow.pop %v1676
        %v1678 = vmul.f32 %v1660, 1.442695
        %v1679 = vpow.pop %v1678
        %v1680 = vmul.f32 %v1661, 1.442695
        %v1681 = vpow.pop %v1680
        %v1682 = vmul.f32 %v1662, 1.442695
        %v1683 = vpow.pop %v1682
        %v1684 = vmul.f32 %v1663, 1.442695
        %v1685 = vpow.pop %v1684
        %v1686 = vmul.f32 %v1664, 1.442695
        %v1687 = vpow.pop %v1686
        %v1688 = vmul.f32 %v1665, 1.442695
        %v1689 = vpow.pop %v1688
        %v1690 = vmul.f32 %v1666, 1.442695
        %v1691 = vpow.pop %v1690
        %v1692 = vmul.f32 %v1667, 1.442695
        %v1693 = vpow.pop %v1692
        %v1694 = vmul.f32 %v1668, 1.442695
        %v1695 = vpow.pop %v1694
        %v1696 = vmul.f32 %v1669, 1.442695
        %v1697 = vpow.pop %v1696
        %v1698 = vmul.f32 %v1670, 1.442695
        %v1699 = vpow.pop %v1698
        %v1700 = vmul.f32 %v1671, 1.442695
        %v1701 = vpow.pop %v1700
        %v1702 = vmul.f32 %v1672, 1.442695
        %v1703 = vpow.pop %v1702
        %v1704 = vmul.f32 %v1673, 1.442695
        %v1705 = vpow.pop %v1704
        %v1706 = vsel %vm1585, %v1675, 0.0
        %v1707 = vsel %vm1585, %v1677, 0.0
        %v1708 = vadd.f32 %v1706, %v1707
        %v1709 = vrot.slane %v1708, 4
        %v1710 = vadd.f32 %v1708, %v1709
        %v1711 = vrot.slane %v1710, 2
        %v1712 = vadd.f32 %v1710, %v1711
        %v1713 = vrot.slane %v1712, 1
        %v1714 = vadd.f32 %v1712, %v1713
        %v1715 = vsel %vm1585, %v1679, 0.0
        %v1716 = vsel %vm1585, %v1681, 0.0
        %v1717 = vadd.f32 %v1715, %v1716
        %v1718 = vrot.slane %v1717, 4
        %v1719 = vadd.f32 %v1717, %v1718
        %v1720 = vrot.slane %v1719, 2
        %v1721 = vadd.f32 %v1719, %v1720
        %v1722 = vrot.slane %v1721, 1
        %v1723 = vadd.f32 %v1721, %v1722
        %v1724 = vsel %vm1585, %v1683, 0.0
        %v1725 = vsel %vm1585, %v1685, 0.0
        %v1726 = vadd.f32 %v1724, %v1725
        %v1727 = vrot.slane %v1726, 4
        %v1728 = vadd.f32 %v1726, %v1727
        %v1729 = vrot.slane %v1728, 2
        %v1730 = vadd.f32 %v1728, %v1729
        %v1731 = vrot.slane %v1730, 1
        %v1732 = vadd.f32 %v1730, %v1731
        %v1733 = vsel %vm1585, %v1687, 0.0
        %v1734 = vsel %vm1585, %v1689, 0.0
        %v1735 = vadd.f32 %v1733, %v1734
        %v1736 = vrot.slane %v1735, 4
        %v1737 = vadd.f32 %v1735, %v1736
        %v1738 = vrot.slane %v1737, 2
        %v1739 = vadd.f32 %v1737, %v1738
        %v1740 = vrot.slane %v1739, 1
        %v1741 = vadd.f32 %v1739, %v1740
        %v1742 = vsel %vm1585, %v1691, 0.0
        %v1743 = vsel %vm1585, %v1693, 0.0
        %v1744 = vadd.f32 %v1742, %v1743
        %v1745 = vrot.slane %v1744, 4
        %v1746 = vadd.f32 %v1744, %v1745
        %v1747 = vrot.slane %v1746, 2
        %v1748 = vadd.f32 %v1746, %v1747
        %v1749 = vrot.slane %v1748, 1
        %v1750 = vadd.f32 %v1748, %v1749
        %v1751 = vsel %vm1585, %v1695, 0.0
        %v1752 = vsel %vm1585, %v1697, 0.0
        %v1753 = vadd.f32 %v1751, %v1752
        %v1754 = vrot.slane %v1753, 4
        %v1755 = vadd.f32 %v1753, %v1754
        %v1756 = vrot.slane %v1755, 2
        %v1757 = vadd.f32 %v1755, %v1756
        %v1758 = vrot.slane %v1757, 1
        %v1759 = vadd.f32 %v1757, %v1758
        %v1760 = vsel %vm1585, %v1699, 0.0
        %v1761 = vsel %vm1585, %v1701, 0.0
        %v1762 = vadd.f32 %v1760, %v1761
        %v1763 = vrot.slane %v1762, 4
        %v1764 = vadd.f32 %v1762, %v1763
        %v1765 = vrot.slane %v1764, 2
        %v1766 = vadd.f32 %v1764, %v1765
        %v1767 = vrot.slane %v1766, 1
        %v1768 = vadd.f32 %v1766, %v1767
        %v1769 = vsel %vm1585, %v1703, 0.0
        %v1770 = vsel %vm1585, %v1705, 0.0
        %v1771 = vadd.f32 %v1769, %v1770
        %v1772 = vrot.slane %v1771, 4
        %v1773 = vadd.f32 %v1771, %v1772
        %v1774 = vrot.slane %v1773, 2
        %v1775 = vadd.f32 %v1773, %v1774
        %v1776 = vrot.slane %v1775, 1
        %v1777 = vadd.f32 %v1775, %v1776
        %v1778 = vrcp.pop %v1714
        %v1779 = vrcp.pop %v1723
        %v1780 = vrcp.pop %v1732
        %v1781 = vrcp.pop %v1741
        %v1782 = vrcp.pop %v1750
        %v1783 = vrcp.pop %v1759
        %v1784 = vrcp.pop %v1768
        %v1785 = vrcp.pop %v1777
        %v1786 = vmul.f32 %v1675, %v1778
        %v1787 = vmul.f32 %v1677, %v1778
        %v1788 = vmul.f32 %v1679, %v1779
        %v1789 = vmul.f32 %v1681, %v1779
        %v1790 = vmul.f32 %v1683, %v1780
        %v1791 = vmul.f32 %v1685, %v1780
        %v1792 = vmul.f32 %v1687, %v1781
        %v1793 = vmul.f32 %v1689, %v1781
        %v1794 = vmul.f32 %v1691, %v1782
        %v1795 = vmul.f32 %v1693, %v1782
        %v1796 = vmul.f32 %v1695, %v1783
        %v1797 = vmul.f32 %v1697, %v1783
        %v1798 = vmul.f32 %v1699, %v1784
        %v1799 = vmul.f32 %v1701, %v1784
        %v1800 = vmul.f32 %v1703, %v1785
        %v1801 = vmul.f32 %v1705, %v1785
        %1802 = vxpose.xlu0.b32.start [1/16] %v1786, 128
        %1803 = vxpose.xlu0.b32.cont [2/16] %v1787, 128
        %1804 = vxpose.xlu0.b32.cont [3/16] 0.0, 128
        %1805 = vxpose.xlu0.b32.cont [4/16] 0.0, 128
        %1806 = vxpose.xlu0.b32.cont [5/16] 0.0, 128
        %1807 = vxpose.xlu0.b32.cont [6/16] 0.0, 128
        %1808 = vxpose.xlu0.b32.cont [7/16] 0.0, 128
        %1809 = vxpose.xlu0.b32.cont [8/16] 0.0, 128
        %1810 = vxpose.xlu0.b32.cont [9/16] 0.0, 128
        %1811 = vxpose.xlu0.b32.cont [10/16] 0.0, 128
        %1812 = vxpose.xlu0.b32.cont [11/16] 0.0, 128
        %1813 = vxpose.xlu0.b32.cont [12/16] 0.0, 128
        %1814 = vxpose.xlu0.b32.cont [13/16] 0.0, 128
        %1815 = vxpose.xlu0.b32.cont [14/16] 0.0, 128
        %1816 = vxpose.xlu0.b32.cont [15/16] 0.0, 128
        %1817 = vxpose.xlu0.b32.end [16/16] 0.0, 128
        %v1818 = vpop.trf.xlu0
        %v1819 = vpop.trf.xlu0
        %v1820 = vpop.trf.xlu0
        %v1821 = vpop.trf.xlu0
        %v1822 = vpop.trf.xlu0
        %v1823 = vpop.trf.xlu0
        %v1824 = vpop.trf.xlu0
        %v1825 = vpop.trf.xlu0
        %v1826 = vpop.trf.xlu0
        %v1827 = vpop.trf.xlu0
        %v1828 = vpop.trf.xlu0
        %v1829 = vpop.trf.xlu0
        %v1830 = vpop.trf.xlu0
        %v1831 = vpop.trf.xlu0
        %v1832 = vpop.trf.xlu0
        %v1833 = vpop.trf.xlu0
        %1834 = vxpose.xlu0.b32.start [1/16] %v1788, 128
        %1835 = vxpose.xlu0.b32.cont [2/16] %v1789, 128
        %1836 = vxpose.xlu0.b32.cont [3/16] 0.0, 128
        %1837 = vxpose.xlu0.b32.cont [4/16] 0.0, 128
        %1838 = vxpose.xlu0.b32.cont [5/16] 0.0, 128
        %1839 = vxpose.xlu0.b32.cont [6/16] 0.0, 128
        %1840 = vxpose.xlu0.b32.cont [7/16] 0.0, 128
        %1841 = vxpose.xlu0.b32.cont [8/16] 0.0, 128
        %1842 = vxpose.xlu0.b32.cont [9/16] 0.0, 128
        %1843 = vxpose.xlu0.b32.cont [10/16] 0.0, 128
        %1844 = vxpose.xlu0.b32.cont [11/16] 0.0, 128
        %1845 = vxpose.xlu0.b32.cont [12/16] 0.0, 128
        %1846 = vxpose.xlu0.b32.cont [13/16] 0.0, 128
        %1847 = vxpose.xlu0.b32.cont [14/16] 0.0, 128
        %1848 = vxpose.xlu0.b32.cont [15/16] 0.0, 128
        %1849 = vxpose.xlu0.b32.end [16/16] 0.0, 128
        %v1850 = vpop.trf.xlu0
        %v1851 = vpop.trf.xlu0
        %v1852 = vpop.trf.xlu0
        %v1853 = vpop.trf.xlu0
        %v1854 = vpop.trf.xlu0
        %v1855 = vpop.trf.xlu0
        %v1856 = vpop.trf.xlu0
        %v1857 = vpop.trf.xlu0
        %v1858 = vpop.trf.xlu0
        %v1859 = vpop.trf.xlu0
        %v1860 = vpop.trf.xlu0
        %v1861 = vpop.trf.xlu0
        %v1862 = vpop.trf.xlu0
        %v1863 = vpop.trf.xlu0
        %v1864 = vpop.trf.xlu0
        %v1865 = vpop.trf.xlu0
        %1866 = vxpose.xlu0.b32.start [1/16] %v1790, 128
        %1867 = vxpose.xlu0.b32.cont [2/16] %v1791, 128
        %1868 = vxpose.xlu0.b32.cont [3/16] 0.0, 128
        %1869 = vxpose.xlu0.b32.cont [4/16] 0.0, 128
        %1870 = vxpose.xlu0.b32.cont [5/16] 0.0, 128
        %1871 = vxpose.xlu0.b32.cont [6/16] 0.0, 128
        %1872 = vxpose.xlu0.b32.cont [7/16] 0.0, 128
        %1873 = vxpose.xlu0.b32.cont [8/16] 0.0, 128
        %1874 = vxpose.xlu0.b32.cont [9/16] 0.0, 128
        %1875 = vxpose.xlu0.b32.cont [10/16] 0.0, 128
        %1876 = vxpose.xlu0.b32.cont [11/16] 0.0, 128
        %1877 = vxpose.xlu0.b32.cont [12/16] 0.0, 128
        %1878 = vxpose.xlu0.b32.cont [13/16] 0.0, 128
        %1879 = vxpose.xlu0.b32.cont [14/16] 0.0, 128
        %1880 = vxpose.xlu0.b32.cont [15/16] 0.0, 128
        %1881 = vxpose.xlu0.b32.end [16/16] 0.0, 128
        %v1882 = vpop.trf.xlu0
        %v1883 = vpop.trf.xlu0
        %v1884 = vpop.trf.xlu0
        %v1885 = vpop.trf.xlu0
        %v1886 = vpop.trf.xlu0
        %v1887 = vpop.trf.xlu0
        %v1888 = vpop.trf.xlu0
        %v1889 = vpop.trf.xlu0
        %v1890 = vpop.trf.xlu0
        %v1891 = vpop.trf.xlu0
        %v1892 = vpop.trf.xlu0
        %v1893 = vpop.trf.xlu0
        %v1894 = vpop.trf.xlu0
        %v1895 = vpop.trf.xlu0
        %v1896 = vpop.trf.xlu0
        %v1897 = vpop.trf.xlu0
        %1898 = vxpose.xlu0.b32.start [1/16] %v1792, 128
        %1899 = vxpose.xlu0.b32.cont [2/16] %v1793, 128
        %1900 = vxpose.xlu0.b32.cont [3/16] 0.0, 128
        %1901 = vxpose.xlu0.b32.cont [4/16] 0.0, 128
        %1902 = vxpose.xlu0.b32.cont [5/16] 0.0, 128
        %1903 = vxpose.xlu0.b32.cont [6/16] 0.0, 128
        %1904 = vxpose.xlu0.b32.cont [7/16] 0.0, 128
        %1905 = vxpose.xlu0.b32.cont [8/16] 0.0, 128
        %1906 = vxpose.xlu0.b32.cont [9/16] 0.0, 128
        %1907 = vxpose.xlu0.b32.cont [10/16] 0.0, 128
        %1908 = vxpose.xlu0.b32.cont [11/16] 0.0, 128
        %1909 = vxpose.xlu0.b32.cont [12/16] 0.0, 128
        %1910 = vxpose.xlu0.b32.cont [13/16] 0.0, 128
        %1911 = vxpose.xlu0.b32.cont [14/16] 0.0, 128
        %1912 = vxpose.xlu0.b32.cont [15/16] 0.0, 128
        %1913 = vxpose.xlu0.b32.end [16/16] 0.0, 128
        %v1914 = vpop.trf.xlu0
        %v1915 = vpop.trf.xlu0
        %v1916 = vpop.trf.xlu0
        %v1917 = vpop.trf.xlu0
        %v1918 = vpop.trf.xlu0
        %v1919 = vpop.trf.xlu0
        %v1920 = vpop.trf.xlu0
        %v1921 = vpop.trf.xlu0
        %v1922 = vpop.trf.xlu0
        %v1923 = vpop.trf.xlu0
        %v1924 = vpop.trf.xlu0
        %v1925 = vpop.trf.xlu0
        %v1926 = vpop.trf.xlu0
        %v1927 = vpop.trf.xlu0
        %v1928 = vpop.trf.xlu0
        %v1929 = vpop.trf.xlu0
        %1930 = vxpose.xlu0.b32.start [1/16] %v1794, 128
        %1931 = vxpose.xlu0.b32.cont [2/16] %v1795, 128
        %1932 = vxpose.xlu0.b32.cont [3/16] 0.0, 128
        %1933 = vxpose.xlu0.b32.cont [4/16] 0.0, 128
        %1934 = vxpose.xlu0.b32.cont [5/16] 0.0, 128
        %1935 = vxpose.xlu0.b32.cont [6/16] 0.0, 128
        %1936 = vxpose.xlu0.b32.cont [7/16] 0.0, 128
        %1937 = vxpose.xlu0.b32.cont [8/16] 0.0, 128
        %1938 = vxpose.xlu0.b32.cont [9/16] 0.0, 128
        %1939 = vxpose.xlu0.b32.cont [10/16] 0.0, 128
        %1940 = vxpose.xlu0.b32.cont [11/16] 0.0, 128
        %1941 = vxpose.xlu0.b32.cont [12/16] 0.0, 128
        %1942 = vxpose.xlu0.b32.cont [13/16] 0.0, 128
        %1943 = vxpose.xlu0.b32.cont [14/16] 0.0, 128
        %1944 = vxpose.xlu0.b32.cont [15/16] 0.0, 128
        %1945 = vxpose.xlu0.b32.end [16/16] 0.0, 128
        %v1946 = vpop.trf.xlu0
        %v1947 = vpop.trf.xlu0
        %v1948 = vpop.trf.xlu0
        %v1949 = vpop.trf.xlu0
        %v1950 = vpop.trf.xlu0
        %v1951 = vpop.trf.xlu0
        %v1952 = vpop.trf.xlu0
        %v1953 = vpop.trf.xlu0
        %v1954 = vpop.trf.xlu0
        %v1955 = vpop.trf.xlu0
        %v1956 = vpop.trf.xlu0
        %v1957 = vpop.trf.xlu0
        %v1958 = vpop.trf.xlu0
        %v1959 = vpop.trf.xlu0
        %v1960 = vpop.trf.xlu0
        %v1961 = vpop.trf.xlu0
        %1962 = vxpose.xlu0.b32.start [1/16] %v1796, 128
        %1963 = vxpose.xlu0.b32.cont [2/16] %v1797, 128
        %1964 = vxpose.xlu0.b32.cont [3/16] 0.0, 128
        %1965 = vxpose.xlu0.b32.cont [4/16] 0.0, 128
        %1966 = vxpose.xlu0.b32.cont [5/16] 0.0, 128
        %1967 = vxpose.xlu0.b32.cont [6/16] 0.0, 128
        %1968 = vxpose.xlu0.b32.cont [7/16] 0.0, 128
        %1969 = vxpose.xlu0.b32.cont [8/16] 0.0, 128
        %1970 = vxpose.xlu0.b32.cont [9/16] 0.0, 128
        %1971 = vxpose.xlu0.b32.cont [10/16] 0.0, 128
        %1972 = vxpose.xlu0.b32.cont [11/16] 0.0, 128
        %1973 = vxpose.xlu0.b32.cont [12/16] 0.0, 128
        %1974 = vxpose.xlu0.b32.cont [13/16] 0.0, 128
        %1975 = vxpose.xlu0.b32.cont [14/16] 0.0, 128
        %1976 = vxpose.xlu0.b32.cont [15/16] 0.0, 128
        %1977 = vxpose.xlu0.b32.end [16/16] 0.0, 128
        %v1978 = vpop.trf.xlu0
        %v1979 = vpop.trf.xlu0
        %v1980 = vpop.trf.xlu0
        %v1981 = vpop.trf.xlu0
        %v1982 = vpop.trf.xlu0
        %v1983 = vpop.trf.xlu0
        %v1984 = vpop.trf.xlu0
        %v1985 = vpop.trf.xlu0
        %v1986 = vpop.trf.xlu0
        %v1987 = vpop.trf.xlu0
        %v1988 = vpop.trf.xlu0
        %v1989 = vpop.trf.xlu0
        %v1990 = vpop.trf.xlu0
        %v1991 = vpop.trf.xlu0
        %v1992 = vpop.trf.xlu0
        %v1993 = vpop.trf.xlu0
        %1994 = vxpose.xlu0.b32.start [1/16] %v1798, 128
        %1995 = vxpose.xlu0.b32.cont [2/16] %v1799, 128
        %1996 = vxpose.xlu0.b32.cont [3/16] 0.0, 128
        %1997 = vxpose.xlu0.b32.cont [4/16] 0.0, 128
        %1998 = vxpose.xlu0.b32.cont [5/16] 0.0, 128
        %1999 = vxpose.xlu0.b32.cont [6/16] 0.0, 128
        %2000 = vxpose.xlu0.b32.cont [7/16] 0.0, 128
        %2001 = vxpose.xlu0.b32.cont [8/16] 0.0, 128
        %2002 = vxpose.xlu0.b32.cont [9/16] 0.0, 128
        %2003 = vxpose.xlu0.b32.cont [10/16] 0.0, 128
        %2004 = vxpose.xlu0.b32.cont [11/16] 0.0, 128
        %2005 = vxpose.xlu0.b32.cont [12/16] 0.0, 128
        %2006 = vxpose.xlu0.b32.cont [13/16] 0.0, 128
        %2007 = vxpose.xlu0.b32.cont [14/16] 0.0, 128
        %2008 = vxpose.xlu0.b32.cont [15/16] 0.0, 128
        %2009 = vxpose.xlu0.b32.end [16/16] 0.0, 128
        %v2010 = vpop.trf.xlu0
        %v2011 = vpop.trf.xlu0
        %v2012 = vpop.trf.xlu0
        %v2013 = vpop.trf.xlu0
        %v2014 = vpop.trf.xlu0
        %v2015 = vpop.trf.xlu0
        %v2016 = vpop.trf.xlu0
        %v2017 = vpop.trf.xlu0
        %v2018 = vpop.trf.xlu0
        %v2019 = vpop.trf.xlu0
        %v2020 = vpop.trf.xlu0
        %v2021 = vpop.trf.xlu0
        %v2022 = vpop.trf.xlu0
        %v2023 = vpop.trf.xlu0
        %v2024 = vpop.trf.xlu0
        %v2025 = vpop.trf.xlu0
        %2026 = vxpose.xlu0.b32.start [1/16] %v1800, 128
        %2027 = vxpose.xlu0.b32.cont [2/16] %v1801, 128
        %2028 = vxpose.xlu0.b32.cont [3/16] 0.0, 128
        %2029 = vxpose.xlu0.b32.cont [4/16] 0.0, 128
        %2030 = vxpose.xlu0.b32.cont [5/16] 0.0, 128
        %2031 = vxpose.xlu0.b32.cont [6/16] 0.0, 128
        %2032 = vxpose.xlu0.b32.cont [7/16] 0.0, 128
        %2033 = vxpose.xlu0.b32.cont [8/16] 0.0, 128
        %2034 = vxpose.xlu0.b32.cont [9/16] 0.0, 128
        %2035 = vxpose.xlu0.b32.cont [10/16] 0.0, 128
        %2036 = vxpose.xlu0.b32.cont [11/16] 0.0, 128
        %2037 = vxpose.xlu0.b32.cont [12/16] 0.0, 128
        %2038 = vxpose.xlu0.b32.cont [13/16] 0.0, 128
        %2039 = vxpose.xlu0.b32.cont [14/16] 0.0, 128
        %2040 = vxpose.xlu0.b32.cont [15/16] 0.0, 128
        %2041 = vxpose.xlu0.b32.end [16/16] 0.0, 128
        %v2042 = vpop.trf.xlu0
        %v2043 = vpop.trf.xlu0
        %v2044 = vpop.trf.xlu0
        %v2045 = vpop.trf.xlu0
        %v2046 = vpop.trf.xlu0
        %v2047 = vpop.trf.xlu0
        %v2048 = vpop.trf.xlu0
        %v2049 = vpop.trf.xlu0
        %v2050 = vpop.trf.xlu0
        %v2051 = vpop.trf.xlu0
        %v2052 = vpop.trf.xlu0
        %v2053 = vpop.trf.xlu0
        %v2054 = vpop.trf.xlu0
        %v2055 = vpop.trf.xlu0
        %v2056 = vpop.trf.xlu0
        %v2057 = vpop.trf.xlu0
        %vm2058 = vcmask 130048
        %2059 = vst.msk [vmem:[%s277] sm:$0xff] %vm2058, %v1818
        %2060 = vst.msk [vmem:[%s277 + $0x8] sm:$0xff] %vm2058, %v1850
        %2061 = vst.msk [vmem:[%s277 + $0x10] sm:$0xff] %vm2058, %v1882
        %2062 = vst.msk [vmem:[%s277 + $0x18] sm:$0xff] %vm2058, %v1914
        %2063 = vst.msk [vmem:[%s277 + $0x20] sm:$0xff] %vm2058, %v1946
        %2064 = vst.msk [vmem:[%s277 + $0x28] sm:$0xff] %vm2058, %v1978
        %2065 = vst.msk [vmem:[%s277 + $0x30] sm:$0xff] %vm2058, %v2010
        %2066 = vst.msk [vmem:[%s277 + $0x38] sm:$0xff] %vm2058, %v2042
        %v2068 = vsel %vm1585, %v1786, 0
        %v2071 = vsel %vm1585, %v1787, 0
        %v2074 = vsel %vm1585, %v1788, 0
        %v2077 = vsel %vm1585, %v1789, 0
        %v2080 = vsel %vm1585, %v1790, 0
        %v2083 = vsel %vm1585, %v1791, 0
        %v2086 = vsel %vm1585, %v1792, 0
        %v2089 = vsel %vm1585, %v1793, 0
        %v2092 = vsel %vm1585, %v1794, 0
        %v2095 = vsel %vm1585, %v1795, 0
        %v2098 = vsel %vm1585, %v1796, 0
        %v2101 = vsel %vm1585, %v1797, 0
        %v2104 = vsel %vm1585, %v1798, 0
        %v2107 = vsel %vm1585, %v1799, 0
        %v2110 = vsel %vm1585, %v1800, 0
        %v2113 = vsel %vm1585, %v1801, 0
        %2115 = vmatprep.subr.mxu0 0.0
        %v2116 = vand.u32 %v309, 4294901760
        %2117 = vmatpush1.msra.mxu0 %v2116
        %2118 = vmatprep.subr.mxu0 0.0
        %2119 = vmatpush1.msra.mxu0 0.0
        %2120 = vmatprep.subr.mxu0 0.0
        %2121 = vmatpush1.msra.mxu0 0.0
        %2122 = vmatprep.subr.mxu0 0.0
        %2123 = vmatpush1.msra.mxu0 0.0
        %2124 = vmatprep.subr.mxu0 0.0
        %2125 = vmatpush1.msra.mxu0 0.0
        %2126 = vmatprep.subr.mxu0 0.0
        %2127 = vmatpush1.msra.mxu0 0.0
        %2128 = vmatprep.subr.mxu0 0.0
        %2129 = vmatpush1.msra.mxu0 0.0
        %2130 = vmatprep.subr.mxu0 0.0
        %2131 = vmatpush1.msra.mxu0 0.0
        %2132 = vmatprep.subr.mxu0 0.0
        %2133 = vmatpush1.msra.mxu0 0.0
        %2134 = vmatprep.subr.mxu0 0.0
        %2135 = vmatpush1.msra.mxu0 0.0
        %2136 = vmatprep.subr.mxu0 0.0
        %2137 = vmatpush1.msra.mxu0 0.0
        %2138 = vmatprep.subr.mxu0 0.0
        %2139 = vmatpush1.msra.mxu0 0.0
        %2140 = vmatprep.subr.mxu0 0.0
        %2141 = vmatpush1.msra.mxu0 0.0
        %2142 = vmatprep.subr.mxu0 0.0
        %2143 = vmatpush1.msra.mxu0 0.0
        %2144 = vmatprep.subr.mxu0 0.0
        %2145 = vmatpush1.msra.mxu0 0.0
        %2146 = vmatprep.subr.mxu0 0.0
        %2147 = vmatpush1.msra.mxu0 0.0
        %2148 = vmatprep.subr.mxu0 0.0
        %2149 = vmatpush1.msra.mxu0 0.0
        %2150 = vmatprep.subr.mxu0 0.0
        %2151 = vmatpush1.msra.mxu0 0.0
        %2152 = vmatprep.subr.mxu0 0.0
        %2153 = vmatpush1.msra.mxu0 0.0
        %2154 = vmatprep.subr.mxu0 0.0
        %2155 = vmatpush1.msra.mxu0 0.0
        %2156 = vmatprep.subr.mxu0 0.0
        %2157 = vmatpush1.msra.mxu0 0.0
        %2158 = vmatprep.subr.mxu0 0.0
        %2159 = vmatpush1.msra.mxu0 0.0
        %2160 = vmatprep.subr.mxu0 0.0
        %2161 = vmatpush1.msra.mxu0 0.0
        %2162 = vmatprep.subr.mxu0 0.0
        %2163 = vmatpush1.msra.mxu0 0.0
        %2164 = vmatprep.subr.mxu0 0.0
        %2165 = vmatpush1.msra.mxu0 0.0
        %2166 = vmatprep.subr.mxu0 0.0
        %2167 = vmatpush1.msra.mxu0 0.0
        %2168 = vmatprep.subr.mxu0 0.0
        %2169 = vmatpush1.msra.mxu0 0.0
        %2170 = vmatprep.subr.mxu0 0.0
        %2171 = vmatpush1.msra.mxu0 0.0
        %2172 = vmatprep.subr.mxu0 0.0
        %2173 = vmatpush1.msra.mxu0 0.0
        %2174 = vmatprep.subr.mxu0 0.0
        %2175 = vmatpush1.msra.mxu0 0.0
        %2176 = vmatprep.subr.mxu0 0.0
        %2177 = vmatpush1.msra.mxu0 0.0
        %2178 = vmatprep.subr.mxu0 0.0
        %2179 = vmatpush1.msra.mxu0 0.0
        %2180 = vmatprep.mubr.f32.mxu0 0.0
        %v2181 = vand.u32 %v2068, 4294901760
        %v2182 = vsub.f32 %v2068, %v2181
        %v2183 = vand.u32 %v2182, 4294901760
        %v2184 = vsub.f32 %v2182, %v2183
        %v2185 = vand.u32 %v2184, 4294901760
        %2186 = vmatmul.mubr.f32.gmra.mrb[0].mxu0 %v2185
        %v2187 = vpop.f32.mrb[0].mxu0
        %v2188 = vadd.f32 0.0, %v2187
        %v2189 = vpop.f32.mrb[0].mxu0
        %2190 = vmatprep.mubr.f32.mxu0 0.0
        %v2191 = vand.u32 %v2071, 4294901760
        %v2192 = vsub.f32 %v2071, %v2191
        %v2193 = vand.u32 %v2192, 4294901760
        %v2194 = vsub.f32 %v2192, %v2193
        %v2195 = vand.u32 %v2194, 4294901760
        %2196 = vmatmul.mubr.f32.gmra.mrb[0].mxu0 %v2195
        %v2197 = vpop.f32.mrb[0].mxu0
        %v2198 = vadd.f32 0.0, %v2197
        %v2199 = vpop.f32.mrb[0].mxu0
        %2200 = vmatprep.mubr.f32.mxu0 0.0
        %v2201 = vand.u32 %v2074, 4294901760
        %v2202 = vsub.f32 %v2074, %v2201
        %v2203 = vand.u32 %v2202, 4294901760
        %v2204 = vsub.f32 %v2202, %v2203
        %v2205 = vand.u32 %v2204, 4294901760
        %2206 = vmatmul.mubr.f32.gmra.mrb[0].mxu0 %v2205
        %v2207 = vpop.f32.mrb[0].mxu0
        %v2208 = vadd.f32 0.0, %v2207
        %v2209 = vpop.f32.mrb[0].mxu0
        %2210 = vmatprep.mubr.f32.mxu0 0.0
        %v2211 = vand.u32 %v2077, 4294901760
        %v2212 = vsub.f32 %v2077, %v2211
        %v2213 = vand.u32 %v2212, 4294901760
        %v2214 = vsub.f32 %v2212, %v2213
        %v2215 = vand.u32 %v2214, 4294901760
        %2216 = vmatmul.mubr.f32.gmra.mrb[0].mxu0 %v2215
        %v2217 = vpop.f32.mrb[0].mxu0
        %v2218 = vadd.f32 0.0, %v2217
        %v2219 = vpop.f32.mrb[0].mxu0
        %2220 = vmatprep.mubr.f32.mxu0 0.0
        %v2221 = vand.u32 %v2080, 4294901760
        %v2222 = vsub.f32 %v2080, %v2221
        %v2223 = vand.u32 %v2222, 4294901760
        %v2224 = vsub.f32 %v2222, %v2223
        %v2225 = vand.u32 %v2224, 4294901760
        %2226 = vmatmul.mubr.f32.gmra.mrb[0].mxu0 %v2225
        %v2227 = vpop.f32.mrb[0].mxu0
        %v2228 = vadd.f32 0.0, %v2227
        %v2229 = vpop.f32.mrb[0].mxu0
        %2230 = vmatprep.mubr.f32.mxu0 0.0
        %v2231 = vand.u32 %v2083, 4294901760
        %v2232 = vsub.f32 %v2083, %v2231
        %v2233 = vand.u32 %v2232, 4294901760
        %v2234 = vsub.f32 %v2232, %v2233
        %v2235 = vand.u32 %v2234, 4294901760
        %2236 = vmatmul.mubr.f32.gmra.mrb[0].mxu0 %v2235
        %v2237 = vpop.f32.mrb[0].mxu0
        %v2238 = vadd.f32 0.0, %v2237
        %v2239 = vpop.f32.mrb[0].mxu0
        %2240 = vmatprep.mubr.f32.mxu0 0.0
        %v2241 = vand.u32 %v2086, 4294901760
        %v2242 = vsub.f32 %v2086, %v2241
        %v2243 = vand.u32 %v2242, 4294901760
        %v2244 = vsub.f32 %v2242, %v2243
        %v2245 = vand.u32 %v2244, 4294901760
        %2246 = vmatmul.mubr.f32.gmra.mrb[0].mxu0 %v2245
        %v2247 = vpop.f32.mrb[0].mxu0
        %v2248 = vadd.f32 0.0, %v2247
        %v2249 = vpop.f32.mrb[0].mxu0
        %2250 = vmatprep.mubr.f32.mxu0 0.0
        %v2251 = vand.u32 %v2089, 4294901760
        %v2252 = vsub.f32 %v2089, %v2251
        %v2253 = vand.u32 %v2252, 4294901760
        %v2254 = vsub.f32 %v2252, %v2253
        %v2255 = vand.u32 %v2254, 4294901760
        %2256 = vmatmul.mubr.f32.gmra.mrb[0].mxu0 %v2255
        %v2257 = vpop.f32.mrb[0].mxu0
        %v2258 = vadd.f32 0.0, %v2257
        %v2259 = vpop.f32.mrb[0].mxu0
        %2260 = vmatprep.mubr.f32.mxu0 0.0
        %v2261 = vand.u32 %v2092, 4294901760
        %v2262 = vsub.f32 %v2092, %v2261
        %v2263 = vand.u32 %v2262, 4294901760
        %v2264 = vsub.f32 %v2262, %v2263
        %v2265 = vand.u32 %v2264, 4294901760
        %2266 = vmatmul.mubr.f32.gmra.mrb[0].mxu0 %v2265
        %v2267 = vpop.f32.mrb[0].mxu0
        %v2268 = vadd.f32 0.0, %v2267
        %v2269 = vpop.f32.mrb[0].mxu0
        %2270 = vmatprep.mubr.f32.mxu0 0.0
        %v2271 = vand.u32 %v2095, 4294901760
        %v2272 = vsub.f32 %v2095, %v2271
        %v2273 = vand.u32 %v2272, 4294901760
        %v2274 = vsub.f32 %v2272, %v2273
        %v2275 = vand.u32 %v2274, 4294901760
        %2276 = vmatmul.mubr.f32.gmra.mrb[0].mxu0 %v2275
        %v2277 = vpop.f32.mrb[0].mxu0
        %v2278 = vadd.f32 0.0, %v2277
        %v2279 = vpop.f32.mrb[0].mxu0
        %2280 = vmatprep.mubr.f32.mxu0 0.0
        %v2281 = vand.u32 %v2098, 4294901760
        %v2282 = vsub.f32 %v2098, %v2281
        %v2283 = vand.u32 %v2282, 4294901760
        %v2284 = vsub.f32 %v2282, %v2283
        %v2285 = vand.u32 %v2284, 4294901760
        %2286 = vmatmul.mubr.f32.gmra.mrb[0].mxu0 %v2285
        %v2287 = vpop.f32.mrb[0].mxu0
        %v2288 = vadd.f32 0.0, %v2287
        %v2289 = vpop.f32.mrb[0].mxu0
        %2290 = vmatprep.mubr.f32.mxu0 0.0
        %v2291 = vand.u32 %v2101, 4294901760
        %v2292 = vsub.f32 %v2101, %v2291
        %v2293 = vand.u32 %v2292, 4294901760
        %v2294 = vsub.f32 %v2292, %v2293
        %v2295 = vand.u32 %v2294, 4294901760
        %2296 = vmatmul.mubr.f32.gmra.mrb[0].mxu0 %v2295
        %v2297 = vpop.f32.mrb[0].mxu0
        %v2298 = vadd.f32 0.0, %v2297
        %v2299 = vpop.f32.mrb[0].mxu0
        %2300 = vmatprep.mubr.f32.mxu0 0.0
        %v2301 = vand.u32 %v2104, 4294901760
        %v2302 = vsub.f32 %v2104, %v2301
        %v2303 = vand.u32 %v2302, 4294901760
        %v2304 = vsub.f32 %v2302, %v2303
        %v2305 = vand.u32 %v2304, 4294901760
        %2306 = vmatmul.mubr.f32.gmra.mrb[0].mxu0 %v2305
        %v2307 = vpop.f32.mrb[0].mxu0
        %v2308 = vadd.f32 0.0, %v2307
        %v2309 = vpop.f32.mrb[0].mxu0
        %2310 = vmatprep.mubr.f32.mxu0 0.0
        %v2311 = vand.u32 %v2107, 4294901760
        %v2312 = vsub.f32 %v2107, %v2311
        %v2313 = vand.u32 %v2312, 4294901760
        %v2314 = vsub.f32 %v2312, %v2313
        %v2315 = vand.u32 %v2314, 4294901760
        %2316 = vmatmul.mubr.f32.gmra.mrb[0].mxu0 %v2315
        %v2317 = vpop.f32.mrb[0].mxu0
        %v2318 = vadd.f32 0.0, %v2317
        %v2319 = vpop.f32.mrb[0].mxu0
        %2320 = vmatprep.mubr.f32.mxu0 0.0
        %v2321 = vand.u32 %v2110, 4294901760
        %v2322 = vsub.f32 %v2110, %v2321
        %v2323 = vand.u32 %v2322, 4294901760
        %v2324 = vsub.f32 %v2322, %v2323
        %v2325 = vand.u32 %v2324, 4294901760
        %2326 = vmatmul.mubr.f32.gmra.mrb[0].mxu0 %v2325
        %v2327 = vpop.f32.mrb[0].mxu0
        %v2328 = vadd.f32 0.0, %v2327
        %v2329 = vpop.f32.mrb[0].mxu0
        %2330 = vmatprep.mubr.f32.mxu0 0.0
        %v2331 = vand.u32 %v2113, 4294901760
        %v2332 = vsub.f32 %v2113, %v2331
        %v2333 = vand.u32 %v2332, 4294901760
        %v2334 = vsub.f32 %v2332, %v2333
        %v2335 = vand.u32 %v2334, 4294901760
        %2336 = vmatmul.mubr.f32.gmra.mrb[0].mxu0 %v2335
        %v2337 = vpop.f32.mrb[0].mxu0
        %v2338 = vadd.f32 0.0, %v2337
        %v2339 = vpop.f32.mrb[0].mxu0
        %2340 = vdwg.mxu0
        %2341 = vmatprep.subr.mxu0 0.0
        %v2342 = vand.u32 %v309, 4294901760
        %v2343 = vsub.f32 %v309, %v2342
        %v2344 = vand.u32 %v2343, 4294901760
        %v2345 = vsub.f32 %v2343, %v2344
        %v2346 = vand.u32 %v2345, 4294901760
        %2347 = vmatpush1.msra.mxu0 %v2346
        %2348 = vmatprep.subr.mxu0 0.0
        %2349 = vmatpush1.msra.mxu0 0.0
        %2350 = vmatprep.subr.mxu0 0.0
        %2351 = vmatpush1.msra.mxu0 0.0
        %2352 = vmatprep.subr.mxu0 0.0
        %2353 = vmatpush1.msra.mxu0 0.0
        %2354 = vmatprep.subr.mxu0 0.0
        %2355 = vmatpush1.msra.mxu0 0.0
        %2356 = vmatprep.subr.mxu0 0.0
        %2357 = vmatpush1.msra.mxu0 0.0
        %2358 = vmatprep.subr.mxu0 0.0
        %2359 = vmatpush1.msra.mxu0 0.0
        %2360 = vmatprep.subr.mxu0 0.0
        %2361 = vmatpush1.msra.mxu0 0.0
        %2362 = vmatprep.subr.mxu0 0.0
        %2363 = vmatpush1.msra.mxu0 0.0
        %2364 = vmatprep.subr.mxu0 0.0
        %2365 = vmatpush1.msra.mxu0 0.0
        %2366 = vmatprep.subr.mxu0 0.0
        %2367 = vmatpush1.msra.mxu0 0.0
        %2368 = vmatprep.subr.mxu0 0.0
        %2369 = vmatpush1.msra.mxu0 0.0
        %2370 = vmatprep.subr.mxu0 0.0
        %2371 = vmatpush1.msra.mxu0 0.0
        %2372 = vmatprep.subr.mxu0 0.0
        %2373 = vmatpush1.msra.mxu0 0.0
        %2374 = vmatprep.subr.mxu0 0.0
        %2375 = vmatpush1.msra.mxu0 0.0
        %2376 = vmatprep.subr.mxu0 0.0
        %2377 = vmatpush1.msra.mxu0 0.0
        %2378 = vmatprep.subr.mxu0 0.0
        %2379 = vmatpush1.msra.mxu0 0.0
        %2380 = vmatprep.subr.mxu0 0.0
        %2381 = vmatpush1.msra.mxu0 0.0
        %2382 = vmatprep.subr.mxu0 0.0
        %2383 = vmatpush1.msra.mxu0 0.0
        %2384 = vmatprep.subr.mxu0 0.0
        %2385 = vmatpush1.msra.mxu0 0.0
        %2386 = vmatprep.subr.mxu0 0.0
        %2387 = vmatpush1.msra.mxu0 0.0
        %2388 = vmatprep.subr.mxu0 0.0
        %2389 = vmatpush1.msra.mxu0 0.0
        %2390 = vmatprep.subr.mxu0 0.0
        %2391 = vmatpush1.msra.mxu0 0.0
        %2392 = vmatprep.subr.mxu0 0.0
        %2393 = vmatpush1.msra.mxu0 0.0
        %2394 = vmatprep.subr.mxu0 0.0
        %2395 = vmatpush1.msra.mxu0 0.0
        %2396 = vmatprep.subr.mxu0 0.0
        %2397 = vmatpush1.msra.mxu0 0.0
        %2398 = vmatprep.subr.mxu0 0.0
        %2399 = vmatpush1.msra.mxu0 0.0
        %2400 = vmatprep.subr.mxu0 0.0
        %2401 = vmatpush1.msra.mxu0 0.0
        %2402 = vmatprep.subr.mxu0 0.0
        %2403 = vmatpush1.msra.mxu0 0.0
        %2404 = vmatprep.subr.mxu0 0.0
        %2405 = vmatpush1.msra.mxu0 0.0
        %2406 = vmatprep.subr.mxu0 0.0
        %2407 = vmatpush1.msra.mxu0 0.0
        %2408 = vmatprep.subr.mxu0 0.0
        %2409 = vmatpush1.msra.mxu0 0.0
        %2410 = vmatprep.mubr.f32.mxu0 0.0
        %v2411 = vand.u32 %v2068, 4294901760
        %2412 = vmatmul.mubr.f32.gmra.mrb[0].mxu0 %v2411
        %v2413 = vpop.f32.mrb[0].mxu0
        %v2414 = vadd.f32 %v2188, %v2413
        %v2415 = vpop.f32.mrb[0].mxu0
        %2416 = vmatprep.mubr.f32.mxu0 0.0
        %v2417 = vand.u32 %v2071, 4294901760
        %2418 = vmatmul.mubr.f32.gmra.mrb[0].mxu0 %v2417
        %v2419 = vpop.f32.mrb[0].mxu0
        %v2420 = vadd.f32 %v2198, %v2419
        %v2421 = vpop.f32.mrb[0].mxu0
        %2422 = vmatprep.mubr.f32.mxu0 0.0
        %v2423 = vand.u32 %v2074, 4294901760
        %2424 = vmatmul.mubr.f32.gmra.mrb[0].mxu0 %v2423
        %v2425 = vpop.f32.mrb[0].mxu0
        %v2426 = vadd.f32 %v2208, %v2425
        %v2427 = vpop.f32.mrb[0].mxu0
        %2428 = vmatprep.mubr.f32.mxu0 0.0
        %v2429 = vand.u32 %v2077, 4294901760
        %2430 = vmatmul.mubr.f32.gmra.mrb[0].mxu0 %v2429
        %v2431 = vpop.f32.mrb[0].mxu0
        %v2432 = vadd.f32 %v2218, %v2431
        %v2433 = vpop.f32.mrb[0].mxu0
        %2434 = vmatprep.mubr.f32.mxu0 0.0
        %v2435 = vand.u32 %v2080, 4294901760
        %2436 = vmatmul.mubr.f32.gmra.mrb[0].mxu0 %v2435
        %v2437 = vpop.f32.mrb[0].mxu0
        %v2438 = vadd.f32 %v2228, %v2437
        %v2439 = vpop.f32.mrb[0].mxu0
        %2440 = vmatprep.mubr.f32.mxu0 0.0
        %v2441 = vand.u32 %v2083, 4294901760
        %2442 = vmatmul.mubr.f32.gmra.mrb[0].mxu0 %v2441
        %v2443 = vpop.f32.mrb[0].mxu0
        %v2444 = vadd.f32 %v2238, %v2443
        %v2445 = vpop.f32.mrb[0].mxu0
        %2446 = vmatprep.mubr.f32.mxu0 0.0
        %v2447 = vand.u32 %v2086, 4294901760
        %2448 = vmatmul.mubr.f32.gmra.mrb[0].mxu0 %v2447
        %v2449 = vpop.f32.mrb[0].mxu0
        %v2450 = vadd.f32 %v2248, %v2449
        %v2451 = vpop.f32.mrb[0].mxu0
        %2452 = vmatprep.mubr.f32.mxu0 0.0
        %v2453 = vand.u32 %v2089, 4294901760
        %2454 = vmatmul.mubr.f32.gmra.mrb[0].mxu0 %v2453
        %v2455 = vpop.f32.mrb[0].mxu0
        %v2456 = vadd.f32 %v2258, %v2455
        %v2457 = vpop.f32.mrb[0].mxu0
        %2458 = vmatprep.mubr.f32.mxu0 0.0
        %v2459 = vand.u32 %v2092, 4294901760
        %2460 = vmatmul.mubr.f32.gmra.mrb[0].mxu0 %v2459
        %v2461 = vpop.f32.mrb[0].mxu0
        %v2462 = vadd.f32 %v2268, %v2461
        %v2463 = vpop.f32.mrb[0].mxu0
        %2464 = vmatprep.mubr.f32.mxu0 0.0
        %v2465 = vand.u32 %v2095, 4294901760
        %2466 = vmatmul.mubr.f32.gmra.mrb[0].mxu0 %v2465
        %v2467 = vpop.f32.mrb[0].mxu0
        %v2468 = vadd.f32 %v2278, %v2467
        %v2469 = vpop.f32.mrb[0].mxu0
        %2470 = vmatprep.mubr.f32.mxu0 0.0
        %v2471 = vand.u32 %v2098, 4294901760
        %2472 = vmatmul.mubr.f32.gmra.mrb[0].mxu0 %v2471
        %v2473 = vpop.f32.mrb[0].mxu0
        %v2474 = vadd.f32 %v2288, %v2473
        %v2475 = vpop.f32.mrb[0].mxu0
        %2476 = vmatprep.mubr.f32.mxu0 0.0
        %v2477 = vand.u32 %v2101, 4294901760
        %2478 = vmatmul.mubr.f32.gmra.mrb[0].mxu0 %v2477
        %v2479 = vpop.f32.mrb[0].mxu0
        %v2480 = vadd.f32 %v2298, %v2479
        %v2481 = vpop.f32.mrb[0].mxu0
        %2482 = vmatprep.mubr.f32.mxu0 0.0
        %v2483 = vand.u32 %v2104, 4294901760
        %2484 = vmatmul.mubr.f32.gmra.mrb[0].mxu0 %v2483
        %v2485 = vpop.f32.mrb[0].mxu0
        %v2486 = vadd.f32 %v2308, %v2485
        %v2487 = vpop.f32.mrb[0].mxu0
        %2488 = vmatprep.mubr.f32.mxu0 0.0
        %v2489 = vand.u32 %v2107, 4294901760
        %2490 = vmatmul.mubr.f32.gmra.mrb[0].mxu0 %v2489
        %v2491 = vpop.f32.mrb[0].mxu0
        %v2492 = vadd.f32 %v2318, %v2491
        %v2493 = vpop.f32.mrb[0].mxu0
        %2494 = vmatprep.mubr.f32.mxu0 0.0
        %v2495 = vand.u32 %v2110, 4294901760
        %2496 = vmatmul.mubr.f32.gmra.mrb[0].mxu0 %v2495
        %v2497 = vpop.f32.mrb[0].mxu0
        %v2498 = vadd.f32 %v2328, %v2497
        %v2499 = vpop.f32.mrb[0].mxu0
        %2500 = vmatprep.mubr.f32.mxu0 0.0
        %v2501 = vand.u32 %v2113, 4294901760
        %2502 = vmatmul.mubr.f32.gmra.mrb[0].mxu0 %v2501
        %v2503 = vpop.f32.mrb[0].mxu0
        %v2504 = vadd.f32 %v2338, %v2503
        %v2505 = vpop.f32.mrb[0].mxu0
        %2506 = vdwg.mxu0
        %2507 = vmatprep.subr.mxu0 0.0
        %v2508 = vand.u32 %v309, 4294901760
        %v2509 = vsub.f32 %v309, %v2508
        %2510 = vmatpush1.msra.mxu0 %v2509
        %2511 = vmatprep.subr.mxu0 0.0
        %2512 = vmatpush1.msra.mxu0 0.0
        %2513 = vmatprep.subr.mxu0 0.0
        %2514 = vmatpush1.msra.mxu0 0.0
        %2515 = vmatprep.subr.mxu0 0.0
        %2516 = vmatpush1.msra.mxu0 0.0
        %2517 = vmatprep.subr.mxu0 0.0
        %2518 = vmatpush1.msra.mxu0 0.0
        %2519 = vmatprep.subr.mxu0 0.0
        %2520 = vmatpush1.msra.mxu0 0.0
        %2521 = vmatprep.subr.mxu0 0.0
        %2522 = vmatpush1.msra.mxu0 0.0
        %2523 = vmatprep.subr.mxu0 0.0
        %2524 = vmatpush1.msra.mxu0 0.0
        %2525 = vmatprep.subr.mxu0 0.0
        %2526 = vmatpush1.msra.mxu0 0.0
        %2527 = vmatprep.subr.mxu0 0.0
        %2528 = vmatpush1.msra.mxu0 0.0
        %2529 = vmatprep.subr.mxu0 0.0
        %2530 = vmatpush1.msra.mxu0 0.0
        %2531 = vmatprep.subr.mxu0 0.0
        %2532 = vmatpush1.msra.mxu0 0.0
        %2533 = vmatprep.subr.mxu0 0.0
        %2534 = vmatpush1.msra.mxu0 0.0
        %2535 = vmatprep.subr.mxu0 0.0
        %2536 = vmatpush1.msra.mxu0 0.0
        %2537 = vmatprep.subr.mxu0 0.0
        %2538 = vmatpush1.msra.mxu0 0.0
        %2539 = vmatprep.subr.mxu0 0.0
        %2540 = vmatpush1.msra.mxu0 0.0
        %2541 = vmatprep.subr.mxu0 0.0
        %2542 = vmatpush1.msra.mxu0 0.0
        %2543 = vmatprep.subr.mxu0 0.0
        %2544 = vmatpush1.msra.mxu0 0.0
        %2545 = vmatprep.subr.mxu0 0.0
        %2546 = vmatpush1.msra.mxu0 0.0
        %2547 = vmatprep.subr.mxu0 0.0
        %2548 = vmatpush1.msra.mxu0 0.0
        %2549 = vmatprep.subr.mxu0 0.0
        %2550 = vmatpush1.msra.mxu0 0.0
        %2551 = vmatprep.subr.mxu0 0.0
        %2552 = vmatpush1.msra.mxu0 0.0
        %2553 = vmatprep.subr.mxu0 0.0
        %2554 = vmatpush1.msra.mxu0 0.0
        %2555 = vmatprep.subr.mxu0 0.0
        %2556 = vmatpush1.msra.mxu0 0.0
        %2557 = vmatprep.subr.mxu0 0.0
        %2558 = vmatpush1.msra.mxu0 0.0
        %2559 = vmatprep.subr.mxu0 0.0
        %2560 = vmatpush1.msra.mxu0 0.0
        %2561 = vmatprep.subr.mxu0 0.0
        %2562 = vmatpush1.msra.mxu0 0.0
        %2563 = vmatprep.subr.mxu0 0.0
        %2564 = vmatpush1.msra.mxu0 0.0
        %2565 = vmatprep.subr.mxu0 0.0
        %2566 = vmatpush1.msra.mxu0 0.0
        %2567 = vmatprep.subr.mxu0 0.0
        %2568 = vmatpush1.msra.mxu0 0.0
        %2569 = vmatprep.subr.mxu0 0.0
        %2570 = vmatpush1.msra.mxu0 0.0
        %2571 = vmatprep.subr.mxu0 0.0
        %2572 = vmatpush1.msra.mxu0 0.0
        %2573 = vmatprep.mubr.f32.mxu0 0.0
        %v2574 = vand.u32 %v2068, 4294901760
        %v2575 = vsub.f32 %v2068, %v2574
        %2576 = vmatmul.mubr.f32.gmra.mrb[0].mxu0 %v2575
        %v2577 = vpop.f32.mrb[0].mxu0
        %v2578 = vadd.f32 %v2414, %v2577
        %v2579 = vpop.f32.mrb[0].mxu0
        %2580 = vmatprep.mubr.f32.mxu0 0.0
        %v2581 = vand.u32 %v2071, 4294901760
        %v2582 = vsub.f32 %v2071, %v2581
        %2583 = vmatmul.mubr.f32.gmra.mrb[0].mxu0 %v2582
        %v2584 = vpop.f32.mrb[0].mxu0
        %v2585 = vadd.f32 %v2420, %v2584
        %v2586 = vpop.f32.mrb[0].mxu0
        %2587 = vmatprep.mubr.f32.mxu0 0.0
        %v2588 = vand.u32 %v2074, 4294901760
        %v2589 = vsub.f32 %v2074, %v2588
        %2590 = vmatmul.mubr.f32.gmra.mrb[0].mxu0 %v2589
        %v2591 = vpop.f32.mrb[0].mxu0
        %v2592 = vadd.f32 %v2426, %v2591
        %v2593 = vpop.f32.mrb[0].mxu0
        %2594 = vmatprep.mubr.f32.mxu0 0.0
        %v2595 = vand.u32 %v2077, 4294901760
        %v2596 = vsub.f32 %v2077, %v2595
        %2597 = vmatmul.mubr.f32.gmra.mrb[0].mxu0 %v2596
        %v2598 = vpop.f32.mrb[0].mxu0
        %v2599 = vadd.f32 %v2432, %v2598
        %v2600 = vpop.f32.mrb[0].mxu0
        %2601 = vmatprep.mubr.f32.mxu0 0.0
        %v2602 = vand.u32 %v2080, 4294901760
        %v2603 = vsub.f32 %v2080, %v2602
        %2604 = vmatmul.mubr.f32.gmra.mrb[0].mxu0 %v2603
        %v2605 = vpop.f32.mrb[0].mxu0
        %v2606 = vadd.f32 %v2438, %v2605
        %v2607 = vpop.f32.mrb[0].mxu0
        %2608 = vmatprep.mubr.f32.mxu0 0.0
        %v2609 = vand.u32 %v2083, 4294901760
        %v2610 = vsub.f32 %v2083, %v2609
        %2611 = vmatmul.mubr.f32.gmra.mrb[0].mxu0 %v2610
        %v2612 = vpop.f32.mrb[0].mxu0
        %v2613 = vadd.f32 %v2444, %v2612
        %v2614 = vpop.f32.mrb[0].mxu0
        %2615 = vmatprep.mubr.f32.mxu0 0.0
        %v2616 = vand.u32 %v2086, 4294901760
        %v2617 = vsub.f32 %v2086, %v2616
        %2618 = vmatmul.mubr.f32.gmra.mrb[0].mxu0 %v2617
        %v2619 = vpop.f32.mrb[0].mxu0
        %v2620 = vadd.f32 %v2450, %v2619
        %v2621 = vpop.f32.mrb[0].mxu0
        %2622 = vmatprep.mubr.f32.mxu0 0.0
        %v2623 = vand.u32 %v2089, 4294901760
        %v2624 = vsub.f32 %v2089, %v2623
        %2625 = vmatmul.mubr.f32.gmra.mrb[0].mxu0 %v2624
        %v2626 = vpop.f32.mrb[0].mxu0
        %v2627 = vadd.f32 %v2456, %v2626
        %v2628 = vpop.f32.mrb[0].mxu0
        %2629 = vmatprep.mubr.f32.mxu0 0.0
        %v2630 = vand.u32 %v2092, 4294901760
        %v2631 = vsub.f32 %v2092, %v2630
        %2632 = vmatmul.mubr.f32.gmra.mrb[0].mxu0 %v2631
        %v2633 = vpop.f32.mrb[0].mxu0
        %v2634 = vadd.f32 %v2462, %v2633
        %v2635 = vpop.f32.mrb[0].mxu0
        %2636 = vmatprep.mubr.f32.mxu0 0.0
        %v2637 = vand.u32 %v2095, 4294901760
        %v2638 = vsub.f32 %v2095, %v2637
        %2639 = vmatmul.mubr.f32.gmra.mrb[0].mxu0 %v2638
        %v2640 = vpop.f32.mrb[0].mxu0
        %v2641 = vadd.f32 %v2468, %v2640
        %v2642 = vpop.f32.mrb[0].mxu0
        %2643 = vmatprep.mubr.f32.mxu0 0.0
        %v2644 = vand.u32 %v2098, 4294901760
        %v2645 = vsub.f32 %v2098, %v2644
        %2646 = vmatmul.mubr.f32.gmra.mrb[0].mxu0 %v2645
        %v2647 = vpop.f32.mrb[0].mxu0
        %v2648 = vadd.f32 %v2474, %v2647
        %v2649 = vpop.f32.mrb[0].mxu0
        %2650 = vmatprep.mubr.f32.mxu0 0.0
        %v2651 = vand.u32 %v2101, 4294901760
        %v2652 = vsub.f32 %v2101, %v2651
        %2653 = vmatmul.mubr.f32.gmra.mrb[0].mxu0 %v2652
        %v2654 = vpop.f32.mrb[0].mxu0
        %v2655 = vadd.f32 %v2480, %v2654
        %v2656 = vpop.f32.mrb[0].mxu0
        %2657 = vmatprep.mubr.f32.mxu0 0.0
        %v2658 = vand.u32 %v2104, 4294901760
        %v2659 = vsub.f32 %v2104, %v2658
        %2660 = vmatmul.mubr.f32.gmra.mrb[0].mxu0 %v2659
        %v2661 = vpop.f32.mrb[0].mxu0
        %v2662 = vadd.f32 %v2486, %v2661
        %v2663 = vpop.f32.mrb[0].mxu0
        %2664 = vmatprep.mubr.f32.mxu0 0.0
        %v2665 = vand.u32 %v2107, 4294901760
        %v2666 = vsub.f32 %v2107, %v2665
        %2667 = vmatmul.mubr.f32.gmra.mrb[0].mxu0 %v2666
        %v2668 = vpop.f32.mrb[0].mxu0
        %v2669 = vadd.f32 %v2492, %v2668
        %v2670 = vpop.f32.mrb[0].mxu0
        %2671 = vmatprep.mubr.f32.mxu0 0.0
        %v2672 = vand.u32 %v2110, 4294901760
        %v2673 = vsub.f32 %v2110, %v2672
        %2674 = vmatmul.mubr.f32.gmra.mrb[0].mxu0 %v2673
        %v2675 = vpop.f32.mrb[0].mxu0
        %v2676 = vadd.f32 %v2498, %v2675
        %v2677 = vpop.f32.mrb[0].mxu0
        %2678 = vmatprep.mubr.f32.mxu0 0.0
        %v2679 = vand.u32 %v2113, 4294901760
        %v2680 = vsub.f32 %v2113, %v2679
        %2681 = vmatmul.mubr.f32.gmra.mrb[0].mxu0 %v2680
        %v2682 = vpop.f32.mrb[0].mxu0
        %v2683 = vadd.f32 %v2504, %v2682
        %v2684 = vpop.f32.mrb[0].mxu0
        %2685 = vdwg.mxu0
        %2686 = vmatprep.subr.mxu0 0.0
        %v2687 = vand.u32 %v309, 4294901760
        %2688 = vmatpush1.msra.mxu0 %v2687
        %2689 = vmatprep.subr.mxu0 0.0
        %2690 = vmatpush1.msra.mxu0 0.0
        %2691 = vmatprep.subr.mxu0 0.0
        %2692 = vmatpush1.msra.mxu0 0.0
        %2693 = vmatprep.subr.mxu0 0.0
        %2694 = vmatpush1.msra.mxu0 0.0
        %2695 = vmatprep.subr.mxu0 0.0
        %2696 = vmatpush1.msra.mxu0 0.0
        %2697 = vmatprep.subr.mxu0 0.0
        %2698 = vmatpush1.msra.mxu0 0.0
        %2699 = vmatprep.subr.mxu0 0.0
        %2700 = vmatpush1.msra.mxu0 0.0
        %2701 = vmatprep.subr.mxu0 0.0
        %2702 = vmatpush1.msra.mxu0 0.0
        %2703 = vmatprep.subr.mxu0 0.0
        %2704 = vmatpush1.msra.mxu0 0.0
        %2705 = vmatprep.subr.mxu0 0.0
        %2706 = vmatpush1.msra.mxu0 0.0
        %2707 = vmatprep.subr.mxu0 0.0
        %2708 = vmatpush1.msra.mxu0 0.0
        %2709 = vmatprep.subr.mxu0 0.0
        %2710 = vmatpush1.msra.mxu0 0.0
        %2711 = vmatprep.subr.mxu0 0.0
        %2712 = vmatpush1.msra.mxu0 0.0
        %2713 = vmatprep.subr.mxu0 0.0
        %2714 = vmatpush1.msra.mxu0 0.0
        %2715 = vmatprep.subr.mxu0 0.0
        %2716 = vmatpush1.msra.mxu0 0.0
        %2717 = vmatprep.subr.mxu0 0.0
        %2718 = vmatpush1.msra.mxu0 0.0
        %2719 = vmatprep.subr.mxu0 0.0
        %2720 = vmatpush1.msra.mxu0 0.0
        %2721 = vmatprep.subr.mxu0 0.0
        %2722 = vmatpush1.msra.mxu0 0.0
        %2723 = vmatprep.subr.mxu0 0.0
        %2724 = vmatpush1.msra.mxu0 0.0
        %2725 = vmatprep.subr.mxu0 0.0
        %2726 = vmatpush1.msra.mxu0 0.0
        %2727 = vmatprep.subr.mxu0 0.0
        %2728 = vmatpush1.msra.mxu0 0.0
        %2729 = vmatprep.subr.mxu0 0.0
        %2730 = vmatpush1.msra.mxu0 0.0
        %2731 = vmatprep.subr.mxu0 0.0
        %2732 = vmatpush1.msra.mxu0 0.0
        %2733 = vmatprep.subr.mxu0 0.0
        %2734 = vmatpush1.msra.mxu0 0.0
        %2735 = vmatprep.subr.mxu0 0.0
        %2736 = vmatpush1.msra.mxu0 0.0
        %2737 = vmatprep.subr.mxu0 0.0
        %2738 = vmatpush1.msra.mxu0 0.0
        %2739 = vmatprep.subr.mxu0 0.0
        %2740 = vmatpush1.msra.mxu0 0.0
        %2741 = vmatprep.subr.mxu0 0.0
        %2742 = vmatpush1.msra.mxu0 0.0
        %2743 = vmatprep.subr.mxu0 0.0
        %2744 = vmatpush1.msra.mxu0 0.0
        %2745 = vmatprep.subr.mxu0 0.0
        %2746 = vmatpush1.msra.mxu0 0.0
        %2747 = vmatprep.subr.mxu0 0.0
        %2748 = vmatpush1.msra.mxu0 0.0
        %2749 = vmatprep.subr.mxu0 0.0
        %2750 = vmatpush1.msra.mxu0 0.0
        %2751 = vmatprep.mubr.f32.mxu0 0.0
        %v2752 = vand.u32 %v2068, 4294901760
        %v2753 = vsub.f32 %v2068, %v2752
        %v2754 = vand.u32 %v2753, 4294901760
        %2755 = vmatmul.mubr.f32.gmra.mrb[0].mxu0 %v2754
        %v2756 = vpop.f32.mrb[0].mxu0
        %v2757 = vadd.f32 %v2578, %v2756
        %v2758 = vpop.f32.mrb[0].mxu0
        %2759 = vmatprep.mubr.f32.mxu0 0.0
        %v2760 = vand.u32 %v2071, 4294901760
        %v2761 = vsub.f32 %v2071, %v2760
        %v2762 = vand.u32 %v2761, 4294901760
        %2763 = vmatmul.mubr.f32.gmra.mrb[0].mxu0 %v2762
        %v2764 = vpop.f32.mrb[0].mxu0
        %v2765 = vadd.f32 %v2585, %v2764
        %v2766 = vpop.f32.mrb[0].mxu0
        %2767 = vmatprep.mubr.f32.mxu0 0.0
        %v2768 = vand.u32 %v2074, 4294901760
        %v2769 = vsub.f32 %v2074, %v2768
        %v2770 = vand.u32 %v2769, 4294901760
        %2771 = vmatmul.mubr.f32.gmra.mrb[0].mxu0 %v2770
        %v2772 = vpop.f32.mrb[0].mxu0
        %v2773 = vadd.f32 %v2592, %v2772
        %v2774 = vpop.f32.mrb[0].mxu0
        %2775 = vmatprep.mubr.f32.mxu0 0.0
        %v2776 = vand.u32 %v2077, 4294901760
        %v2777 = vsub.f32 %v2077, %v2776
        %v2778 = vand.u32 %v2777, 4294901760
        %2779 = vmatmul.mubr.f32.gmra.mrb[0].mxu0 %v2778
        %v2780 = vpop.f32.mrb[0].mxu0
        %v2781 = vadd.f32 %v2599, %v2780
        %v2782 = vpop.f32.mrb[0].mxu0
        %2783 = vmatprep.mubr.f32.mxu0 0.0
        %v2784 = vand.u32 %v2080, 4294901760
        %v2785 = vsub.f32 %v2080, %v2784
        %v2786 = vand.u32 %v2785, 4294901760
        %2787 = vmatmul.mubr.f32.gmra.mrb[0].mxu0 %v2786
        %v2788 = vpop.f32.mrb[0].mxu0
        %v2789 = vadd.f32 %v2606, %v2788
        %v2790 = vpop.f32.mrb[0].mxu0
        %2791 = vmatprep.mubr.f32.mxu0 0.0
        %v2792 = vand.u32 %v2083, 4294901760
        %v2793 = vsub.f32 %v2083, %v2792
        %v2794 = vand.u32 %v2793, 4294901760
        %2795 = vmatmul.mubr.f32.gmra.mrb[0].mxu0 %v2794
        %v2796 = vpop.f32.mrb[0].mxu0
        %v2797 = vadd.f32 %v2613, %v2796
        %v2798 = vpop.f32.mrb[0].mxu0
        %2799 = vmatprep.mubr.f32.mxu0 0.0
        %v2800 = vand.u32 %v2086, 4294901760
        %v2801 = vsub.f32 %v2086, %v2800
        %v2802 = vand.u32 %v2801, 4294901760
        %2803 = vmatmul.mubr.f32.gmra.mrb[0].mxu0 %v2802
        %v2804 = vpop.f32.mrb[0].mxu0
        %v2805 = vadd.f32 %v2620, %v2804
        %v2806 = vpop.f32.mrb[0].mxu0
        %2807 = vmatprep.mubr.f32.mxu0 0.0
        %v2808 = vand.u32 %v2089, 4294901760
        %v2809 = vsub.f32 %v2089, %v2808
        %v2810 = vand.u32 %v2809, 4294901760
        %2811 = vmatmul.mubr.f32.gmra.mrb[0].mxu0 %v2810
        %v2812 = vpop.f32.mrb[0].mxu0
        %v2813 = vadd.f32 %v2627, %v2812
        %v2814 = vpop.f32.mrb[0].mxu0
        %2815 = vmatprep.mubr.f32.mxu0 0.0
        %v2816 = vand.u32 %v2092, 4294901760
        %v2817 = vsub.f32 %v2092, %v2816
        %v2818 = vand.u32 %v2817, 4294901760
        %2819 = vmatmul.mubr.f32.gmra.mrb[0].mxu0 %v2818
        %v2820 = vpop.f32.mrb[0].mxu0
        %v2821 = vadd.f32 %v2634, %v2820
        %v2822 = vpop.f32.mrb[0].mxu0
        %2823 = vmatprep.mubr.f32.mxu0 0.0
        %v2824 = vand.u32 %v2095, 4294901760
        %v2825 = vsub.f32 %v2095, %v2824
        %v2826 = vand.u32 %v2825, 4294901760
        %2827 = vmatmul.mubr.f32.gmra.mrb[0].mxu0 %v2826
        %v2828 = vpop.f32.mrb[0].mxu0
        %v2829 = vadd.f32 %v2641, %v2828
        %v2830 = vpop.f32.mrb[0].mxu0
        %2831 = vmatprep.mubr.f32.mxu0 0.0
        %v2832 = vand.u32 %v2098, 4294901760
        %v2833 = vsub.f32 %v2098, %v2832
        %v2834 = vand.u32 %v2833, 4294901760
        %2835 = vmatmul.mubr.f32.gmra.mrb[0].mxu0 %v2834
        %v2836 = vpop.f32.mrb[0].mxu0
        %v2837 = vadd.f32 %v2648, %v2836
        %v2838 = vpop.f32.mrb[0].mxu0
        %2839 = vmatprep.mubr.f32.mxu0 0.0
        %v2840 = vand.u32 %v2101, 4294901760
        %v2841 = vsub.f32 %v2101, %v2840
        %v2842 = vand.u32 %v2841, 4294901760
        %2843 = vmatmul.mubr.f32.gmra.mrb[0].mxu0 %v2842
        %v2844 = vpop.f32.mrb[0].mxu0
        %v2845 = vadd.f32 %v2655, %v2844
        %v2846 = vpop.f32.mrb[0].mxu0
        %2847 = vmatprep.mubr.f32.mxu0 0.0
        %v2848 = vand.u32 %v2104, 4294901760
        %v2849 = vsub.f32 %v2104, %v2848
        %v2850 = vand.u32 %v2849, 4294901760
        %2851 = vmatmul.mubr.f32.gmra.mrb[0].mxu0 %v2850
        %v2852 = vpop.f32.mrb[0].mxu0
        %v2853 = vadd.f32 %v2662, %v2852
        %v2854 = vpop.f32.mrb[0].mxu0
        %2855 = vmatprep.mubr.f32.mxu0 0.0
        %v2856 = vand.u32 %v2107, 4294901760
        %v2857 = vsub.f32 %v2107, %v2856
        %v2858 = vand.u32 %v2857, 4294901760
        %2859 = vmatmul.mubr.f32.gmra.mrb[0].mxu0 %v2858
        %v2860 = vpop.f32.mrb[0].mxu0
        %v2861 = vadd.f32 %v2669, %v2860
        %v2862 = vpop.f32.mrb[0].mxu0
        %2863 = vmatprep.mubr.f32.mxu0 0.0
        %v2864 = vand.u32 %v2110, 4294901760
        %v2865 = vsub.f32 %v2110, %v2864
        %v2866 = vand.u32 %v2865, 4294901760
        %2867 = vmatmul.mubr.f32.gmra.mrb[0].mxu0 %v2866
        %v2868 = vpop.f32.mrb[0].mxu0
        %v2869 = vadd.f32 %v2676, %v2868
        %v2870 = vpop.f32.mrb[0].mxu0
        %2871 = vmatprep.mubr.f32.mxu0 0.0
        %v2872 = vand.u32 %v2113, 4294901760
        %v2873 = vsub.f32 %v2113, %v2872
        %v2874 = vand.u32 %v2873, 4294901760
        %2875 = vmatmul.mubr.f32.gmra.mrb[0].mxu0 %v2874
        %v2876 = vpop.f32.mrb[0].mxu0
        %v2877 = vadd.f32 %v2683, %v2876
        %v2878 = vpop.f32.mrb[0].mxu0
        %2879 = vdwg.mxu0
        %2880 = vmatprep.subr.mxu0 0.0
        %v2881 = vand.u32 %v309, 4294901760
        %v2882 = vsub.f32 %v309, %v2881
        %v2883 = vand.u32 %v2882, 4294901760
        %2884 = vmatpush1.msra.mxu0 %v2883
        %2885 = vmatprep.subr.mxu0 0.0
        %2886 = vmatpush1.msra.mxu0 0.0
        %2887 = vmatprep.subr.mxu0 0.0
        %2888 = vmatpush1.msra.mxu0 0.0
        %2889 = vmatprep.subr.mxu0 0.0
        %2890 = vmatpush1.msra.mxu0 0.0
        %2891 = vmatprep.subr.mxu0 0.0
        %2892 = vmatpush1.msra.mxu0 0.0
        %2893 = vmatprep.subr.mxu0 0.0
        %2894 = vmatpush1.msra.mxu0 0.0
        %2895 = vmatprep.subr.mxu0 0.0
        %2896 = vmatpush1.msra.mxu0 0.0
        %2897 = vmatprep.subr.mxu0 0.0
        %2898 = vmatpush1.msra.mxu0 0.0
        %2899 = vmatprep.subr.mxu0 0.0
        %2900 = vmatpush1.msra.mxu0 0.0
        %2901 = vmatprep.subr.mxu0 0.0
        %2902 = vmatpush1.msra.mxu0 0.0
        %2903 = vmatprep.subr.mxu0 0.0
        %2904 = vmatpush1.msra.mxu0 0.0
        %2905 = vmatprep.subr.mxu0 0.0
        %2906 = vmatpush1.msra.mxu0 0.0
        %2907 = vmatprep.subr.mxu0 0.0
        %2908 = vmatpush1.msra.mxu0 0.0
        %2909 = vmatprep.subr.mxu0 0.0
        %2910 = vmatpush1.msra.mxu0 0.0
        %2911 = vmatprep.subr.mxu0 0.0
        %2912 = vmatpush1.msra.mxu0 0.0
        %2913 = vmatprep.subr.mxu0 0.0
        %2914 = vmatpush1.msra.mxu0 0.0
        %2915 = vmatprep.subr.mxu0 0.0
        %2916 = vmatpush1.msra.mxu0 0.0
        %2917 = vmatprep.subr.mxu0 0.0
        %2918 = vmatpush1.msra.mxu0 0.0
        %2919 = vmatprep.subr.mxu0 0.0
        %2920 = vmatpush1.msra.mxu0 0.0
        %2921 = vmatprep.subr.mxu0 0.0
        %2922 = vmatpush1.msra.mxu0 0.0
        %2923 = vmatprep.subr.mxu0 0.0
        %2924 = vmatpush1.msra.mxu0 0.0
        %2925 = vmatprep.subr.mxu0 0.0
        %2926 = vmatpush1.msra.mxu0 0.0
        %2927 = vmatprep.subr.mxu0 0.0
        %2928 = vmatpush1.msra.mxu0 0.0
        %2929 = vmatprep.subr.mxu0 0.0
        %2930 = vmatpush1.msra.mxu0 0.0
        %2931 = vmatprep.subr.mxu0 0.0
        %2932 = vmatpush1.msra.mxu0 0.0
        %2933 = vmatprep.subr.mxu0 0.0
        %2934 = vmatpush1.msra.mxu0 0.0
        %2935 = vmatprep.subr.mxu0 0.0
        %2936 = vmatpush1.msra.mxu0 0.0
        %2937 = vmatprep.subr.mxu0 0.0
        %2938 = vmatpush1.msra.mxu0 0.0
        %2939 = vmatprep.subr.mxu0 0.0
        %2940 = vmatpush1.msra.mxu0 0.0
        %2941 = vmatprep.subr.mxu0 0.0
        %2942 = vmatpush1.msra.mxu0 0.0
        %2943 = vmatprep.subr.mxu0 0.0
        %2944 = vmatpush1.msra.mxu0 0.0
        %2945 = vmatprep.subr.mxu0 0.0
        %2946 = vmatpush1.msra.mxu0 0.0
        %2947 = vmatprep.mubr.f32.mxu0 0.0
        %v2948 = vand.u32 %v2068, 4294901760
        %2949 = vmatmul.mubr.f32.gmra.mrb[0].mxu0 %v2948
        %v2950 = vpop.f32.mrb[0].mxu0
        %v2951 = vadd.f32 %v2757, %v2950
        %v2952 = vpop.f32.mrb[0].mxu0
        %2953 = vmatprep.mubr.f32.mxu0 0.0
        %v2954 = vand.u32 %v2071, 4294901760
        %2955 = vmatmul.mubr.f32.gmra.mrb[0].mxu0 %v2954
        %v2956 = vpop.f32.mrb[0].mxu0
        %v2957 = vadd.f32 %v2765, %v2956
        %v2958 = vpop.f32.mrb[0].mxu0
        %2959 = vmatprep.mubr.f32.mxu0 0.0
        %v2960 = vand.u32 %v2074, 4294901760
        %2961 = vmatmul.mubr.f32.gmra.mrb[0].mxu0 %v2960
        %v2962 = vpop.f32.mrb[0].mxu0
        %v2963 = vadd.f32 %v2773, %v2962
        %v2964 = vpop.f32.mrb[0].mxu0
        %2965 = vmatprep.mubr.f32.mxu0 0.0
        %v2966 = vand.u32 %v2077, 4294901760
        %2967 = vmatmul.mubr.f32.gmra.mrb[0].mxu0 %v2966
        %v2968 = vpop.f32.mrb[0].mxu0
        %v2969 = vadd.f32 %v2781, %v2968
        %v2970 = vpop.f32.mrb[0].mxu0
        %2971 = vmatprep.mubr.f32.mxu0 0.0
        %v2972 = vand.u32 %v2080, 4294901760
        %2973 = vmatmul.mubr.f32.gmra.mrb[0].mxu0 %v2972
        %v2974 = vpop.f32.mrb[0].mxu0
        %v2975 = vadd.f32 %v2789, %v2974
        %v2976 = vpop.f32.mrb[0].mxu0
        %2977 = vmatprep.mubr.f32.mxu0 0.0
        %v2978 = vand.u32 %v2083, 4294901760
        %2979 = vmatmul.mubr.f32.gmra.mrb[0].mxu0 %v2978
        %v2980 = vpop.f32.mrb[0].mxu0
        %v2981 = vadd.f32 %v2797, %v2980
        %v2982 = vpop.f32.mrb[0].mxu0
        %2983 = vmatprep.mubr.f32.mxu0 0.0
        %v2984 = vand.u32 %v2086, 4294901760
        %2985 = vmatmul.mubr.f32.gmra.mrb[0].mxu0 %v2984
        %v2986 = vpop.f32.mrb[0].mxu0
        %v2987 = vadd.f32 %v2805, %v2986
        %v2988 = vpop.f32.mrb[0].mxu0
        %2989 = vmatprep.mubr.f32.mxu0 0.0
        %v2990 = vand.u32 %v2089, 4294901760
        %2991 = vmatmul.mubr.f32.gmra.mrb[0].mxu0 %v2990
        %v2992 = vpop.f32.mrb[0].mxu0
        %v2993 = vadd.f32 %v2813, %v2992
        %v2994 = vpop.f32.mrb[0].mxu0
        %2995 = vmatprep.mubr.f32.mxu0 0.0
        %v2996 = vand.u32 %v2092, 4294901760
        %2997 = vmatmul.mubr.f32.gmra.mrb[0].mxu0 %v2996
        %v2998 = vpop.f32.mrb[0].mxu0
        %v2999 = vadd.f32 %v2821, %v2998
        %v3000 = vpop.f32.mrb[0].mxu0
        %3001 = vmatprep.mubr.f32.mxu0 0.0
        %v3002 = vand.u32 %v2095, 4294901760
        %3003 = vmatmul.mubr.f32.gmra.mrb[0].mxu0 %v3002
        %v3004 = vpop.f32.mrb[0].mxu0
        %v3005 = vadd.f32 %v2829, %v3004
        %v3006 = vpop.f32.mrb[0].mxu0
        %3007 = vmatprep.mubr.f32.mxu0 0.0
        %v3008 = vand.u32 %v2098, 4294901760
        %3009 = vmatmul.mubr.f32.gmra.mrb[0].mxu0 %v3008
        %v3010 = vpop.f32.mrb[0].mxu0
        %v3011 = vadd.f32 %v2837, %v3010
        %v3012 = vpop.f32.mrb[0].mxu0
        %3013 = vmatprep.mubr.f32.mxu0 0.0
        %v3014 = vand.u32 %v2101, 4294901760
        %3015 = vmatmul.mubr.f32.gmra.mrb[0].mxu0 %v3014
        %v3016 = vpop.f32.mrb[0].mxu0
        %v3017 = vadd.f32 %v2845, %v3016
        %v3018 = vpop.f32.mrb[0].mxu0
        %3019 = vmatprep.mubr.f32.mxu0 0.0
        %v3020 = vand.u32 %v2104, 4294901760
        %3021 = vmatmul.mubr.f32.gmra.mrb[0].mxu0 %v3020
        %v3022 = vpop.f32.mrb[0].mxu0
        %v3023 = vadd.f32 %v2853, %v3022
        %v3024 = vpop.f32.mrb[0].mxu0
        %3025 = vmatprep.mubr.f32.mxu0 0.0
        %v3026 = vand.u32 %v2107, 4294901760
        %3027 = vmatmul.mubr.f32.gmra.mrb[0].mxu0 %v3026
        %v3028 = vpop.f32.mrb[0].mxu0
        %v3029 = vadd.f32 %v2861, %v3028
        %v3030 = vpop.f32.mrb[0].mxu0
        %3031 = vmatprep.mubr.f32.mxu0 0.0
        %v3032 = vand.u32 %v2110, 4294901760
        %3033 = vmatmul.mubr.f32.gmra.mrb[0].mxu0 %v3032
        %v3034 = vpop.f32.mrb[0].mxu0
        %v3035 = vadd.f32 %v2869, %v3034
        %v3036 = vpop.f32.mrb[0].mxu0
        %3037 = vmatprep.mubr.f32.mxu0 0.0
        %v3038 = vand.u32 %v2113, 4294901760
        %3039 = vmatmul.mubr.f32.gmra.mrb[0].mxu0 %v3038
        %v3040 = vpop.f32.mrb[0].mxu0
        %v3041 = vadd.f32 %v2877, %v3040
        %v3042 = vpop.f32.mrb[0].mxu0
        %3043 = vdwg.mxu0
        %3044 = vmatprep.subr.mxu0 0.0
        %v3045 = vand.u32 %v309, 4294901760
        %3046 = vmatpush1.msra.mxu0 %v3045
        %3047 = vmatprep.subr.mxu0 0.0
        %3048 = vmatpush1.msra.mxu0 0.0
        %3049 = vmatprep.subr.mxu0 0.0
        %3050 = vmatpush1.msra.mxu0 0.0
        %3051 = vmatprep.subr.mxu0 0.0
        %3052 = vmatpush1.msra.mxu0 0.0
        %3053 = vmatprep.subr.mxu0 0.0
        %3054 = vmatpush1.msra.mxu0 0.0
        %3055 = vmatprep.subr.mxu0 0.0
        %3056 = vmatpush1.msra.mxu0 0.0
        %3057 = vmatprep.subr.mxu0 0.0
        %3058 = vmatpush1.msra.mxu0 0.0
        %3059 = vmatprep.subr.mxu0 0.0
        %3060 = vmatpush1.msra.mxu0 0.0
        %3061 = vmatprep.subr.mxu0 0.0
        %3062 = vmatpush1.msra.mxu0 0.0
        %3063 = vmatprep.subr.mxu0 0.0
        %3064 = vmatpush1.msra.mxu0 0.0
        %3065 = vmatprep.subr.mxu0 0.0
        %3066 = vmatpush1.msra.mxu0 0.0
        %3067 = vmatprep.subr.mxu0 0.0
        %3068 = vmatpush1.msra.mxu0 0.0
        %3069 = vmatprep.subr.mxu0 0.0
        %3070 = vmatpush1.msra.mxu0 0.0
        %3071 = vmatprep.subr.mxu0 0.0
        %3072 = vmatpush1.msra.mxu0 0.0
        %3073 = vmatprep.subr.mxu0 0.0
        %3074 = vmatpush1.msra.mxu0 0.0
        %3075 = vmatprep.subr.mxu0 0.0
        %3076 = vmatpush1.msra.mxu0 0.0
        %3077 = vmatprep.subr.mxu0 0.0
        %3078 = vmatpush1.msra.mxu0 0.0
        %3079 = vmatprep.subr.mxu0 0.0
        %3080 = vmatpush1.msra.mxu0 0.0
        %3081 = vmatprep.subr.mxu0 0.0
        %3082 = vmatpush1.msra.mxu0 0.0
        %3083 = vmatprep.subr.mxu0 0.0
        %3084 = vmatpush1.msra.mxu0 0.0
        %3085 = vmatprep.subr.mxu0 0.0
        %3086 = vmatpush1.msra.mxu0 0.0
        %3087 = vmatprep.subr.mxu0 0.0
        %3088 = vmatpush1.msra.mxu0 0.0
        %3089 = vmatprep.subr.mxu0 0.0
        %3090 = vmatpush1.msra.mxu0 0.0
        %3091 = vmatprep.subr.mxu0 0.0
        %3092 = vmatpush1.msra.mxu0 0.0
        %3093 = vmatprep.subr.mxu0 0.0
        %3094 = vmatpush1.msra.mxu0 0.0
        %3095 = vmatprep.subr.mxu0 0.0
        %3096 = vmatpush1.msra.mxu0 0.0
        %3097 = vmatprep.subr.mxu0 0.0
        %3098 = vmatpush1.msra.mxu0 0.0
        %3099 = vmatprep.subr.mxu0 0.0
        %3100 = vmatpush1.msra.mxu0 0.0
        %3101 = vmatprep.subr.mxu0 0.0
        %3102 = vmatpush1.msra.mxu0 0.0
        %3103 = vmatprep.subr.mxu0 0.0
        %3104 = vmatpush1.msra.mxu0 0.0
        %3105 = vmatprep.subr.mxu0 0.0
        %3106 = vmatpush1.msra.mxu0 0.0
        %3107 = vmatprep.subr.mxu0 0.0
        %3108 = vmatpush1.msra.mxu0 0.0
        %3109 = vmatprep.mubr.f32.mxu0 0.0
        %v3110 = vand.u32 %v2068, 4294901760
        %3111 = vmatmul.mubr.f32.gmra.mrb[0].mxu0 %v3110
        %v3112 = vpop.f32.mrb[0].mxu0
        %v3113 = vadd.f32 %v2951, %v3112
        %v3114 = vpop.f32.mrb[0].mxu0
        %3115 = vmatprep.mubr.f32.mxu0 0.0
        %v3116 = vand.u32 %v2071, 4294901760
        %3117 = vmatmul.mubr.f32.gmra.mrb[0].mxu0 %v3116
        %v3118 = vpop.f32.mrb[0].mxu0
        %v3119 = vadd.f32 %v2957, %v3118
        %v3120 = vpop.f32.mrb[0].mxu0
        %3121 = vmatprep.mubr.f32.mxu0 0.0
        %v3122 = vand.u32 %v2074, 4294901760
        %3123 = vmatmul.mubr.f32.gmra.mrb[0].mxu0 %v3122
        %v3124 = vpop.f32.mrb[0].mxu0
        %v3125 = vadd.f32 %v2963, %v3124
        %v3126 = vpop.f32.mrb[0].mxu0
        %3127 = vmatprep.mubr.f32.mxu0 0.0
        %v3128 = vand.u32 %v2077, 4294901760
        %3129 = vmatmul.mubr.f32.gmra.mrb[0].mxu0 %v3128
        %v3130 = vpop.f32.mrb[0].mxu0
        %v3131 = vadd.f32 %v2969, %v3130
        %v3132 = vpop.f32.mrb[0].mxu0
        %3133 = vmatprep.mubr.f32.mxu0 0.0
        %v3134 = vand.u32 %v2080, 4294901760
        %3135 = vmatmul.mubr.f32.gmra.mrb[0].mxu0 %v3134
        %v3136 = vpop.f32.mrb[0].mxu0
        %v3137 = vadd.f32 %v2975, %v3136
        %v3138 = vpop.f32.mrb[0].mxu0
        %3139 = vmatprep.mubr.f32.mxu0 0.0
        %v3140 = vand.u32 %v2083, 4294901760
        %3141 = vmatmul.mubr.f32.gmra.mrb[0].mxu0 %v3140
        %v3142 = vpop.f32.mrb[0].mxu0
        %v3143 = vadd.f32 %v2981, %v3142
        %v3144 = vpop.f32.mrb[0].mxu0
        %3145 = vmatprep.mubr.f32.mxu0 0.0
        %v3146 = vand.u32 %v2086, 4294901760
        %3147 = vmatmul.mubr.f32.gmra.mrb[0].mxu0 %v3146
        %v3148 = vpop.f32.mrb[0].mxu0
        %v3149 = vadd.f32 %v2987, %v3148
        %v3150 = vpop.f32.mrb[0].mxu0
        %3151 = vmatprep.mubr.f32.mxu0 0.0
        %v3152 = vand.u32 %v2089, 4294901760
        %3153 = vmatmul.mubr.f32.gmra.mrb[0].mxu0 %v3152
        %v3154 = vpop.f32.mrb[0].mxu0
        %v3155 = vadd.f32 %v2993, %v3154
        %v3156 = vpop.f32.mrb[0].mxu0
        %3157 = vmatprep.mubr.f32.mxu0 0.0
        %v3158 = vand.u32 %v2092, 4294901760
        %3159 = vmatmul.mubr.f32.gmra.mrb[0].mxu0 %v3158
        %v3160 = vpop.f32.mrb[0].mxu0
        %v3161 = vadd.f32 %v2999, %v3160
        %v3162 = vpop.f32.mrb[0].mxu0
        %3163 = vmatprep.mubr.f32.mxu0 0.0
        %v3164 = vand.u32 %v2095, 4294901760
        %3165 = vmatmul.mubr.f32.gmra.mrb[0].mxu0 %v3164
        %v3166 = vpop.f32.mrb[0].mxu0
        %v3167 = vadd.f32 %v3005, %v3166
        %v3168 = vpop.f32.mrb[0].mxu0
        %3169 = vmatprep.mubr.f32.mxu0 0.0
        %v3170 = vand.u32 %v2098, 4294901760
        %3171 = vmatmul.mubr.f32.gmra.mrb[0].mxu0 %v3170
        %v3172 = vpop.f32.mrb[0].mxu0
        %v3173 = vadd.f32 %v3011, %v3172
        %v3174 = vpop.f32.mrb[0].mxu0
        %3175 = vmatprep.mubr.f32.mxu0 0.0
        %v3176 = vand.u32 %v2101, 4294901760
        %3177 = vmatmul.mubr.f32.gmra.mrb[0].mxu0 %v3176
        %v3178 = vpop.f32.mrb[0].mxu0
        %v3179 = vadd.f32 %v3017, %v3178
        %v3180 = vpop.f32.mrb[0].mxu0
        %3181 = vmatprep.mubr.f32.mxu0 0.0
        %v3182 = vand.u32 %v2104, 4294901760
        %3183 = vmatmul.mubr.f32.gmra.mrb[0].mxu0 %v3182
        %v3184 = vpop.f32.mrb[0].mxu0
        %v3185 = vadd.f32 %v3023, %v3184
        %v3186 = vpop.f32.mrb[0].mxu0
        %3187 = vmatprep.mubr.f32.mxu0 0.0
        %v3188 = vand.u32 %v2107, 4294901760
        %3189 = vmatmul.mubr.f32.gmra.mrb[0].mxu0 %v3188
        %v3190 = vpop.f32.mrb[0].mxu0
        %v3191 = vadd.f32 %v3029, %v3190
        %v3192 = vpop.f32.mrb[0].mxu0
        %3193 = vmatprep.mubr.f32.mxu0 0.0
        %v3194 = vand.u32 %v2110, 4294901760
        %3195 = vmatmul.mubr.f32.gmra.mrb[0].mxu0 %v3194
        %v3196 = vpop.f32.mrb[0].mxu0
        %v3197 = vadd.f32 %v3035, %v3196
        %v3198 = vpop.f32.mrb[0].mxu0
        %3199 = vmatprep.mubr.f32.mxu0 0.0
        %v3200 = vand.u32 %v2113, 4294901760
        %3201 = vmatmul.mubr.f32.gmra.mrb[0].mxu0 %v3200
        %v3202 = vpop.f32.mrb[0].mxu0
        %v3203 = vadd.f32 %v3041, %v3202
        %v3204 = vpop.f32.mrb[0].mxu0
        %3205 = vdwg.mxu0
        %v3206 = vmul.f32 %v284, %v3113
        %v3207 = vmul.f32 %v285, %v3119
        %v3208 = vmul.f32 %v286, %v3125
        %v3209 = vmul.f32 %v287, %v3131
        %v3210 = vmul.f32 %v288, %v3137
        %v3211 = vmul.f32 %v289, %v3143
        %v3212 = vmul.f32 %v290, %v3149
        %v3213 = vmul.f32 %v291, %v3155
        %v3214 = vmul.f32 %v292, %v3161
        %v3215 = vmul.f32 %v293, %v3167
        %v3216 = vmul.f32 %v294, %v3173
        %v3217 = vmul.f32 %v295, %v3179
        %v3218 = vmul.f32 %v296, %v3185
        %v3219 = vmul.f32 %v297, %v3191
        %v3220 = vmul.f32 %v298, %v3197
        %v3221 = vmul.f32 %v299, %v3203
        %v3222 = vsel %vm338, %v3206, 0.0
        %v3223 = vsel %vm338, %v3207, 0.0
        %v3224 = vadd.f32 %v3222, %v3223
        %v3225 = vrot.slane %v3224, 4
        %v3226 = vadd.f32 %v3224, %v3225
        %v3227 = vrot.slane %v3226, 2
        %v3228 = vadd.f32 %v3226, %v3227
        %v3229 = vrot.slane %v3228, 1
        %v3230 = vadd.f32 %v3228, %v3229
        %v3231 = vsel %vm338, %v3208, 0.0
        %v3232 = vsel %vm338, %v3209, 0.0
        %v3233 = vadd.f32 %v3231, %v3232
        %v3234 = vrot.slane %v3233, 4
        %v3235 = vadd.f32 %v3233, %v3234
        %v3236 = vrot.slane %v3235, 2
        %v3237 = vadd.f32 %v3235, %v3236
        %v3238 = vrot.slane %v3237, 1
        %v3239 = vadd.f32 %v3237, %v3238
        %v3240 = vsel %vm338, %v3210, 0.0
        %v3241 = vsel %vm338, %v3211, 0.0
        %v3242 = vadd.f32 %v3240, %v3241
        %v3243 = vrot.slane %v3242, 4
        %v3244 = vadd.f32 %v3242, %v3243
        %v3245 = vrot.slane %v3244, 2
        %v3246 = vadd.f32 %v3244, %v3245
        %v3247 = vrot.slane %v3246, 1
        %v3248 = vadd.f32 %v3246, %v3247
        %v3249 = vsel %vm338, %v3212, 0.0
        %v3250 = vsel %vm338, %v3213, 0.0
        %v3251 = vadd.f32 %v3249, %v3250
        %v3252 = vrot.slane %v3251, 4
        %v3253 = vadd.f32 %v3251, %v3252
        %v3254 = vrot.slane %v3253, 2
        %v3255 = vadd.f32 %v3253, %v3254
        %v3256 = vrot.slane %v3255, 1
        %v3257 = vadd.f32 %v3255, %v3256
        %v3258 = vsel %vm338, %v3214, 0.0
        %v3259 = vsel %vm338, %v3215, 0.0
        %v3260 = vadd.f32 %v3258, %v3259
        %v3261 = vrot.slane %v3260, 4
        %v3262 = vadd.f32 %v3260, %v3261
        %v3263 = vrot.slane %v3262, 2
        %v3264 = vadd.f32 %v3262, %v3263
        %v3265 = vrot.slane %v3264, 1
        %v3266 = vadd.f32 %v3264, %v3265
        %v3267 = vsel %vm338, %v3216, 0.0
        %v3268 = vsel %vm338, %v3217, 0.0
        %v3269 = vadd.f32 %v3267, %v3268
        %v3270 = vrot.slane %v3269, 4
        %v3271 = vadd.f32 %v3269, %v3270
        %v3272 = vrot.slane %v3271, 2
        %v3273 = vadd.f32 %v3271, %v3272
        %v3274 = vrot.slane %v3273, 1
        %v3275 = vadd.f32 %v3273, %v3274
        %v3276 = vsel %vm338, %v3218, 0.0
        %v3277 = vsel %vm338, %v3219, 0.0
        %v3278 = vadd.f32 %v3276, %v3277
        %v3279 = vrot.slane %v3278, 4
        %v3280 = vadd.f32 %v3278, %v3279
        %v3281 = vrot.slane %v3280, 2
        %v3282 = vadd.f32 %v3280, %v3281
        %v3283 = vrot.slane %v3282, 1
        %v3284 = vadd.f32 %v3282, %v3283
        %v3285 = vsel %vm338, %v3220, 0.0
        %v3286 = vsel %vm338, %v3221, 0.0
        %v3287 = vadd.f32 %v3285, %v3286
        %v3288 = vrot.slane %v3287, 4
        %v3289 = vadd.f32 %v3287, %v3288
        %v3290 = vrot.slane %v3289, 2
        %v3291 = vadd.f32 %v3289, %v3290
        %v3292 = vrot.slane %v3291, 1
        %v3293 = vadd.f32 %v3291, %v3292
        %v3294 = vlaneseq
        %v3295 = vshrl.u32 %v3294, 7
        %v3296 = vsub.s32 1, %v3295
        %v3297 = vrot.slane %v300, %v3296
        %v3298 = vmul.f32 %v3230, %v3297
        %v3299 = vmul.f32 %v3239, %v3297
        %v3300 = vmul.f32 %v3248, %v3297
        %v3301 = vmul.f32 %v3257, %v3297
        %v3302 = vmul.f32 %v3266, %v3297
        %v3303 = vmul.f32 %v3275, %v3297
        %v3304 = vmul.f32 %v3284, %v3297
        %v3305 = vmul.f32 %v3293, %v3297
        %v3314 = vrot.slane %v3299, 7
        %vm3315 = vcmask 1041409
        %v3316 = vsel %vm3315, %v3314, %v3298
        %v3317 = vrot.slane %v3300, 6
        %vm3318 = vcmask 1042434
        %v3319 = vsel %vm3318, %v3317, %v3316
        %v3320 = vrot.slane %v3301, 5
        %vm3321 = vcmask 1043459
        %v3322 = vsel %vm3321, %v3320, %v3319
        %v3323 = vrot.slane %v3302, 4
        %vm3324 = vcmask 1044484
        %v3325 = vsel %vm3324, %v3323, %v3322
        %v3326 = vrot.slane %v3303, 3
        %vm3327 = vcmask 1045509
        %v3328 = vsel %vm3327, %v3326, %v3325
        %v3329 = vrot.slane %v3304, 2
        %vm3330 = vcmask 1046534
        %v3331 = vsel %vm3330, %v3329, %v3328
        %v3332 = vrot.slane %v3305, 1
        %vm3333 = vcmask 1047559
        %v3334 = vsel %vm3333, %v3332, %v3331
        %v3335 = vsel %vm338, %v3334, 0
        %3337 = vmatprep.subr.mxu0 0.0
        %v3338 = vand.u32 %v301, 4294901760
        %3339 = vmatpush1.msra.mxu0 %v3338
        %3340 = vmatprep.subr.mxu0 0.0
        %v3341 = vand.u32 %v302, 4294901760
        %3342 = vmatpush1.msra.mxu0 %v3341
        %3343 = vmatprep.subr.mxu0 0.0
        %v3344 = vand.u32 %v303, 4294901760
        %3345 = vmatpush1.msra.mxu0 %v3344
        %3346 = vmatprep.subr.mxu0 0.0
        %v3347 = vand.u32 %v304, 4294901760
        %3348 = vmatpush1.msra.mxu0 %v3347
        %3349 = vmatprep.subr.mxu0 0.0
        %v3350 = vand.u32 %v305, 4294901760
        %3351 = vmatpush1.msra.mxu0 %v3350
        %3352 = vmatprep.subr.mxu0 0.0
        %v3353 = vand.u32 %v306, 4294901760
        %3354 = vmatpush1.msra.mxu0 %v3353
        %3355 = vmatprep.subr.mxu0 0.0
        %v3356 = vand.u32 %v307, 4294901760
        %3357 = vmatpush1.msra.mxu0 %v3356
        %3358 = vmatprep.subr.mxu0 0.0
        %v3359 = vand.u32 %v308, 4294901760
        %3360 = vmatpush1.msra.mxu0 %v3359
        %3361 = vmatprep.subr.mxu0 0.0
        %3362 = vmatpush1.msra.mxu0 0.0
        %3363 = vmatprep.subr.mxu0 0.0
        %3364 = vmatpush1.msra.mxu0 0.0
        %3365 = vmatprep.subr.mxu0 0.0
        %3366 = vmatpush1.msra.mxu0 0.0
        %3367 = vmatprep.subr.mxu0 0.0
        %3368 = vmatpush1.msra.mxu0 0.0
        %3369 = vmatprep.subr.mxu0 0.0
        %3370 = vmatpush1.msra.mxu0 0.0
        %3371 = vmatprep.subr.mxu0 0.0
        %3372 = vmatpush1.msra.mxu0 0.0
        %3373 = vmatprep.subr.mxu0 0.0
        %3374 = vmatpush1.msra.mxu0 0.0
        %3375 = vmatprep.subr.mxu0 0.0
        %3376 = vmatpush1.msra.mxu0 0.0
        %3377 = vmatprep.subr.mxu0 0.0
        %3378 = vmatpush1.msra.mxu0 0.0
        %3379 = vmatprep.subr.mxu0 0.0
        %3380 = vmatpush1.msra.mxu0 0.0
        %3381 = vmatprep.subr.mxu0 0.0
        %3382 = vmatpush1.msra.mxu0 0.0
        %3383 = vmatprep.subr.mxu0 0.0
        %3384 = vmatpush1.msra.mxu0 0.0
        %3385 = vmatprep.subr.mxu0 0.0
        %3386 = vmatpush1.msra.mxu0 0.0
        %3387 = vmatprep.subr.mxu0 0.0
        %3388 = vmatpush1.msra.mxu0 0.0
        %3389 = vmatprep.subr.mxu0 0.0
        %3390 = vmatpush1.msra.mxu0 0.0
        %3391 = vmatprep.subr.mxu0 0.0
        %3392 = vmatpush1.msra.mxu0 0.0
        %3393 = vmatprep.subr.mxu0 0.0
        %3394 = vmatpush1.msra.mxu0 0.0
        %3395 = vmatprep.subr.mxu0 0.0
        %3396 = vmatpush1.msra.mxu0 0.0
        %3397 = vmatprep.subr.mxu0 0.0
        %3398 = vmatpush1.msra.mxu0 0.0
        %3399 = vmatprep.subr.mxu0 0.0
        %3400 = vmatpush1.msra.mxu0 0.0
        %3401 = vmatprep.subr.mxu0 0.0
        %3402 = vmatpush1.msra.mxu0 0.0
        %3403 = vmatprep.subr.mxu0 0.0
        %3404 = vmatpush1.msra.mxu0 0.0
        %3405 = vmatprep.subr.mxu0 0.0
        %3406 = vmatpush1.msra.mxu0 0.0
        %3407 = vmatprep.subr.mxu0 0.0
        %3408 = vmatpush1.msra.mxu0 0.0
        %3409 = vmatprep.mubr.f32.mxu0 0.0
        %v3410 = vand.u32 %v3335, 4294901760
        %v3411 = vsub.f32 %v3335, %v3410
        %v3412 = vand.u32 %v3411, 4294901760
        %v3413 = vsub.f32 %v3411, %v3412
        %v3414 = vand.u32 %v3413, 4294901760
        %3415 = vmatmul.mubr.f32.gmra.mrb[0].mxu0 %v3414
        %v3416 = vpop.f32.mrb[0].mxu0
        %v3417 = vadd.f32 0.0, %v3416
        %v3418 = vpop.f32.mrb[0].mxu0
        %3419 = vdwg.mxu0
        %3420 = vmatprep.subr.mxu0 0.0
        %v3421 = vand.u32 %v301, 4294901760
        %v3422 = vsub.f32 %v301, %v3421
        %v3423 = vand.u32 %v3422, 4294901760
        %v3424 = vsub.f32 %v3422, %v3423
        %v3425 = vand.u32 %v3424, 4294901760
        %3426 = vmatpush1.msra.mxu0 %v3425
        %3427 = vmatprep.subr.mxu0 0.0
        %v3428 = vand.u32 %v302, 4294901760
        %v3429 = vsub.f32 %v302, %v3428
        %v3430 = vand.u32 %v3429, 4294901760
        %v3431 = vsub.f32 %v3429, %v3430
        %v3432 = vand.u32 %v3431, 4294901760
        %3433 = vmatpush1.msra.mxu0 %v3432
        %3434 = vmatprep.subr.mxu0 0.0
        %v3435 = vand.u32 %v303, 4294901760
        %v3436 = vsub.f32 %v303, %v3435
        %v3437 = vand.u32 %v3436, 4294901760
        %v3438 = vsub.f32 %v3436, %v3437
        %v3439 = vand.u32 %v3438, 4294901760
        %3440 = vmatpush1.msra.mxu0 %v3439
        %3441 = vmatprep.subr.mxu0 0.0
        %v3442 = vand.u32 %v304, 4294901760
        %v3443 = vsub.f32 %v304, %v3442
        %v3444 = vand.u32 %v3443, 4294901760
        %v3445 = vsub.f32 %v3443, %v3444
        %v3446 = vand.u32 %v3445, 4294901760
        %3447 = vmatpush1.msra.mxu0 %v3446
        %3448 = vmatprep.subr.mxu0 0.0
        %v3449 = vand.u32 %v305, 4294901760
        %v3450 = vsub.f32 %v305, %v3449
        %v3451 = vand.u32 %v3450, 4294901760
        %v3452 = vsub.f32 %v3450, %v3451
        %v3453 = vand.u32 %v3452, 4294901760
        %3454 = vmatpush1.msra.mxu0 %v3453
        %3455 = vmatprep.subr.mxu0 0.0
        %v3456 = vand.u32 %v306, 4294901760
        %v3457 = vsub.f32 %v306, %v3456
        %v3458 = vand.u32 %v3457, 4294901760
        %v3459 = vsub.f32 %v3457, %v3458
        %v3460 = vand.u32 %v3459, 4294901760
        %3461 = vmatpush1.msra.mxu0 %v3460
        %3462 = vmatprep.subr.mxu0 0.0
        %v3463 = vand.u32 %v307, 4294901760
        %v3464 = vsub.f32 %v307, %v3463
        %v3465 = vand.u32 %v3464, 4294901760
        %v3466 = vsub.f32 %v3464, %v3465
        %v3467 = vand.u32 %v3466, 4294901760
        %3468 = vmatpush1.msra.mxu0 %v3467
        %3469 = vmatprep.subr.mxu0 0.0
        %v3470 = vand.u32 %v308, 4294901760
        %v3471 = vsub.f32 %v308, %v3470
        %v3472 = vand.u32 %v3471, 4294901760
        %v3473 = vsub.f32 %v3471, %v3472
        %v3474 = vand.u32 %v3473, 4294901760
        %3475 = vmatpush1.msra.mxu0 %v3474
        %3476 = vmatprep.subr.mxu0 0.0
        %3477 = vmatpush1.msra.mxu0 0.0
        %3478 = vmatprep.subr.mxu0 0.0
        %3479 = vmatpush1.msra.mxu0 0.0
        %3480 = vmatprep.subr.mxu0 0.0
        %3481 = vmatpush1.msra.mxu0 0.0
        %3482 = vmatprep.subr.mxu0 0.0
        %3483 = vmatpush1.msra.mxu0 0.0
        %3484 = vmatprep.subr.mxu0 0.0
        %3485 = vmatpush1.msra.mxu0 0.0
        %3486 = vmatprep.subr.mxu0 0.0
        %3487 = vmatpush1.msra.mxu0 0.0
        %3488 = vmatprep.subr.mxu0 0.0
        %3489 = vmatpush1.msra.mxu0 0.0
        %3490 = vmatprep.subr.mxu0 0.0
        %3491 = vmatpush1.msra.mxu0 0.0
        %3492 = vmatprep.subr.mxu0 0.0
        %3493 = vmatpush1.msra.mxu0 0.0
        %3494 = vmatprep.subr.mxu0 0.0
        %3495 = vmatpush1.msra.mxu0 0.0
        %3496 = vmatprep.subr.mxu0 0.0
        %3497 = vmatpush1.msra.mxu0 0.0
        %3498 = vmatprep.subr.mxu0 0.0
        %3499 = vmatpush1.msra.mxu0 0.0
        %3500 = vmatprep.subr.mxu0 0.0
        %3501 = vmatpush1.msra.mxu0 0.0
        %3502 = vmatprep.subr.mxu0 0.0
        %3503 = vmatpush1.msra.mxu0 0.0
        %3504 = vmatprep.subr.mxu0 0.0
        %3505 = vmatpush1.msra.mxu0 0.0
        %3506 = vmatprep.subr.mxu0 0.0
        %3507 = vmatpush1.msra.mxu0 0.0
        %3508 = vmatprep.subr.mxu0 0.0
        %3509 = vmatpush1.msra.mxu0 0.0
        %3510 = vmatprep.subr.mxu0 0.0
        %3511 = vmatpush1.msra.mxu0 0.0
        %3512 = vmatprep.subr.mxu0 0.0
        %3513 = vmatpush1.msra.mxu0 0.0
        %3514 = vmatprep.subr.mxu0 0.0
        %3515 = vmatpush1.msra.mxu0 0.0
        %3516 = vmatprep.subr.mxu0 0.0
        %3517 = vmatpush1.msra.mxu0 0.0
        %3518 = vmatprep.subr.mxu0 0.0
        %3519 = vmatpush1.msra.mxu0 0.0
        %3520 = vmatprep.subr.mxu0 0.0
        %3521 = vmatpush1.msra.mxu0 0.0
        %3522 = vmatprep.subr.mxu0 0.0
        %3523 = vmatpush1.msra.mxu0 0.0
        %3524 = vmatprep.mubr.f32.mxu0 0.0
        %v3525 = vand.u32 %v3335, 4294901760
        %3526 = vmatmul.mubr.f32.gmra.mrb[0].mxu0 %v3525
        %v3527 = vpop.f32.mrb[0].mxu0
        %v3528 = vadd.f32 %v3417, %v3527
        %v3529 = vpop.f32.mrb[0].mxu0
        %3530 = vdwg.mxu0
        %3531 = vmatprep.subr.mxu0 0.0
        %v3532 = vand.u32 %v301, 4294901760
        %v3533 = vsub.f32 %v301, %v3532
        %3534 = vmatpush1.msra.mxu0 %v3533
        %3535 = vmatprep.subr.mxu0 0.0
        %v3536 = vand.u32 %v302, 4294901760
        %v3537 = vsub.f32 %v302, %v3536
        %3538 = vmatpush1.msra.mxu0 %v3537
        %3539 = vmatprep.subr.mxu0 0.0
        %v3540 = vand.u32 %v303, 4294901760
        %v3541 = vsub.f32 %v303, %v3540
        %3542 = vmatpush1.msra.mxu0 %v3541
        %3543 = vmatprep.subr.mxu0 0.0
        %v3544 = vand.u32 %v304, 4294901760
        %v3545 = vsub.f32 %v304, %v3544
        %3546 = vmatpush1.msra.mxu0 %v3545
        %3547 = vmatprep.subr.mxu0 0.0
        %v3548 = vand.u32 %v305, 4294901760
        %v3549 = vsub.f32 %v305, %v3548
        %3550 = vmatpush1.msra.mxu0 %v3549
        %3551 = vmatprep.subr.mxu0 0.0
        %v3552 = vand.u32 %v306, 4294901760
        %v3553 = vsub.f32 %v306, %v3552
        %3554 = vmatpush1.msra.mxu0 %v3553
        %3555 = vmatprep.subr.mxu0 0.0
        %v3556 = vand.u32 %v307, 4294901760
        %v3557 = vsub.f32 %v307, %v3556
        %3558 = vmatpush1.msra.mxu0 %v3557
        %3559 = vmatprep.subr.mxu0 0.0
        %v3560 = vand.u32 %v308, 4294901760
        %v3561 = vsub.f32 %v308, %v3560
        %3562 = vmatpush1.msra.mxu0 %v3561
        %3563 = vmatprep.subr.mxu0 0.0
        %3564 = vmatpush1.msra.mxu0 0.0
        %3565 = vmatprep.subr.mxu0 0.0
        %3566 = vmatpush1.msra.mxu0 0.0
        %3567 = vmatprep.subr.mxu0 0.0
        %3568 = vmatpush1.msra.mxu0 0.0
        %3569 = vmatprep.subr.mxu0 0.0
        %3570 = vmatpush1.msra.mxu0 0.0
        %3571 = vmatprep.subr.mxu0 0.0
        %3572 = vmatpush1.msra.mxu0 0.0
        %3573 = vmatprep.subr.mxu0 0.0
        %3574 = vmatpush1.msra.mxu0 0.0
        %3575 = vmatprep.subr.mxu0 0.0
        %3576 = vmatpush1.msra.mxu0 0.0
        %3577 = vmatprep.subr.mxu0 0.0
        %3578 = vmatpush1.msra.mxu0 0.0
        %3579 = vmatprep.subr.mxu0 0.0
        %3580 = vmatpush1.msra.mxu0 0.0
        %3581 = vmatprep.subr.mxu0 0.0
        %3582 = vmatpush1.msra.mxu0 0.0
        %3583 = vmatprep.subr.mxu0 0.0
        %3584 = vmatpush1.msra.mxu0 0.0
        %3585 = vmatprep.subr.mxu0 0.0
        %3586 = vmatpush1.msra.mxu0 0.0
        %3587 = vmatprep.subr.mxu0 0.0
        %3588 = vmatpush1.msra.mxu0 0.0
        %3589 = vmatprep.subr.mxu0 0.0
        %3590 = vmatpush1.msra.mxu0 0.0
        %3591 = vmatprep.subr.mxu0 0.0
        %3592 = vmatpush1.msra.mxu0 0.0
        %3593 = vmatprep.subr.mxu0 0.0
        %3594 = vmatpush1.msra.mxu0 0.0
        %3595 = vmatprep.subr.mxu0 0.0
        %3596 = vmatpush1.msra.mxu0 0.0
        %3597 = vmatprep.subr.mxu0 0.0
        %3598 = vmatpush1.msra.mxu0 0.0
        %3599 = vmatprep.subr.mxu0 0.0
        %3600 = vmatpush1.msra.mxu0 0.0
        %3601 = vmatprep.subr.mxu0 0.0
        %3602 = vmatpush1.msra.mxu0 0.0
        %3603 = vmatprep.subr.mxu0 0.0
        %3604 = vmatpush1.msra.mxu0 0.0
        %3605 = vmatprep.subr.mxu0 0.0
        %3606 = vmatpush1.msra.mxu0 0.0
        %3607 = vmatprep.subr.mxu0 0.0
        %3608 = vmatpush1.msra.mxu0 0.0
        %3609 = vmatprep.subr.mxu0 0.0
        %3610 = vmatpush1.msra.mxu0 0.0
        %3611 = vmatprep.mubr.f32.mxu0 0.0
        %v3612 = vand.u32 %v3335, 4294901760
        %v3613 = vsub.f32 %v3335, %v3612
        %3614 = vmatmul.mubr.f32.gmra.mrb[0].mxu0 %v3613
        %v3615 = vpop.f32.mrb[0].mxu0
        %v3616 = vadd.f32 %v3528, %v3615
        %v3617 = vpop.f32.mrb[0].mxu0
        %3618 = vdwg.mxu0
        %3619 = vmatprep.subr.mxu0 0.0
        %v3620 = vand.u32 %v301, 4294901760
        %3621 = vmatpush1.msra.mxu0 %v3620
        %3622 = vmatprep.subr.mxu0 0.0
        %v3623 = vand.u32 %v302, 4294901760
        %3624 = vmatpush1.msra.mxu0 %v3623
        %3625 = vmatprep.subr.mxu0 0.0
        %v3626 = vand.u32 %v303, 4294901760
        %3627 = vmatpush1.msra.mxu0 %v3626
        %3628 = vmatprep.subr.mxu0 0.0
        %v3629 = vand.u32 %v304, 4294901760
        %3630 = vmatpush1.msra.mxu0 %v3629
        %3631 = vmatprep.subr.mxu0 0.0
        %v3632 = vand.u32 %v305, 4294901760
        %3633 = vmatpush1.msra.mxu0 %v3632
        %3634 = vmatprep.subr.mxu0 0.0
        %v3635 = vand.u32 %v306, 4294901760
        %3636 = vmatpush1.msra.mxu0 %v3635
        %3637 = vmatprep.subr.mxu0 0.0
        %v3638 = vand.u32 %v307, 4294901760
        %3639 = vmatpush1.msra.mxu0 %v3638
        %3640 = vmatprep.subr.mxu0 0.0
        %v3641 = vand.u32 %v308, 4294901760
        %3642 = vmatpush1.msra.mxu0 %v3641
        %3643 = vmatprep.subr.mxu0 0.0
        %3644 = vmatpush1.msra.mxu0 0.0
        %3645 = vmatprep.subr.mxu0 0.0
        %3646 = vmatpush1.msra.mxu0 0.0
        %3647 = vmatprep.subr.mxu0 0.0
        %3648 = vmatpush1.msra.mxu0 0.0
        %3649 = vmatprep.subr.mxu0 0.0
        %3650 = vmatpush1.msra.mxu0 0.0
        %3651 = vmatprep.subr.mxu0 0.0
        %3652 = vmatpush1.msra.mxu0 0.0
        %3653 = vmatprep.subr.mxu0 0.0
        %3654 = vmatpush1.msra.mxu0 0.0
        %3655 = vmatprep.subr.mxu0 0.0
        %3656 = vmatpush1.msra.mxu0 0.0
        %3657 = vmatprep.subr.mxu0 0.0
        %3658 = vmatpush1.msra.mxu0 0.0
        %3659 = vmatprep.subr.mxu0 0.0
        %3660 = vmatpush1.msra.mxu0 0.0
        %3661 = vmatprep.subr.mxu0 0.0
        %3662 = vmatpush1.msra.mxu0 0.0
        %3663 = vmatprep.subr.mxu0 0.0
        %3664 = vmatpush1.msra.mxu0 0.0
        %3665 = vmatprep.subr.mxu0 0.0
        %3666 = vmatpush1.msra.mxu0 0.0
        %3667 = vmatprep.subr.mxu0 0.0
        %3668 = vmatpush1.msra.mxu0 0.0
        %3669 = vmatprep.subr.mxu0 0.0
        %3670 = vmatpush1.msra.mxu0 0.0
        %3671 = vmatprep.subr.mxu0 0.0
        %3672 = vmatpush1.msra.mxu0 0.0
        %3673 = vmatprep.subr.mxu0 0.0
        %3674 = vmatpush1.msra.mxu0 0.0
        %3675 = vmatprep.subr.mxu0 0.0
        %3676 = vmatpush1.msra.mxu0 0.0
        %3677 = vmatprep.subr.mxu0 0.0
        %3678 = vmatpush1.msra.mxu0 0.0
        %3679 = vmatprep.subr.mxu0 0.0
        %3680 = vmatpush1.msra.mxu0 0.0
        %3681 = vmatprep.subr.mxu0 0.0
        %3682 = vmatpush1.msra.mxu0 0.0
        %3683 = vmatprep.subr.mxu0 0.0
        %3684 = vmatpush1.msra.mxu0 0.0
        %3685 = vmatprep.subr.mxu0 0.0
        %3686 = vmatpush1.msra.mxu0 0.0
        %3687 = vmatprep.subr.mxu0 0.0
        %3688 = vmatpush1.msra.mxu0 0.0
        %3689 = vmatprep.subr.mxu0 0.0
        %3690 = vmatpush1.msra.mxu0 0.0
        %3691 = vmatprep.mubr.f32.mxu0 0.0
        %v3692 = vand.u32 %v3335, 4294901760
        %v3693 = vsub.f32 %v3335, %v3692
        %v3694 = vand.u32 %v3693, 4294901760
        %3695 = vmatmul.mubr.f32.gmra.mrb[0].mxu0 %v3694
        %v3696 = vpop.f32.mrb[0].mxu0
        %v3697 = vadd.f32 %v3616, %v3696
        %v3698 = vpop.f32.mrb[0].mxu0
        %3699 = vdwg.mxu0
        %3700 = vmatprep.subr.mxu0 0.0
        %v3701 = vand.u32 %v301, 4294901760
        %v3702 = vsub.f32 %v301, %v3701
        %v3703 = vand.u32 %v3702, 4294901760
        %3704 = vmatpush1.msra.mxu0 %v3703
        %3705 = vmatprep.subr.mxu0 0.0
        %v3706 = vand.u32 %v302, 4294901760
        %v3707 = vsub.f32 %v302, %v3706
        %v3708 = vand.u32 %v3707, 4294901760
        %3709 = vmatpush1.msra.mxu0 %v3708
        %3710 = vmatprep.subr.mxu0 0.0
        %v3711 = vand.u32 %v303, 4294901760
        %v3712 = vsub.f32 %v303, %v3711
        %v3713 = vand.u32 %v3712, 4294901760
        %3714 = vmatpush1.msra.mxu0 %v3713
        %3715 = vmatprep.subr.mxu0 0.0
        %v3716 = vand.u32 %v304, 4294901760
        %v3717 = vsub.f32 %v304, %v3716
        %v3718 = vand.u32 %v3717, 4294901760
        %3719 = vmatpush1.msra.mxu0 %v3718
        %3720 = vmatprep.subr.mxu0 0.0
        %v3721 = vand.u32 %v305, 4294901760
        %v3722 = vsub.f32 %v305, %v3721
        %v3723 = vand.u32 %v3722, 4294901760
        %3724 = vmatpush1.msra.mxu0 %v3723
        %3725 = vmatprep.subr.mxu0 0.0
        %v3726 = vand.u32 %v306, 4294901760
        %v3727 = vsub.f32 %v306, %v3726
        %v3728 = vand.u32 %v3727, 4294901760
        %3729 = vmatpush1.msra.mxu0 %v3728
        %3730 = vmatprep.subr.mxu0 0.0
        %v3731 = vand.u32 %v307, 4294901760
        %v3732 = vsub.f32 %v307, %v3731
        %v3733 = vand.u32 %v3732, 4294901760
        %3734 = vmatpush1.msra.mxu0 %v3733
        %3735 = vmatprep.subr.mxu0 0.0
        %v3736 = vand.u32 %v308, 4294901760
        %v3737 = vsub.f32 %v308, %v3736
        %v3738 = vand.u32 %v3737, 4294901760
        %3739 = vmatpush1.msra.mxu0 %v3738
        %3740 = vmatprep.subr.mxu0 0.0
        %3741 = vmatpush1.msra.mxu0 0.0
        %3742 = vmatprep.subr.mxu0 0.0
        %3743 = vmatpush1.msra.mxu0 0.0
        %3744 = vmatprep.subr.mxu0 0.0
        %3745 = vmatpush1.msra.mxu0 0.0
        %3746 = vmatprep.subr.mxu0 0.0
        %3747 = vmatpush1.msra.mxu0 0.0
        %3748 = vmatprep.subr.mxu0 0.0
        %3749 = vmatpush1.msra.mxu0 0.0
        %3750 = vmatprep.subr.mxu0 0.0
        %3751 = vmatpush1.msra.mxu0 0.0
        %3752 = vmatprep.subr.mxu0 0.0
        %3753 = vmatpush1.msra.mxu0 0.0
        %3754 = vmatprep.subr.mxu0 0.0
        %3755 = vmatpush1.msra.mxu0 0.0
        %3756 = vmatprep.subr.mxu0 0.0
        %3757 = vmatpush1.msra.mxu0 0.0
        %3758 = vmatprep.subr.mxu0 0.0
        %3759 = vmatpush1.msra.mxu0 0.0
        %3760 = vmatprep.subr.mxu0 0.0
        %3761 = vmatpush1.msra.mxu0 0.0
        %3762 = vmatprep.subr.mxu0 0.0
        %3763 = vmatpush1.msra.mxu0 0.0
        %3764 = vmatprep.subr.mxu0 0.0
        %3765 = vmatpush1.msra.mxu0 0.0
        %3766 = vmatprep.subr.mxu0 0.0
        %3767 = vmatpush1.msra.mxu0 0.0
        %3768 = vmatprep.subr.mxu0 0.0
        %3769 = vmatpush1.msra.mxu0 0.0
        %3770 = vmatprep.subr.mxu0 0.0
        %3771 = vmatpush1.msra.mxu0 0.0
        %3772 = vmatprep.subr.mxu0 0.0
        %3773 = vmatpush1.msra.mxu0 0.0
        %3774 = vmatprep.subr.mxu0 0.0
        %3775 = vmatpush1.msra.mxu0 0.0
        %3776 = vmatprep.subr.mxu0 0.0
        %3777 = vmatpush1.msra.mxu0 0.0
        %3778 = vmatprep.subr.mxu0 0.0
        %3779 = vmatpush1.msra.mxu0 0.0
        %3780 = vmatprep.subr.mxu0 0.0
        %3781 = vmatpush1.msra.mxu0 0.0
        %3782 = vmatprep.subr.mxu0 0.0
        %3783 = vmatpush1.msra.mxu0 0.0
        %3784 = vmatprep.subr.mxu0 0.0
        %3785 = vmatpush1.msra.mxu0 0.0
        %3786 = vmatprep.subr.mxu0 0.0
        %3787 = vmatpush1.msra.mxu0 0.0
        %3788 = vmatprep.mubr.f32.mxu0 0.0
        %v3789 = vand.u32 %v3335, 4294901760
        %3790 = vmatmul.mubr.f32.gmra.mrb[0].mxu0 %v3789
        %v3791 = vpop.f32.mrb[0].mxu0
        %v3792 = vadd.f32 %v3697, %v3791
        %v3793 = vpop.f32.mrb[0].mxu0
        %3794 = vdwg.mxu0
        %3795 = vmatprep.subr.mxu0 0.0
        %v3796 = vand.u32 %v301, 4294901760
        %3797 = vmatpush1.msra.mxu0 %v3796
        %3798 = vmatprep.subr.mxu0 0.0
        %v3799 = vand.u32 %v302, 4294901760
        %3800 = vmatpush1.msra.mxu0 %v3799
        %3801 = vmatprep.subr.mxu0 0.0
        %v3802 = vand.u32 %v303, 4294901760
        %3803 = vmatpush1.msra.mxu0 %v3802
        %3804 = vmatprep.subr.mxu0 0.0
        %v3805 = vand.u32 %v304, 4294901760
        %3806 = vmatpush1.msra.mxu0 %v3805
        %3807 = vmatprep.subr.mxu0 0.0
        %v3808 = vand.u32 %v305, 4294901760
        %3809 = vmatpush1.msra.mxu0 %v3808
        %3810 = vmatprep.subr.mxu0 0.0
        %v3811 = vand.u32 %v306, 4294901760
        %3812 = vmatpush1.msra.mxu0 %v3811
        %3813 = vmatprep.subr.mxu0 0.0
        %v3814 = vand.u32 %v307, 4294901760
        %3815 = vmatpush1.msra.mxu0 %v3814
        %3816 = vmatprep.subr.mxu0 0.0
        %v3817 = vand.u32 %v308, 4294901760
        %3818 = vmatpush1.msra.mxu0 %v3817
        %3819 = vmatprep.subr.mxu0 0.0
        %3820 = vmatpush1.msra.mxu0 0.0
        %3821 = vmatprep.subr.mxu0 0.0
        %3822 = vmatpush1.msra.mxu0 0.0
        %3823 = vmatprep.subr.mxu0 0.0
        %3824 = vmatpush1.msra.mxu0 0.0
        %3825 = vmatprep.subr.mxu0 0.0
        %3826 = vmatpush1.msra.mxu0 0.0
        %3827 = vmatprep.subr.mxu0 0.0
        %3828 = vmatpush1.msra.mxu0 0.0
        %3829 = vmatprep.subr.mxu0 0.0
        %3830 = vmatpush1.msra.mxu0 0.0
        %3831 = vmatprep.subr.mxu0 0.0
        %3832 = vmatpush1.msra.mxu0 0.0
        %3833 = vmatprep.subr.mxu0 0.0
        %3834 = vmatpush1.msra.mxu0 0.0
        %3835 = vmatprep.subr.mxu0 0.0
        %3836 = vmatpush1.msra.mxu0 0.0
        %3837 = vmatprep.subr.mxu0 0.0
        %3838 = vmatpush1.msra.mxu0 0.0
        %3839 = vmatprep.subr.mxu0 0.0
        %3840 = vmatpush1.msra.mxu0 0.0
        %3841 = vmatprep.subr.mxu0 0.0
        %3842 = vmatpush1.msra.mxu0 0.0
        %3843 = vmatprep.subr.mxu0 0.0
        %3844 = vmatpush1.msra.mxu0 0.0
        %3845 = vmatprep.subr.mxu0 0.0
        %3846 = vmatpush1.msra.mxu0 0.0
        %3847 = vmatprep.subr.mxu0 0.0
        %3848 = vmatpush1.msra.mxu0 0.0
        %3849 = vmatprep.subr.mxu0 0.0
        %3850 = vmatpush1.msra.mxu0 0.0
        %3851 = vmatprep.subr.mxu0 0.0
        %3852 = vmatpush1.msra.mxu0 0.0
        %3853 = vmatprep.subr.mxu0 0.0
        %3854 = vmatpush1.msra.mxu0 0.0
        %3855 = vmatprep.subr.mxu0 0.0
        %3856 = vmatpush1.msra.mxu0 0.0
        %3857 = vmatprep.subr.mxu0 0.0
        %3858 = vmatpush1.msra.mxu0 0.0
        %3859 = vmatprep.subr.mxu0 0.0
        %3860 = vmatpush1.msra.mxu0 0.0
        %3861 = vmatprep.subr.mxu0 0.0
        %3862 = vmatpush1.msra.mxu0 0.0
        %3863 = vmatprep.subr.mxu0 0.0
        %3864 = vmatpush1.msra.mxu0 0.0
        %3865 = vmatprep.subr.mxu0 0.0
        %3866 = vmatpush1.msra.mxu0 0.0
        %3867 = vmatprep.mubr.f32.mxu0 0.0
        %v3868 = vand.u32 %v3335, 4294901760
        %3869 = vmatmul.mubr.f32.gmra.mrb[0].mxu0 %v3868
        %v3870 = vpop.f32.mrb[0].mxu0
        %v3871 = vadd.f32 %v3792, %v3870
        %v3872 = vpop.f32.mrb[0].mxu0
        %3873 = vdwg.mxu0
        %v3874 = vsel %vm1585, %v3871, -inf
        %3875 = vmax.xlane.f32.xlu0 %v3874
        %v3876 = vpop.xlane.xlu0 %3875
        %v3877 = vsub.f32 %v3871, %v3876
        %v3878 = vmul.f32 %v3877, 1.442695
        %v3879 = vpow.pop %v3878
        %v3880 = vsel %vm1585, %v3879, 0.0
        %3881 = vadd.xlane.f32.xlu0 %v3880
        %v3882 = vpop.xlane.xlu0 %3881
        %v3883 = vrcp.pop %v3882
        %v3884 = vmul.f32 %v3879, %v3883
        %v3886 = vsel %vm1585, %v3884, 0
        %3888 = vmatprep.subr.mxu0 0.0
        %v3889 = vand.u32 %v309, 4294901760
        %3890 = vmatpush1.msra.mxu0 %v3889
        %3891 = vmatprep.subr.mxu0 0.0
        %3892 = vmatpush1.msra.mxu0 0.0
        %3893 = vmatprep.subr.mxu0 0.0
        %3894 = vmatpush1.msra.mxu0 0.0
        %3895 = vmatprep.subr.mxu0 0.0
        %3896 = vmatpush1.msra.mxu0 0.0
        %3897 = vmatprep.subr.mxu0 0.0
        %3898 = vmatpush1.msra.mxu0 0.0
        %3899 = vmatprep.subr.mxu0 0.0
        %3900 = vmatpush1.msra.mxu0 0.0
        %3901 = vmatprep.subr.mxu0 0.0
        %3902 = vmatpush1.msra.mxu0 0.0
        %3903 = vmatprep.subr.mxu0 0.0
        %3904 = vmatpush1.msra.mxu0 0.0
        %3905 = vmatprep.subr.mxu0 0.0
        %3906 = vmatpush1.msra.mxu0 0.0
        %3907 = vmatprep.subr.mxu0 0.0
        %3908 = vmatpush1.msra.mxu0 0.0
        %3909 = vmatprep.subr.mxu0 0.0
        %3910 = vmatpush1.msra.mxu0 0.0
        %3911 = vmatprep.subr.mxu0 0.0
        %3912 = vmatpush1.msra.mxu0 0.0
        %3913 = vmatprep.subr.mxu0 0.0
        %3914 = vmatpush1.msra.mxu0 0.0
        %3915 = vmatprep.subr.mxu0 0.0
        %3916 = vmatpush1.msra.mxu0 0.0
        %3917 = vmatprep.subr.mxu0 0.0
        %3918 = vmatpush1.msra.mxu0 0.0
        %3919 = vmatprep.subr.mxu0 0.0
        %3920 = vmatpush1.msra.mxu0 0.0
        %3921 = vmatprep.subr.mxu0 0.0
        %3922 = vmatpush1.msra.mxu0 0.0
        %3923 = vmatprep.subr.mxu0 0.0
        %3924 = vmatpush1.msra.mxu0 0.0
        %3925 = vmatprep.subr.mxu0 0.0
        %3926 = vmatpush1.msra.mxu0 0.0
        %3927 = vmatprep.subr.mxu0 0.0
        %3928 = vmatpush1.msra.mxu0 0.0
        %3929 = vmatprep.subr.mxu0 0.0
        %3930 = vmatpush1.msra.mxu0 0.0
        %3931 = vmatprep.subr.mxu0 0.0
        %3932 = vmatpush1.msra.mxu0 0.0
        %3933 = vmatprep.subr.mxu0 0.0
        %3934 = vmatpush1.msra.mxu0 0.0
        %3935 = vmatprep.subr.mxu0 0.0
        %3936 = vmatpush1.msra.mxu0 0.0
        %3937 = vmatprep.subr.mxu0 0.0
        %3938 = vmatpush1.msra.mxu0 0.0
        %3939 = vmatprep.subr.mxu0 0.0
        %3940 = vmatpush1.msra.mxu0 0.0
        %3941 = vmatprep.subr.mxu0 0.0
        %3942 = vmatpush1.msra.mxu0 0.0
        %3943 = vmatprep.subr.mxu0 0.0
        %3944 = vmatpush1.msra.mxu0 0.0
        %3945 = vmatprep.subr.mxu0 0.0
        %3946 = vmatpush1.msra.mxu0 0.0
        %3947 = vmatprep.subr.mxu0 0.0
        %3948 = vmatpush1.msra.mxu0 0.0
        %3949 = vmatprep.subr.mxu0 0.0
        %3950 = vmatpush1.msra.mxu0 0.0
        %3951 = vmatprep.subr.mxu0 0.0
        %3952 = vmatpush1.msra.mxu0 0.0
        %3953 = vmatprep.mubr.f32.mxu0 0.0
        %v3954 = vand.u32 %v3886, 4294901760
        %v3955 = vsub.f32 %v3886, %v3954
        %v3956 = vand.u32 %v3955, 4294901760
        %v3957 = vsub.f32 %v3955, %v3956
        %v3958 = vand.u32 %v3957, 4294901760
        %3959 = vmatmul.mubr.f32.gmra.mrb[0].mxu0 %v3958
        %v3960 = vpop.f32.mrb[0].mxu0
        %v3961 = vadd.f32 0.0, %v3960
        %v3962 = vpop.f32.mrb[0].mxu0
        %3963 = vdwg.mxu0
        %3964 = vmatprep.subr.mxu0 0.0
        %v3965 = vand.u32 %v309, 4294901760
        %v3966 = vsub.f32 %v309, %v3965
        %v3967 = vand.u32 %v3966, 4294901760
        %v3968 = vsub.f32 %v3966, %v3967
        %v3969 = vand.u32 %v3968, 4294901760
        %3970 = vmatpush1.msra.mxu0 %v3969
        %3971 = vmatprep.subr.mxu0 0.0
        %3972 = vmatpush1.msra.mxu0 0.0
        %3973 = vmatprep.subr.mxu0 0.0
        %3974 = vmatpush1.msra.mxu0 0.0
        %3975 = vmatprep.subr.mxu0 0.0
        %3976 = vmatpush1.msra.mxu0 0.0
        %3977 = vmatprep.subr.mxu0 0.0
        %3978 = vmatpush1.msra.mxu0 0.0
        %3979 = vmatprep.subr.mxu0 0.0
        %3980 = vmatpush1.msra.mxu0 0.0
        %3981 = vmatprep.subr.mxu0 0.0
        %3982 = vmatpush1.msra.mxu0 0.0
        %3983 = vmatprep.subr.mxu0 0.0
        %3984 = vmatpush1.msra.mxu0 0.0
        %3985 = vmatprep.subr.mxu0 0.0
        %3986 = vmatpush1.msra.mxu0 0.0
        %3987 = vmatprep.subr.mxu0 0.0
        %3988 = vmatpush1.msra.mxu0 0.0
        %3989 = vmatprep.subr.mxu0 0.0
        %3990 = vmatpush1.msra.mxu0 0.0
        %3991 = vmatprep.subr.mxu0 0.0
        %3992 = vmatpush1.msra.mxu0 0.0
        %3993 = vmatprep.subr.mxu0 0.0
        %3994 = vmatpush1.msra.mxu0 0.0
        %3995 = vmatprep.subr.mxu0 0.0
        %3996 = vmatpush1.msra.mxu0 0.0
        %3997 = vmatprep.subr.mxu0 0.0
        %3998 = vmatpush1.msra.mxu0 0.0
        %3999 = vmatprep.subr.mxu0 0.0
        %4000 = vmatpush1.msra.mxu0 0.0
        %4001 = vmatprep.subr.mxu0 0.0
        %4002 = vmatpush1.msra.mxu0 0.0
        %4003 = vmatprep.subr.mxu0 0.0
        %4004 = vmatpush1.msra.mxu0 0.0
        %4005 = vmatprep.subr.mxu0 0.0
        %4006 = vmatpush1.msra.mxu0 0.0
        %4007 = vmatprep.subr.mxu0 0.0
        %4008 = vmatpush1.msra.mxu0 0.0
        %4009 = vmatprep.subr.mxu0 0.0
        %4010 = vmatpush1.msra.mxu0 0.0
        %4011 = vmatprep.subr.mxu0 0.0
        %4012 = vmatpush1.msra.mxu0 0.0
        %4013 = vmatprep.subr.mxu0 0.0
        %4014 = vmatpush1.msra.mxu0 0.0
        %4015 = vmatprep.subr.mxu0 0.0
        %4016 = vmatpush1.msra.mxu0 0.0
        %4017 = vmatprep.subr.mxu0 0.0
        %4018 = vmatpush1.msra.mxu0 0.0
        %4019 = vmatprep.subr.mxu0 0.0
        %4020 = vmatpush1.msra.mxu0 0.0
        %4021 = vmatprep.subr.mxu0 0.0
        %4022 = vmatpush1.msra.mxu0 0.0
        %4023 = vmatprep.subr.mxu0 0.0
        %4024 = vmatpush1.msra.mxu0 0.0
        %4025 = vmatprep.subr.mxu0 0.0
        %4026 = vmatpush1.msra.mxu0 0.0
        %4027 = vmatprep.subr.mxu0 0.0
        %4028 = vmatpush1.msra.mxu0 0.0
        %4029 = vmatprep.subr.mxu0 0.0
        %4030 = vmatpush1.msra.mxu0 0.0
        %4031 = vmatprep.subr.mxu0 0.0
        %4032 = vmatpush1.msra.mxu0 0.0
        %4033 = vmatprep.mubr.f32.mxu0 0.0
        %v4034 = vand.u32 %v3886, 4294901760
        %4035 = vmatmul.mubr.f32.gmra.mrb[0].mxu0 %v4034
        %v4036 = vpop.f32.mrb[0].mxu0
        %v4037 = vadd.f32 %v3961, %v4036
        %v4038 = vpop.f32.mrb[0].mxu0
        %4039 = vdwg.mxu0
        %4040 = vmatprep.subr.mxu0 0.0
        %v4041 = vand.u32 %v309, 4294901760
        %v4042 = vsub.f32 %v309, %v4041
        %4043 = vmatpush1.msra.mxu0 %v4042
        %4044 = vmatprep.subr.mxu0 0.0
        %4045 = vmatpush1.msra.mxu0 0.0
        %4046 = vmatprep.subr.mxu0 0.0
        %4047 = vmatpush1.msra.mxu0 0.0
        %4048 = vmatprep.subr.mxu0 0.0
        %4049 = vmatpush1.msra.mxu0 0.0
        %4050 = vmatprep.subr.mxu0 0.0
        %4051 = vmatpush1.msra.mxu0 0.0
        %4052 = vmatprep.subr.mxu0 0.0
        %4053 = vmatpush1.msra.mxu0 0.0
        %4054 = vmatprep.subr.mxu0 0.0
        %4055 = vmatpush1.msra.mxu0 0.0
        %4056 = vmatprep.subr.mxu0 0.0
        %4057 = vmatpush1.msra.mxu0 0.0
        %4058 = vmatprep.subr.mxu0 0.0
        %4059 = vmatpush1.msra.mxu0 0.0
        %4060 = vmatprep.subr.mxu0 0.0
        %4061 = vmatpush1.msra.mxu0 0.0
        %4062 = vmatprep.subr.mxu0 0.0
        %4063 = vmatpush1.msra.mxu0 0.0
        %4064 = vmatprep.subr.mxu0 0.0
        %4065 = vmatpush1.msra.mxu0 0.0
        %4066 = vmatprep.subr.mxu0 0.0
        %4067 = vmatpush1.msra.mxu0 0.0
        %4068 = vmatprep.subr.mxu0 0.0
        %4069 = vmatpush1.msra.mxu0 0.0
        %4070 = vmatprep.subr.mxu0 0.0
        %4071 = vmatpush1.msra.mxu0 0.0
        %4072 = vmatprep.subr.mxu0 0.0
        %4073 = vmatpush1.msra.mxu0 0.0
        %4074 = vmatprep.subr.mxu0 0.0
        %4075 = vmatpush1.msra.mxu0 0.0
        %4076 = vmatprep.subr.mxu0 0.0
        %4077 = vmatpush1.msra.mxu0 0.0
        %4078 = vmatprep.subr.mxu0 0.0
        %4079 = vmatpush1.msra.mxu0 0.0
        %4080 = vmatprep.subr.mxu0 0.0
        %4081 = vmatpush1.msra.mxu0 0.0
        %4082 = vmatprep.subr.mxu0 0.0
        %4083 = vmatpush1.msra.mxu0 0.0
        %4084 = vmatprep.subr.mxu0 0.0
        %4085 = vmatpush1.msra.mxu0 0.0
        %4086 = vmatprep.subr.mxu0 0.0
        %4087 = vmatpush1.msra.mxu0 0.0
        %4088 = vmatprep.subr.mxu0 0.0
        %4089 = vmatpush1.msra.mxu0 0.0
        %4090 = vmatprep.subr.mxu0 0.0
        %4091 = vmatpush1.msra.mxu0 0.0
        %4092 = vmatprep.subr.mxu0 0.0
        %4093 = vmatpush1.msra.mxu0 0.0
        %4094 = vmatprep.subr.mxu0 0.0
        %4095 = vmatpush1.msra.mxu0 0.0
        %4096 = vmatprep.subr.mxu0 0.0
        %4097 = vmatpush1.msra.mxu0 0.0
        %4098 = vmatprep.subr.mxu0 0.0
        %4099 = vmatpush1.msra.mxu0 0.0
        %4100 = vmatprep.subr.mxu0 0.0
        %4101 = vmatpush1.msra.mxu0 0.0
        %4102 = vmatprep.subr.mxu0 0.0
        %4103 = vmatpush1.msra.mxu0 0.0
        %4104 = vmatprep.subr.mxu0 0.0
        %4105 = vmatpush1.msra.mxu0 0.0
        %4106 = vmatprep.mubr.f32.mxu0 0.0
        %v4107 = vand.u32 %v3886, 4294901760
        %v4108 = vsub.f32 %v3886, %v4107
        %4109 = vmatmul.mubr.f32.gmra.mrb[0].mxu0 %v4108
        %v4110 = vpop.f32.mrb[0].mxu0
        %v4111 = vadd.f32 %v4037, %v4110
        %v4112 = vpop.f32.mrb[0].mxu0
        %4113 = vdwg.mxu0
        %4114 = vmatprep.subr.mxu0 0.0
        %v4115 = vand.u32 %v309, 4294901760
        %4116 = vmatpush1.msra.mxu0 %v4115
        %4117 = vmatprep.subr.mxu0 0.0
        %4118 = vmatpush1.msra.mxu0 0.0
        %4119 = vmatprep.subr.mxu0 0.0
        %4120 = vmatpush1.msra.mxu0 0.0
        %4121 = vmatprep.subr.mxu0 0.0
        %4122 = vmatpush1.msra.mxu0 0.0
        %4123 = vmatprep.subr.mxu0 0.0
        %4124 = vmatpush1.msra.mxu0 0.0
        %4125 = vmatprep.subr.mxu0 0.0
        %4126 = vmatpush1.msra.mxu0 0.0
        %4127 = vmatprep.subr.mxu0 0.0
        %4128 = vmatpush1.msra.mxu0 0.0
        %4129 = vmatprep.subr.mxu0 0.0
        %4130 = vmatpush1.msra.mxu0 0.0
        %4131 = vmatprep.subr.mxu0 0.0
        %4132 = vmatpush1.msra.mxu0 0.0
        %4133 = vmatprep.subr.mxu0 0.0
        %4134 = vmatpush1.msra.mxu0 0.0
        %4135 = vmatprep.subr.mxu0 0.0
        %4136 = vmatpush1.msra.mxu0 0.0
        %4137 = vmatprep.subr.mxu0 0.0
        %4138 = vmatpush1.msra.mxu0 0.0
        %4139 = vmatprep.subr.mxu0 0.0
        %4140 = vmatpush1.msra.mxu0 0.0
        %4141 = vmatprep.subr.mxu0 0.0
        %4142 = vmatpush1.msra.mxu0 0.0
        %4143 = vmatprep.subr.mxu0 0.0
        %4144 = vmatpush1.msra.mxu0 0.0
        %4145 = vmatprep.subr.mxu0 0.0
        %4146 = vmatpush1.msra.mxu0 0.0
        %4147 = vmatprep.subr.mxu0 0.0
        %4148 = vmatpush1.msra.mxu0 0.0
        %4149 = vmatprep.subr.mxu0 0.0
        %4150 = vmatpush1.msra.mxu0 0.0
        %4151 = vmatprep.subr.mxu0 0.0
        %4152 = vmatpush1.msra.mxu0 0.0
        %4153 = vmatprep.subr.mxu0 0.0
        %4154 = vmatpush1.msra.mxu0 0.0
        %4155 = vmatprep.subr.mxu0 0.0
        %4156 = vmatpush1.msra.mxu0 0.0
        %4157 = vmatprep.subr.mxu0 0.0
        %4158 = vmatpush1.msra.mxu0 0.0
        %4159 = vmatprep.subr.mxu0 0.0
        %4160 = vmatpush1.msra.mxu0 0.0
        %4161 = vmatprep.subr.mxu0 0.0
        %4162 = vmatpush1.msra.mxu0 0.0
        %4163 = vmatprep.subr.mxu0 0.0
        %4164 = vmatpush1.msra.mxu0 0.0
        %4165 = vmatprep.subr.mxu0 0.0
        %4166 = vmatpush1.msra.mxu0 0.0
        %4167 = vmatprep.subr.mxu0 0.0
        %4168 = vmatpush1.msra.mxu0 0.0
        %4169 = vmatprep.subr.mxu0 0.0
        %4170 = vmatpush1.msra.mxu0 0.0
        %4171 = vmatprep.subr.mxu0 0.0
        %4172 = vmatpush1.msra.mxu0 0.0
        %4173 = vmatprep.subr.mxu0 0.0
        %4174 = vmatpush1.msra.mxu0 0.0
        %4175 = vmatprep.subr.mxu0 0.0
        %4176 = vmatpush1.msra.mxu0 0.0
        %4177 = vmatprep.subr.mxu0 0.0
        %4178 = vmatpush1.msra.mxu0 0.0
        %4179 = vmatprep.mubr.f32.mxu0 0.0
        %v4180 = vand.u32 %v3886, 4294901760
        %v4181 = vsub.f32 %v3886, %v4180
        %v4182 = vand.u32 %v4181, 4294901760
        %4183 = vmatmul.mubr.f32.gmra.mrb[0].mxu0 %v4182
        %v4184 = vpop.f32.mrb[0].mxu0
        %v4185 = vadd.f32 %v4111, %v4184
        %v4186 = vpop.f32.mrb[0].mxu0
        %4187 = vdwg.mxu0
        %4188 = vmatprep.subr.mxu0 0.0
        %v4189 = vand.u32 %v309, 4294901760
        %v4190 = vsub.f32 %v309, %v4189
        %v4191 = vand.u32 %v4190, 4294901760
        %4192 = vmatpush1.msra.mxu0 %v4191
        %4193 = vmatprep.subr.mxu0 0.0
        %4194 = vmatpush1.msra.mxu0 0.0
        %4195 = vmatprep.subr.mxu0 0.0
        %4196 = vmatpush1.msra.mxu0 0.0
        %4197 = vmatprep.subr.mxu0 0.0
        %4198 = vmatpush1.msra.mxu0 0.0
        %4199 = vmatprep.subr.mxu0 0.0
        %4200 = vmatpush1.msra.mxu0 0.0
        %4201 = vmatprep.subr.mxu0 0.0
        %4202 = vmatpush1.msra.mxu0 0.0
        %4203 = vmatprep.subr.mxu0 0.0
        %4204 = vmatpush1.msra.mxu0 0.0
        %4205 = vmatprep.subr.mxu0 0.0
        %4206 = vmatpush1.msra.mxu0 0.0
        %4207 = vmatprep.subr.mxu0 0.0
        %4208 = vmatpush1.msra.mxu0 0.0
        %4209 = vmatprep.subr.mxu0 0.0
        %4210 = vmatpush1.msra.mxu0 0.0
        %4211 = vmatprep.subr.mxu0 0.0
        %4212 = vmatpush1.msra.mxu0 0.0
        %4213 = vmatprep.subr.mxu0 0.0
        %4214 = vmatpush1.msra.mxu0 0.0
        %4215 = vmatprep.subr.mxu0 0.0
        %4216 = vmatpush1.msra.mxu0 0.0
        %4217 = vmatprep.subr.mxu0 0.0
        %4218 = vmatpush1.msra.mxu0 0.0
        %4219 = vmatprep.subr.mxu0 0.0
        %4220 = vmatpush1.msra.mxu0 0.0
        %4221 = vmatprep.subr.mxu0 0.0
        %4222 = vmatpush1.msra.mxu0 0.0
        %4223 = vmatprep.subr.mxu0 0.0
        %4224 = vmatpush1.msra.mxu0 0.0
        %4225 = vmatprep.subr.mxu0 0.0
        %4226 = vmatpush1.msra.mxu0 0.0
        %4227 = vmatprep.subr.mxu0 0.0
        %4228 = vmatpush1.msra.mxu0 0.0
        %4229 = vmatprep.subr.mxu0 0.0
        %4230 = vmatpush1.msra.mxu0 0.0
        %4231 = vmatprep.subr.mxu0 0.0
        %4232 = vmatpush1.msra.mxu0 0.0
        %4233 = vmatprep.subr.mxu0 0.0
        %4234 = vmatpush1.msra.mxu0 0.0
        %4235 = vmatprep.subr.mxu0 0.0
        %4236 = vmatpush1.msra.mxu0 0.0
        %4237 = vmatprep.subr.mxu0 0.0
        %4238 = vmatpush1.msra.mxu0 0.0
        %4239 = vmatprep.subr.mxu0 0.0
        %4240 = vmatpush1.msra.mxu0 0.0
        %4241 = vmatprep.subr.mxu0 0.0
        %4242 = vmatpush1.msra.mxu0 0.0
        %4243 = vmatprep.subr.mxu0 0.0
        %4244 = vmatpush1.msra.mxu0 0.0
        %4245 = vmatprep.subr.mxu0 0.0
        %4246 = vmatpush1.msra.mxu0 0.0
        %4247 = vmatprep.subr.mxu0 0.0
        %4248 = vmatpush1.msra.mxu0 0.0
        %4249 = vmatprep.subr.mxu0 0.0
        %4250 = vmatpush1.msra.mxu0 0.0
        %4251 = vmatprep.subr.mxu0 0.0
        %4252 = vmatpush1.msra.mxu0 0.0
        %4253 = vmatprep.subr.mxu0 0.0
        %4254 = vmatpush1.msra.mxu0 0.0
        %4255 = vmatprep.mubr.f32.mxu0 0.0
        %v4256 = vand.u32 %v3886, 4294901760
        %4257 = vmatmul.mubr.f32.gmra.mrb[0].mxu0 %v4256
        %v4258 = vpop.f32.mrb[0].mxu0
        %v4259 = vadd.f32 %v4185, %v4258
        %v4260 = vpop.f32.mrb[0].mxu0
        %4261 = vdwg.mxu0
        %4262 = vmatprep.subr.mxu0 0.0
        %v4263 = vand.u32 %v309, 4294901760
        %4264 = vmatpush1.msra.mxu0 %v4263
        %4265 = vmatprep.subr.mxu0 0.0
        %4266 = vmatpush1.msra.mxu0 0.0
        %4267 = vmatprep.subr.mxu0 0.0
        %4268 = vmatpush1.msra.mxu0 0.0
        %4269 = vmatprep.subr.mxu0 0.0
        %4270 = vmatpush1.msra.mxu0 0.0
        %4271 = vmatprep.subr.mxu0 0.0
        %4272 = vmatpush1.msra.mxu0 0.0
        %4273 = vmatprep.subr.mxu0 0.0
        %4274 = vmatpush1.msra.mxu0 0.0
        %4275 = vmatprep.subr.mxu0 0.0
        %4276 = vmatpush1.msra.mxu0 0.0
        %4277 = vmatprep.subr.mxu0 0.0
        %4278 = vmatpush1.msra.mxu0 0.0
        %4279 = vmatprep.subr.mxu0 0.0
        %4280 = vmatpush1.msra.mxu0 0.0
        %4281 = vmatprep.subr.mxu0 0.0
        %4282 = vmatpush1.msra.mxu0 0.0
        %4283 = vmatprep.subr.mxu0 0.0
        %4284 = vmatpush1.msra.mxu0 0.0
        %4285 = vmatprep.subr.mxu0 0.0
        %4286 = vmatpush1.msra.mxu0 0.0
        %4287 = vmatprep.subr.mxu0 0.0
        %4288 = vmatpush1.msra.mxu0 0.0
        %4289 = vmatprep.subr.mxu0 0.0
        %4290 = vmatpush1.msra.mxu0 0.0
        %4291 = vmatprep.subr.mxu0 0.0
        %4292 = vmatpush1.msra.mxu0 0.0
        %4293 = vmatprep.subr.mxu0 0.0
        %4294 = vmatpush1.msra.mxu0 0.0
        %4295 = vmatprep.subr.mxu0 0.0
        %4296 = vmatpush1.msra.mxu0 0.0
        %4297 = vmatprep.subr.mxu0 0.0
        %4298 = vmatpush1.msra.mxu0 0.0
        %4299 = vmatprep.subr.mxu0 0.0
        %4300 = vmatpush1.msra.mxu0 0.0
        %4301 = vmatprep.subr.mxu0 0.0
        %4302 = vmatpush1.msra.mxu0 0.0
        %4303 = vmatprep.subr.mxu0 0.0
        %4304 = vmatpush1.msra.mxu0 0.0
        %4305 = vmatprep.subr.mxu0 0.0
        %4306 = vmatpush1.msra.mxu0 0.0
        %4307 = vmatprep.subr.mxu0 0.0
        %4308 = vmatpush1.msra.mxu0 0.0
        %4309 = vmatprep.subr.mxu0 0.0
        %4310 = vmatpush1.msra.mxu0 0.0
        %4311 = vmatprep.subr.mxu0 0.0
        %4312 = vmatpush1.msra.mxu0 0.0
        %4313 = vmatprep.subr.mxu0 0.0
        %4314 = vmatpush1.msra.mxu0 0.0
        %4315 = vmatprep.subr.mxu0 0.0
        %4316 = vmatpush1.msra.mxu0 0.0
        %4317 = vmatprep.subr.mxu0 0.0
        %4318 = vmatpush1.msra.mxu0 0.0
        %4319 = vmatprep.subr.mxu0 0.0
        %4320 = vmatpush1.msra.mxu0 0.0
        %4321 = vmatprep.subr.mxu0 0.0
        %4322 = vmatpush1.msra.mxu0 0.0
        %4323 = vmatprep.subr.mxu0 0.0
        %4324 = vmatpush1.msra.mxu0 0.0
        %4325 = vmatprep.subr.mxu0 0.0
        %4326 = vmatpush1.msra.mxu0 0.0
        %4327 = vmatprep.mubr.f32.mxu0 0.0
        %v4328 = vand.u32 %v3886, 4294901760
        %4329 = vmatmul.mubr.f32.gmra.mrb[0].mxu0 %v4328
        %v4330 = vpop.f32.mrb[0].mxu0
        %v4331 = vadd.f32 %v4259, %v4330
        %v4332 = vpop.f32.mrb[0].mxu0
        %4333 = vdwg.mxu0
        %v4335 = vrot.slane %v4331, 1
        %v4336 = vrot.slane %v4331, 2
        %v4337 = vrot.slane %v4331, 3
        %v4338 = vrot.slane %v4331, 4
        %v4339 = vrot.slane %v4331, 5
        %v4340 = vrot.slane %v4331, 6
        %v4341 = vrot.slane %v4331, 7
        %v4350 = vmul.f32 %v3230, %v4331
        %v4351 = vmul.f32 %v3239, %v4335
        %v4352 = vmul.f32 %v3248, %v4336
        %v4353 = vmul.f32 %v3257, %v4337
        %v4354 = vmul.f32 %v3266, %v4338
        %v4355 = vmul.f32 %v3275, %v4339
        %v4356 = vmul.f32 %v3284, %v4340
        %v4357 = vmul.f32 %v3293, %v4341
        %v4366 = vrot.slane %v4351, 7
        %v4367 = vsel %vm3315, %v4366, %v4350
        %v4368 = vrot.slane %v4352, 6
        %v4369 = vsel %vm3318, %v4368, %v4367
        %v4370 = vrot.slane %v4353, 5
        %v4371 = vsel %vm3321, %v4370, %v4369
        %v4372 = vrot.slane %v4354, 4
        %v4373 = vsel %vm3324, %v4372, %v4371
        %v4374 = vrot.slane %v4355, 3
        %v4375 = vsel %vm3327, %v4374, %v4373
        %v4376 = vrot.slane %v4356, 2
        %v4377 = vsel %vm3330, %v4376, %v4375
        %v4378 = vrot.slane %v4357, 1
        %v4379 = vsel %vm3333, %v4378, %v4377
        %v4380 = vsel %vm338, %v4379, 0
        %4382 = vmatprep.subr.mxu0 0.0
        %v4383 = vand.u32 %v310, 4294901760
        %4384 = vmatpush1.msra.mxu0 %v4383
        %4385 = vmatprep.subr.mxu0 0.0
        %v4386 = vand.u32 %v311, 4294901760
        %4387 = vmatpush1.msra.mxu0 %v4386
        %4388 = vmatprep.subr.mxu0 0.0
        %v4389 = vand.u32 %v312, 4294901760
        %4390 = vmatpush1.msra.mxu0 %v4389
        %4391 = vmatprep.subr.mxu0 0.0
        %v4392 = vand.u32 %v313, 4294901760
        %4393 = vmatpush1.msra.mxu0 %v4392
        %4394 = vmatprep.subr.mxu0 0.0
        %v4395 = vand.u32 %v314, 4294901760
        %4396 = vmatpush1.msra.mxu0 %v4395
        %4397 = vmatprep.subr.mxu0 0.0
        %v4398 = vand.u32 %v315, 4294901760
        %4399 = vmatpush1.msra.mxu0 %v4398
        %4400 = vmatprep.subr.mxu0 0.0
        %v4401 = vand.u32 %v316, 4294901760
        %4402 = vmatpush1.msra.mxu0 %v4401
        %4403 = vmatprep.subr.mxu0 0.0
        %v4404 = vand.u32 %v317, 4294901760
        %4405 = vmatpush1.msra.mxu0 %v4404
        %4406 = vmatprep.subr.mxu0 0.0
        %4407 = vmatpush1.msra.mxu0 0.0
        %4408 = vmatprep.subr.mxu0 0.0
        %4409 = vmatpush1.msra.mxu0 0.0
        %4410 = vmatprep.subr.mxu0 0.0
        %4411 = vmatpush1.msra.mxu0 0.0
        %4412 = vmatprep.subr.mxu0 0.0
        %4413 = vmatpush1.msra.mxu0 0.0
        %4414 = vmatprep.subr.mxu0 0.0
        %4415 = vmatpush1.msra.mxu0 0.0
        %4416 = vmatprep.subr.mxu0 0.0
        %4417 = vmatpush1.msra.mxu0 0.0
        %4418 = vmatprep.subr.mxu0 0.0
        %4419 = vmatpush1.msra.mxu0 0.0
        %4420 = vmatprep.subr.mxu0 0.0
        %4421 = vmatpush1.msra.mxu0 0.0
        %4422 = vmatprep.subr.mxu0 0.0
        %4423 = vmatpush1.msra.mxu0 0.0
        %4424 = vmatprep.subr.mxu0 0.0
        %4425 = vmatpush1.msra.mxu0 0.0
        %4426 = vmatprep.subr.mxu0 0.0
        %4427 = vmatpush1.msra.mxu0 0.0
        %4428 = vmatprep.subr.mxu0 0.0
        %4429 = vmatpush1.msra.mxu0 0.0
        %4430 = vmatprep.subr.mxu0 0.0
        %4431 = vmatpush1.msra.mxu0 0.0
        %4432 = vmatprep.subr.mxu0 0.0
        %4433 = vmatpush1.msra.mxu0 0.0
        %4434 = vmatprep.subr.mxu0 0.0
        %4435 = vmatpush1.msra.mxu0 0.0
        %4436 = vmatprep.subr.mxu0 0.0
        %4437 = vmatpush1.msra.mxu0 0.0
        %4438 = vmatprep.subr.mxu0 0.0
        %4439 = vmatpush1.msra.mxu0 0.0
        %4440 = vmatprep.subr.mxu0 0.0
        %4441 = vmatpush1.msra.mxu0 0.0
        %4442 = vmatprep.subr.mxu0 0.0
        %4443 = vmatpush1.msra.mxu0 0.0
        %4444 = vmatprep.subr.mxu0 0.0
        %4445 = vmatpush1.msra.mxu0 0.0
        %4446 = vmatprep.subr.mxu0 0.0
        %4447 = vmatpush1.msra.mxu0 0.0
        %4448 = vmatprep.subr.mxu0 0.0
        %4449 = vmatpush1.msra.mxu0 0.0
        %4450 = vmatprep.subr.mxu0 0.0
        %4451 = vmatpush1.msra.mxu0 0.0
        %4452 = vmatprep.subr.mxu0 0.0
        %4453 = vmatpush1.msra.mxu0 0.0
        %4454 = vmatprep.mubr.f32.mxu0 0.0
        %v4455 = vand.u32 %v4380, 4294901760
        %v4456 = vsub.f32 %v4380, %v4455
        %v4457 = vand.u32 %v4456, 4294901760
        %v4458 = vsub.f32 %v4456, %v4457
        %v4459 = vand.u32 %v4458, 4294901760
        %4460 = vmatmul.mubr.f32.gmra.mrb[0].mxu0 %v4459
        %v4461 = vpop.f32.mrb[0].mxu0
        %v4462 = vadd.f32 0.0, %v4461
        %v4463 = vpop.f32.mrb[0].mxu0
        %4464 = vdwg.mxu0
        %4465 = vmatprep.subr.mxu0 0.0
        %v4466 = vand.u32 %v310, 4294901760
        %v4467 = vsub.f32 %v310, %v4466
        %v4468 = vand.u32 %v4467, 4294901760
        %v4469 = vsub.f32 %v4467, %v4468
        %v4470 = vand.u32 %v4469, 4294901760
        %4471 = vmatpush1.msra.mxu0 %v4470
        %4472 = vmatprep.subr.mxu0 0.0
        %v4473 = vand.u32 %v311, 4294901760
        %v4474 = vsub.f32 %v311, %v4473
        %v4475 = vand.u32 %v4474, 4294901760
        %v4476 = vsub.f32 %v4474, %v4475
        %v4477 = vand.u32 %v4476, 4294901760
        %4478 = vmatpush1.msra.mxu0 %v4477
        %4479 = vmatprep.subr.mxu0 0.0
        %v4480 = vand.u32 %v312, 4294901760
        %v4481 = vsub.f32 %v312, %v4480
        %v4482 = vand.u32 %v4481, 4294901760
        %v4483 = vsub.f32 %v4481, %v4482
        %v4484 = vand.u32 %v4483, 4294901760
        %4485 = vmatpush1.msra.mxu0 %v4484
        %4486 = vmatprep.subr.mxu0 0.0
        %v4487 = vand.u32 %v313, 4294901760
        %v4488 = vsub.f32 %v313, %v4487
        %v4489 = vand.u32 %v4488, 4294901760
        %v4490 = vsub.f32 %v4488, %v4489
        %v4491 = vand.u32 %v4490, 4294901760
        %4492 = vmatpush1.msra.mxu0 %v4491
        %4493 = vmatprep.subr.mxu0 0.0
        %v4494 = vand.u32 %v314, 4294901760
        %v4495 = vsub.f32 %v314, %v4494
        %v4496 = vand.u32 %v4495, 4294901760
        %v4497 = vsub.f32 %v4495, %v4496
        %v4498 = vand.u32 %v4497, 4294901760
        %4499 = vmatpush1.msra.mxu0 %v4498
        %4500 = vmatprep.subr.mxu0 0.0
        %v4501 = vand.u32 %v315, 4294901760
        %v4502 = vsub.f32 %v315, %v4501
        %v4503 = vand.u32 %v4502, 4294901760
        %v4504 = vsub.f32 %v4502, %v4503
        %v4505 = vand.u32 %v4504, 4294901760
        %4506 = vmatpush1.msra.mxu0 %v4505
        %4507 = vmatprep.subr.mxu0 0.0
        %v4508 = vand.u32 %v316, 4294901760
        %v4509 = vsub.f32 %v316, %v4508
        %v4510 = vand.u32 %v4509, 4294901760
        %v4511 = vsub.f32 %v4509, %v4510
        %v4512 = vand.u32 %v4511, 4294901760
        %4513 = vmatpush1.msra.mxu0 %v4512
        %4514 = vmatprep.subr.mxu0 0.0
        %v4515 = vand.u32 %v317, 4294901760
        %v4516 = vsub.f32 %v317, %v4515
        %v4517 = vand.u32 %v4516, 4294901760
        %v4518 = vsub.f32 %v4516, %v4517
        %v4519 = vand.u32 %v4518, 4294901760
        %4520 = vmatpush1.msra.mxu0 %v4519
        %4521 = vmatprep.subr.mxu0 0.0
        %4522 = vmatpush1.msra.mxu0 0.0
        %4523 = vmatprep.subr.mxu0 0.0
        %4524 = vmatpush1.msra.mxu0 0.0
        %4525 = vmatprep.subr.mxu0 0.0
        %4526 = vmatpush1.msra.mxu0 0.0
        %4527 = vmatprep.subr.mxu0 0.0
        %4528 = vmatpush1.msra.mxu0 0.0
        %4529 = vmatprep.subr.mxu0 0.0
        %4530 = vmatpush1.msra.mxu0 0.0
        %4531 = vmatprep.subr.mxu0 0.0
        %4532 = vmatpush1.msra.mxu0 0.0
        %4533 = vmatprep.subr.mxu0 0.0
        %4534 = vmatpush1.msra.mxu0 0.0
        %4535 = vmatprep.subr.mxu0 0.0
        %4536 = vmatpush1.msra.mxu0 0.0
        %4537 = vmatprep.subr.mxu0 0.0
        %4538 = vmatpush1.msra.mxu0 0.0
        %4539 = vmatprep.subr.mxu0 0.0
        %4540 = vmatpush1.msra.mxu0 0.0
        %4541 = vmatprep.subr.mxu0 0.0
        %4542 = vmatpush1.msra.mxu0 0.0
        %4543 = vmatprep.subr.mxu0 0.0
        %4544 = vmatpush1.msra.mxu0 0.0
        %4545 = vmatprep.subr.mxu0 0.0
        %4546 = vmatpush1.msra.mxu0 0.0
        %4547 = vmatprep.subr.mxu0 0.0
        %4548 = vmatpush1.msra.mxu0 0.0
        %4549 = vmatprep.subr.mxu0 0.0
        %4550 = vmatpush1.msra.mxu0 0.0
        %4551 = vmatprep.subr.mxu0 0.0
        %4552 = vmatpush1.msra.mxu0 0.0
        %4553 = vmatprep.subr.mxu0 0.0
        %4554 = vmatpush1.msra.mxu0 0.0
        %4555 = vmatprep.subr.mxu0 0.0
        %4556 = vmatpush1.msra.mxu0 0.0
        %4557 = vmatprep.subr.mxu0 0.0
        %4558 = vmatpush1.msra.mxu0 0.0
        %4559 = vmatprep.subr.mxu0 0.0
        %4560 = vmatpush1.msra.mxu0 0.0
        %4561 = vmatprep.subr.mxu0 0.0
        %4562 = vmatpush1.msra.mxu0 0.0
        %4563 = vmatprep.subr.mxu0 0.0
        %4564 = vmatpush1.msra.mxu0 0.0
        %4565 = vmatprep.subr.mxu0 0.0
        %4566 = vmatpush1.msra.mxu0 0.0
        %4567 = vmatprep.subr.mxu0 0.0
        %4568 = vmatpush1.msra.mxu0 0.0
        %4569 = vmatprep.mubr.f32.mxu0 0.0
        %v4570 = vand.u32 %v4380, 4294901760
        %4571 = vmatmul.mubr.f32.gmra.mrb[0].mxu0 %v4570
        %v4572 = vpop.f32.mrb[0].mxu0
        %v4573 = vadd.f32 %v4462, %v4572
        %v4574 = vpop.f32.mrb[0].mxu0
        %4575 = vdwg.mxu0
        %4576 = vmatprep.subr.mxu0 0.0
        %v4577 = vand.u32 %v310, 4294901760
        %v4578 = vsub.f32 %v310, %v4577
        %4579 = vmatpush1.msra.mxu0 %v4578
        %4580 = vmatprep.subr.mxu0 0.0
        %v4581 = vand.u32 %v311, 4294901760
        %v4582 = vsub.f32 %v311, %v4581
        %4583 = vmatpush1.msra.mxu0 %v4582
        %4584 = vmatprep.subr.mxu0 0.0
        %v4585 = vand.u32 %v312, 4294901760
        %v4586 = vsub.f32 %v312, %v4585
        %4587 = vmatpush1.msra.mxu0 %v4586
        %4588 = vmatprep.subr.mxu0 0.0
        %v4589 = vand.u32 %v313, 4294901760
        %v4590 = vsub.f32 %v313, %v4589
        %4591 = vmatpush1.msra.mxu0 %v4590
        %4592 = vmatprep.subr.mxu0 0.0
        %v4593 = vand.u32 %v314, 4294901760
        %v4594 = vsub.f32 %v314, %v4593
        %4595 = vmatpush1.msra.mxu0 %v4594
        %4596 = vmatprep.subr.mxu0 0.0
        %v4597 = vand.u32 %v315, 4294901760
        %v4598 = vsub.f32 %v315, %v4597
        %4599 = vmatpush1.msra.mxu0 %v4598
        %4600 = vmatprep.subr.mxu0 0.0
        %v4601 = vand.u32 %v316, 4294901760
        %v4602 = vsub.f32 %v316, %v4601
        %4603 = vmatpush1.msra.mxu0 %v4602
        %4604 = vmatprep.subr.mxu0 0.0
        %v4605 = vand.u32 %v317, 4294901760
        %v4606 = vsub.f32 %v317, %v4605
        %4607 = vmatpush1.msra.mxu0 %v4606
        %4608 = vmatprep.subr.mxu0 0.0
        %4609 = vmatpush1.msra.mxu0 0.0
        %4610 = vmatprep.subr.mxu0 0.0
        %4611 = vmatpush1.msra.mxu0 0.0
        %4612 = vmatprep.subr.mxu0 0.0
        %4613 = vmatpush1.msra.mxu0 0.0
        %4614 = vmatprep.subr.mxu0 0.0
        %4615 = vmatpush1.msra.mxu0 0.0
        %4616 = vmatprep.subr.mxu0 0.0
        %4617 = vmatpush1.msra.mxu0 0.0
        %4618 = vmatprep.subr.mxu0 0.0
        %4619 = vmatpush1.msra.mxu0 0.0
        %4620 = vmatprep.subr.mxu0 0.0
        %4621 = vmatpush1.msra.mxu0 0.0
        %4622 = vmatprep.subr.mxu0 0.0
        %4623 = vmatpush1.msra.mxu0 0.0
        %4624 = vmatprep.subr.mxu0 0.0
        %4625 = vmatpush1.msra.mxu0 0.0
        %4626 = vmatprep.subr.mxu0 0.0
        %4627 = vmatpush1.msra.mxu0 0.0
        %4628 = vmatprep.subr.mxu0 0.0
        %4629 = vmatpush1.msra.mxu0 0.0
        %4630 = vmatprep.subr.mxu0 0.0
        %4631 = vmatpush1.msra.mxu0 0.0
        %4632 = vmatprep.subr.mxu0 0.0
        %4633 = vmatpush1.msra.mxu0 0.0
        %4634 = vmatprep.subr.mxu0 0.0
        %4635 = vmatpush1.msra.mxu0 0.0
        %4636 = vmatprep.subr.mxu0 0.0
        %4637 = vmatpush1.msra.mxu0 0.0
        %4638 = vmatprep.subr.mxu0 0.0
        %4639 = vmatpush1.msra.mxu0 0.0
        %4640 = vmatprep.subr.mxu0 0.0
        %4641 = vmatpush1.msra.mxu0 0.0
        %4642 = vmatprep.subr.mxu0 0.0
        %4643 = vmatpush1.msra.mxu0 0.0
        %4644 = vmatprep.subr.mxu0 0.0
        %4645 = vmatpush1.msra.mxu0 0.0
        %4646 = vmatprep.subr.mxu0 0.0
        %4647 = vmatpush1.msra.mxu0 0.0
        %4648 = vmatprep.subr.mxu0 0.0
        %4649 = vmatpush1.msra.mxu0 0.0
        %4650 = vmatprep.subr.mxu0 0.0
        %4651 = vmatpush1.msra.mxu0 0.0
        %4652 = vmatprep.subr.mxu0 0.0
        %4653 = vmatpush1.msra.mxu0 0.0
        %4654 = vmatprep.subr.mxu0 0.0
        %4655 = vmatpush1.msra.mxu0 0.0
        %4656 = vmatprep.mubr.f32.mxu0 0.0
        %v4657 = vand.u32 %v4380, 4294901760
        %v4658 = vsub.f32 %v4380, %v4657
        %4659 = vmatmul.mubr.f32.gmra.mrb[0].mxu0 %v4658
        %v4660 = vpop.f32.mrb[0].mxu0
        %v4661 = vadd.f32 %v4573, %v4660
        %v4662 = vpop.f32.mrb[0].mxu0
        %4663 = vdwg.mxu0
        %4664 = vmatprep.subr.mxu0 0.0
        %v4665 = vand.u32 %v310, 4294901760
        %4666 = vmatpush1.msra.mxu0 %v4665
        %4667 = vmatprep.subr.mxu0 0.0
        %v4668 = vand.u32 %v311, 4294901760
        %4669 = vmatpush1.msra.mxu0 %v4668
        %4670 = vmatprep.subr.mxu0 0.0
        %v4671 = vand.u32 %v312, 4294901760
        %4672 = vmatpush1.msra.mxu0 %v4671
        %4673 = vmatprep.subr.mxu0 0.0
        %v4674 = vand.u32 %v313, 4294901760
        %4675 = vmatpush1.msra.mxu0 %v4674
        %4676 = vmatprep.subr.mxu0 0.0
        %v4677 = vand.u32 %v314, 4294901760
        %4678 = vmatpush1.msra.mxu0 %v4677
        %4679 = vmatprep.subr.mxu0 0.0
        %v4680 = vand.u32 %v315, 4294901760
        %4681 = vmatpush1.msra.mxu0 %v4680
        %4682 = vmatprep.subr.mxu0 0.0
        %v4683 = vand.u32 %v316, 4294901760
        %4684 = vmatpush1.msra.mxu0 %v4683
        %4685 = vmatprep.subr.mxu0 0.0
        %v4686 = vand.u32 %v317, 4294901760
        %4687 = vmatpush1.msra.mxu0 %v4686
        %4688 = vmatprep.subr.mxu0 0.0
        %4689 = vmatpush1.msra.mxu0 0.0
        %4690 = vmatprep.subr.mxu0 0.0
        %4691 = vmatpush1.msra.mxu0 0.0
        %4692 = vmatprep.subr.mxu0 0.0
        %4693 = vmatpush1.msra.mxu0 0.0
        %4694 = vmatprep.subr.mxu0 0.0
        %4695 = vmatpush1.msra.mxu0 0.0
        %4696 = vmatprep.subr.mxu0 0.0
        %4697 = vmatpush1.msra.mxu0 0.0
        %4698 = vmatprep.subr.mxu0 0.0
        %4699 = vmatpush1.msra.mxu0 0.0
        %4700 = vmatprep.subr.mxu0 0.0
        %4701 = vmatpush1.msra.mxu0 0.0
        %4702 = vmatprep.subr.mxu0 0.0
        %4703 = vmatpush1.msra.mxu0 0.0
        %4704 = vmatprep.subr.mxu0 0.0
        %4705 = vmatpush1.msra.mxu0 0.0
        %4706 = vmatprep.subr.mxu0 0.0
        %4707 = vmatpush1.msra.mxu0 0.0
        %4708 = vmatprep.subr.mxu0 0.0
        %4709 = vmatpush1.msra.mxu0 0.0
        %4710 = vmatprep.subr.mxu0 0.0
        %4711 = vmatpush1.msra.mxu0 0.0
        %4712 = vmatprep.subr.mxu0 0.0
        %4713 = vmatpush1.msra.mxu0 0.0
        %4714 = vmatprep.subr.mxu0 0.0
        %4715 = vmatpush1.msra.mxu0 0.0
        %4716 = vmatprep.subr.mxu0 0.0
        %4717 = vmatpush1.msra.mxu0 0.0
        %4718 = vmatprep.subr.mxu0 0.0
        %4719 = vmatpush1.msra.mxu0 0.0
        %4720 = vmatprep.subr.mxu0 0.0
        %4721 = vmatpush1.msra.mxu0 0.0
        %4722 = vmatprep.subr.mxu0 0.0
        %4723 = vmatpush1.msra.mxu0 0.0
        %4724 = vmatprep.subr.mxu0 0.0
        %4725 = vmatpush1.msra.mxu0 0.0
        %4726 = vmatprep.subr.mxu0 0.0
        %4727 = vmatpush1.msra.mxu0 0.0
        %4728 = vmatprep.subr.mxu0 0.0
        %4729 = vmatpush1.msra.mxu0 0.0
        %4730 = vmatprep.subr.mxu0 0.0
        %4731 = vmatpush1.msra.mxu0 0.0
        %4732 = vmatprep.subr.mxu0 0.0
        %4733 = vmatpush1.msra.mxu0 0.0
        %4734 = vmatprep.subr.mxu0 0.0
        %4735 = vmatpush1.msra.mxu0 0.0
        %4736 = vmatprep.mubr.f32.mxu0 0.0
        %v4737 = vand.u32 %v4380, 4294901760
        %v4738 = vsub.f32 %v4380, %v4737
        %v4739 = vand.u32 %v4738, 4294901760
        %4740 = vmatmul.mubr.f32.gmra.mrb[0].mxu0 %v4739
        %v4741 = vpop.f32.mrb[0].mxu0
        %v4742 = vadd.f32 %v4661, %v4741
        %v4743 = vpop.f32.mrb[0].mxu0
        %4744 = vdwg.mxu0
        %4745 = vmatprep.subr.mxu0 0.0
        %v4746 = vand.u32 %v310, 4294901760
        %v4747 = vsub.f32 %v310, %v4746
        %v4748 = vand.u32 %v4747, 4294901760
        %4749 = vmatpush1.msra.mxu0 %v4748
        %4750 = vmatprep.subr.mxu0 0.0
        %v4751 = vand.u32 %v311, 4294901760
        %v4752 = vsub.f32 %v311, %v4751
        %v4753 = vand.u32 %v4752, 4294901760
        %4754 = vmatpush1.msra.mxu0 %v4753
        %4755 = vmatprep.subr.mxu0 0.0
        %v4756 = vand.u32 %v312, 4294901760
        %v4757 = vsub.f32 %v312, %v4756
        %v4758 = vand.u32 %v4757, 4294901760
        %4759 = vmatpush1.msra.mxu0 %v4758
        %4760 = vmatprep.subr.mxu0 0.0
        %v4761 = vand.u32 %v313, 4294901760
        %v4762 = vsub.f32 %v313, %v4761
        %v4763 = vand.u32 %v4762, 4294901760
        %4764 = vmatpush1.msra.mxu0 %v4763
        %4765 = vmatprep.subr.mxu0 0.0
        %v4766 = vand.u32 %v314, 4294901760
        %v4767 = vsub.f32 %v314, %v4766
        %v4768 = vand.u32 %v4767, 4294901760
        %4769 = vmatpush1.msra.mxu0 %v4768
        %4770 = vmatprep.subr.mxu0 0.0
        %v4771 = vand.u32 %v315, 4294901760
        %v4772 = vsub.f32 %v315, %v4771
        %v4773 = vand.u32 %v4772, 4294901760
        %4774 = vmatpush1.msra.mxu0 %v4773
        %4775 = vmatprep.subr.mxu0 0.0
        %v4776 = vand.u32 %v316, 4294901760
        %v4777 = vsub.f32 %v316, %v4776
        %v4778 = vand.u32 %v4777, 4294901760
        %4779 = vmatpush1.msra.mxu0 %v4778
        %4780 = vmatprep.subr.mxu0 0.0
        %v4781 = vand.u32 %v317, 4294901760
        %v4782 = vsub.f32 %v317, %v4781
        %v4783 = vand.u32 %v4782, 4294901760
        %4784 = vmatpush1.msra.mxu0 %v4783
        %4785 = vmatprep.subr.mxu0 0.0
        %4786 = vmatpush1.msra.mxu0 0.0
        %4787 = vmatprep.subr.mxu0 0.0
        %4788 = vmatpush1.msra.mxu0 0.0
        %4789 = vmatprep.subr.mxu0 0.0
        %4790 = vmatpush1.msra.mxu0 0.0
        %4791 = vmatprep.subr.mxu0 0.0
        %4792 = vmatpush1.msra.mxu0 0.0
        %4793 = vmatprep.subr.mxu0 0.0
        %4794 = vmatpush1.msra.mxu0 0.0
        %4795 = vmatprep.subr.mxu0 0.0
        %4796 = vmatpush1.msra.mxu0 0.0
        %4797 = vmatprep.subr.mxu0 0.0
        %4798 = vmatpush1.msra.mxu0 0.0
        %4799 = vmatprep.subr.mxu0 0.0
        %4800 = vmatpush1.msra.mxu0 0.0
        %4801 = vmatprep.subr.mxu0 0.0
        %4802 = vmatpush1.msra.mxu0 0.0
        %4803 = vmatprep.subr.mxu0 0.0
        %4804 = vmatpush1.msra.mxu0 0.0
        %4805 = vmatprep.subr.mxu0 0.0
        %4806 = vmatpush1.msra.mxu0 0.0
        %4807 = vmatprep.subr.mxu0 0.0
        %4808 = vmatpush1.msra.mxu0 0.0
        %4809 = vmatprep.subr.mxu0 0.0
        %4810 = vmatpush1.msra.mxu0 0.0
        %4811 = vmatprep.subr.mxu0 0.0
        %4812 = vmatpush1.msra.mxu0 0.0
        %4813 = vmatprep.subr.mxu0 0.0
        %4814 = vmatpush1.msra.mxu0 0.0
        %4815 = vmatprep.subr.mxu0 0.0
        %4816 = vmatpush1.msra.mxu0 0.0
        %4817 = vmatprep.subr.mxu0 0.0
        %4818 = vmatpush1.msra.mxu0 0.0
        %4819 = vmatprep.subr.mxu0 0.0
        %4820 = vmatpush1.msra.mxu0 0.0
        %4821 = vmatprep.subr.mxu0 0.0
        %4822 = vmatpush1.msra.mxu0 0.0
        %4823 = vmatprep.subr.mxu0 0.0
        %4824 = vmatpush1.msra.mxu0 0.0
        %4825 = vmatprep.subr.mxu0 0.0
        %4826 = vmatpush1.msra.mxu0 0.0
        %4827 = vmatprep.subr.mxu0 0.0
        %4828 = vmatpush1.msra.mxu0 0.0
        %4829 = vmatprep.subr.mxu0 0.0
        %4830 = vmatpush1.msra.mxu0 0.0
        %4831 = vmatprep.subr.mxu0 0.0
        %4832 = vmatpush1.msra.mxu0 0.0
        %4833 = vmatprep.mubr.f32.mxu0 0.0
        %v4834 = vand.u32 %v4380, 4294901760
        %4835 = vmatmul.mubr.f32.gmra.mrb[0].mxu0 %v4834
        %v4836 = vpop.f32.mrb[0].mxu0
        %v4837 = vadd.f32 %v4742, %v4836
        %v4838 = vpop.f32.mrb[0].mxu0
        %4839 = vdwg.mxu0
        %4840 = vmatprep.subr.mxu0 0.0
        %v4841 = vand.u32 %v310, 4294901760
        %4842 = vmatpush1.msra.mxu0 %v4841
        %4843 = vmatprep.subr.mxu0 0.0
        %v4844 = vand.u32 %v311, 4294901760
        %4845 = vmatpush1.msra.mxu0 %v4844
        %4846 = vmatprep.subr.mxu0 0.0
        %v4847 = vand.u32 %v312, 4294901760
        %4848 = vmatpush1.msra.mxu0 %v4847
        %4849 = vmatprep.subr.mxu0 0.0
        %v4850 = vand.u32 %v313, 4294901760
        %4851 = vmatpush1.msra.mxu0 %v4850
        %4852 = vmatprep.subr.mxu0 0.0
        %v4853 = vand.u32 %v314, 4294901760
        %4854 = vmatpush1.msra.mxu0 %v4853
        %4855 = vmatprep.subr.mxu0 0.0
        %v4856 = vand.u32 %v315, 4294901760
        %4857 = vmatpush1.msra.mxu0 %v4856
        %4858 = vmatprep.subr.mxu0 0.0
        %v4859 = vand.u32 %v316, 4294901760
        %4860 = vmatpush1.msra.mxu0 %v4859
        %4861 = vmatprep.subr.mxu0 0.0
        %v4862 = vand.u32 %v317, 4294901760
        %4863 = vmatpush1.msra.mxu0 %v4862
        %4864 = vmatprep.subr.mxu0 0.0
        %4865 = vmatpush1.msra.mxu0 0.0
        %4866 = vmatprep.subr.mxu0 0.0
        %4867 = vmatpush1.msra.mxu0 0.0
        %4868 = vmatprep.subr.mxu0 0.0
        %4869 = vmatpush1.msra.mxu0 0.0
        %4870 = vmatprep.subr.mxu0 0.0
        %4871 = vmatpush1.msra.mxu0 0.0
        %4872 = vmatprep.subr.mxu0 0.0
        %4873 = vmatpush1.msra.mxu0 0.0
        %4874 = vmatprep.subr.mxu0 0.0
        %4875 = vmatpush1.msra.mxu0 0.0
        %4876 = vmatprep.subr.mxu0 0.0
        %4877 = vmatpush1.msra.mxu0 0.0
        %4878 = vmatprep.subr.mxu0 0.0
        %4879 = vmatpush1.msra.mxu0 0.0
        %4880 = vmatprep.subr.mxu0 0.0
        %4881 = vmatpush1.msra.mxu0 0.0
        %4882 = vmatprep.subr.mxu0 0.0
        %4883 = vmatpush1.msra.mxu0 0.0
        %4884 = vmatprep.subr.mxu0 0.0
        %4885 = vmatpush1.msra.mxu0 0.0
        %4886 = vmatprep.subr.mxu0 0.0
        %4887 = vmatpush1.msra.mxu0 0.0
        %4888 = vmatprep.subr.mxu0 0.0
        %4889 = vmatpush1.msra.mxu0 0.0
        %4890 = vmatprep.subr.mxu0 0.0
        %4891 = vmatpush1.msra.mxu0 0.0
        %4892 = vmatprep.subr.mxu0 0.0
        %4893 = vmatpush1.msra.mxu0 0.0
        %4894 = vmatprep.subr.mxu0 0.0
        %4895 = vmatpush1.msra.mxu0 0.0
        %4896 = vmatprep.subr.mxu0 0.0
        %4897 = vmatpush1.msra.mxu0 0.0
        %4898 = vmatprep.subr.mxu0 0.0
        %4899 = vmatpush1.msra.mxu0 0.0
        %4900 = vmatprep.subr.mxu0 0.0
        %4901 = vmatpush1.msra.mxu0 0.0
        %4902 = vmatprep.subr.mxu0 0.0
        %4903 = vmatpush1.msra.mxu0 0.0
        %4904 = vmatprep.subr.mxu0 0.0
        %4905 = vmatpush1.msra.mxu0 0.0
        %4906 = vmatprep.subr.mxu0 0.0
        %4907 = vmatpush1.msra.mxu0 0.0
        %4908 = vmatprep.subr.mxu0 0.0
        %4909 = vmatpush1.msra.mxu0 0.0
        %4910 = vmatprep.subr.mxu0 0.0
        %4911 = vmatpush1.msra.mxu0 0.0
        %4912 = vmatprep.mubr.f32.mxu0 0.0
        %v4913 = vand.u32 %v4380, 4294901760
        %4914 = vmatmul.mubr.f32.gmra.mrb[0].mxu0 %v4913
        %v4915 = vpop.f32.mrb[0].mxu0
        %v4916 = vadd.f32 %v4837, %v4915
        %v4917 = vpop.f32.mrb[0].mxu0
        %4918 = vdwg.mxu0
        %4919 = vst.msk [vmem:[%s282] sm:$0xff] %vm1585, %v4916
        %p4920 = scmp.lt.s32.totalorder %s24, 1
        %s4921 = scalar_select %p4920, %s24, 1
        %s4922 = smul.addr %s4921, 8
        %s4923 = scalar_lea.vmem %s5, %s4922
        %s4924 = sand.u32 %s168, 1
        %s4925 = scalar_lea.sflag [#allocation4], %s4924
        %s4926 = sand.u32 %s168, 1
        %s4927 = smul.addr %s4926, 64
        %s4928 = scalar_lea.vmem [#allocation5], %s4927
        // Predicated region
        $region45: #{tpu_custom_call.1} parent=39 // pred_check
          %p4929 = pneg %p152
        $region46: #{tpu_custom_call.1} parent=39 // pred_check_branch
          %4931 = sbr.rel (%p4929) target = $region48
        $region47: #{tpu_custom_call.1} parent=39 // pred_region
          _
        $region48: #{tpu_custom_call.1} parent=39 // pred_fallthru
          _
        // Predicated region
        $region49: #{tpu_custom_call.1} parent=39 // pred_check
          %p4932 = pneg %p178
        $region50: #{tpu_custom_call.1} parent=39 // pred_check_branch
          %4934 = sbr.rel (%p4932) target = $region52
        $region51: #{tpu_custom_call.1} parent=39 // pred_region
          %s4935 = smul.u32 8, %s24
          %s4937 = ssub.s32 1024, 1024
          %4938 = vsyncadd %s4925, %s4937
          %s4939 = smul.addr %s4935, 128
          %s4940 = scalar_lea.hbm %s6, %s4939
          %s4941 = sshll.u32 %s4928, 4
          %s4942 = int_to_ptr.vmem [resolvable:$true] %s4941
          %4947 = dma.vmem_to_hbm [thread:$0]  %s4942, 1024, %s4940, %s4925, 128, 128, 8
        $region52: #{tpu_custom_call.1} parent=39 // pred_fallthru
          _
      $region40: #{tpu_custom_call.1} parent=5 // pred_fallthru
        _
      %p4948 = scmp.le.s32.totalorder 2, %s19
      // Predicated region
      $region53: #{tpu_custom_call.1} parent=5 // pred_check
        %p4949 = pneg %p4948
      $region54: #{tpu_custom_call.1} parent=5 // pred_check_branch
        %4951 = sbr.rel (%p4949) target = $region56
      $region55: #{tpu_custom_call.1} parent=5 // pred_region
        %s4952 = ssub.s32 %s19, 2
        // Predicated region
        $region57: #{tpu_custom_call.1} parent=55 // pred_check
          %p4953 = pneg %p158
        $region58: #{tpu_custom_call.1} parent=55 // pred_check_branch
          %4955 = sbr.rel (%p4953) target = $region60
        $region59: #{tpu_custom_call.1} parent=55 // pred_region
          %p4956 = scmp.lt.s32.totalorder %s25, 1
          %s4957 = scalar_select %p4956, %s25, 1
          %s4958 = smul.addr %s4957, 8
          %s4959 = scalar_lea.vmem %s5, %s4958
        $region60: #{tpu_custom_call.1} parent=55 // pred_fallthru
          _
        // Predicated region
        $region61: #{tpu_custom_call.1} parent=55 // pred_check
          %p4960 = pneg %p184
        $region62: #{tpu_custom_call.1} parent=55 // pred_check_branch
          %4962 = sbr.rel (%p4960) target = $region64
        $region63: #{tpu_custom_call.1} parent=55 // pred_region
          %s4963 = sand.u32 %s169, 1
          %s4964 = scalar_lea.sflag [#allocation4], %s4963
          %s4965 = sand.u32 %s169, 1
          %s4966 = smul.addr %s4965, 64
          %s4967 = scalar_lea.vmem [#allocation5], %s4966
          %4968 = dma.done %s4964, 1024
        $region64: #{tpu_custom_call.1} parent=55 // pred_fallthru
          _
      $region56: #{tpu_custom_call.1} parent=5 // pred_fallthru
        _
    $region6: #{tpu_custom_call.1} parent=1 // loop_footer
      %s23 = sadd.s32 1, %s19
    $region7: #{tpu_custom_call.1} parent=1 // loop_footer_branch
      %18 = sbr.rel target = $region3
    $region8: #{tpu_custom_call.1} parent=1 // loop_exit
      _
    %4969 = vsyncpa [#allocation3], 1
    %s4970 = scalar_lea.sflag [#allocation3], 1
    %4971 = vsyncpa %s4970, 1
    %4972 = vsyncpa [#allocation4], 1
    %s4973 = scalar_lea.sflag [#allocation4], 1
    %4974 = vsyncpa %s4973, 1

</llo_original>
